<compile_context>
chip_gen: v5e
topology: v5e:2x2
jax: 0.10.0
libtpu: 0.0.40
codegen_flags: <defaults>
</compile_context>

<pallas_src>
import jax
import jax.numpy as jnp
from jax.experimental import pallas as pl
from jax.experimental.pallas import tpu as pltpu

IN_X = 784              # flattened 28*28 image
EMB_N, EMB_D = 10, 10   # label embedding table
H1, H2, H3 = 1024, 512, 256
MAX_TB = 512            # max batch-tile rows


def _round_up(n, m):
    return (n + m - 1) // m * m


# --------------------------------------------------------------------------- #
# Kernel: one batch tile of the whole MLP. Weights stay VMEM-resident (their
# index_map is constant), activations stream per grid step.
# --------------------------------------------------------------------------- #
def netd_kernel(x_ref, c_ref,
                w1x_ref, w1c_ref, b1_ref,
                w2_ref, b2_ref,
                w3_ref, b3_ref,
                w4_ref, b4_ref,
                out_ref, dl_ref):
    # In-kernel bf16 cast: free VPU op hidden under the MXU, saves a wrapper pass.
    x = x_ref[...].astype(jnp.bfloat16)          # (TB, 784)
    c = c_ref[...].astype(jnp.bfloat16)          # (TB, 10)

    # Linear(794, 1024) as a split matmul: x @ W1x + c @ W1c == concat([x,c]) @ W1.
    h = (jnp.dot(x, w1x_ref[...], preferred_element_type=jnp.float32)
         + jnp.dot(c, w1c_ref[...], preferred_element_type=jnp.float32)
         + b1_ref[...])
    h = jnp.maximum(h, 0.2 * h)                  # LeakyReLU(0.2); Dropout(0.3) = identity

    h = jnp.dot(h.astype(jnp.bfloat16), w2_ref[...],
                preferred_element_type=jnp.float32) + b2_ref[...]
    h = jnp.maximum(h, 0.2 * h)

    h = jnp.dot(h.astype(jnp.bfloat16), w3_ref[...],
                preferred_element_type=jnp.float32) + b3_ref[...]
    h = jnp.maximum(h, 0.2 * h)
    out_ref[...] = h                             # (TB, 256) f32

    # Linear(256, 1) + Sigmoid: VPU multiply + XLU lane-reduce (no N=1 matmul).
    w4_row = w4_ref[...].astype(jnp.float32)                         # (1, 256)
    z = jnp.sum(h * w4_row, axis=-1, keepdims=True) + b4_ref[...]    # (TB, 1)
    ez = jnp.exp(-jnp.abs(z))                                        # stable sigmoid
    dl_ref[...] = jnp.where(z >= 0, 1.0 / (1.0 + ez), ez / (1.0 + ez))


# --------------------------------------------------------------------------- #
# Jitted forward: only reshape + embedding gather + (tiny) pad glue around
# the kernel.  No wrapper-side casts.
# --------------------------------------------------------------------------- #
@jax.jit
def netd_forward(x, y, prep):
    """x: (B, 1, 28, 28) f32, y: (B,) int32.  Returns (out (B,256), dl (B,1))."""
    B = x.shape[0]
    x_flat = x.reshape(B, IN_X)                  # f32; reshape is layout-only
    c = prep["emb"][y]                           # (B, 10) f32 embedding gather (glue)

    # Balanced batch tiles: <8 rows of padding per tile, never ~2x over-pad.
    nb = pl.cdiv(B, MAX_TB)
    tb = _round_up(pl.cdiv(B, nb), 8)
    Bp = nb * tb
    if Bp != B:
        x_flat = jnp.pad(x_flat, ((0, Bp - B), (0, 0)))
        c = jnp.pad(c, ((0, Bp - B), (0, 0)))

    def resident(shape):                         # weights: same block every step ->
        return pl.BlockSpec(shape, lambda i: (0, 0))   # DMA'd once, VMEM-resident

    out, dl = pl.pallas_call(
        netd_kernel,
        out_shape=(
            jax.ShapeDtypeStruct((Bp, H3), jnp.float32),
            jax.ShapeDtypeStruct((Bp, 1), jnp.float32),
        ),
        grid=(nb,),
        in_specs=[
            pl.BlockSpec((tb, IN_X), lambda i: (i, 0)),      # x tile (f32)
            pl.BlockSpec((tb, EMB_D), lambda i: (i, 0)),     # emb tile (f32)
            resident((IN_X, H1)),                            # w1x (784, 1024) bf16
            resident((EMB_D, H1)),                           # w1c (10, 1024) bf16
            resident((1, H1)),                               # b1  f32
            resident((H1, H2)),                              # w2  bf16
            resident((1, H2)),                               # b2  f32
            resident((H2, H3)),                              # w3  bf16
            resident((1, H3)),                               # b3  f32
            resident((1, H3)),                               # w4 row bf16
            resident((1, 1)),                                # b4  f32
        ],
        out_specs=(
            pl.BlockSpec((tb, H3), lambda i: (i, 0)),
            pl.BlockSpec((tb, 1), lambda i: (i, 0)),
        ),
        compiler_params=pltpu.CompilerParams(
            dimension_semantics=("parallel",),
            vmem_limit_bytes=32 << 20,
        ),
    )(x_flat, c,
      prep["w1x"], prep["w1c"], prep["b1"],
      prep["w2"], prep["b2"],
      prep["w3"], prep["b3"],
      prep["w4"], prep["b4"])
    return out[:B], dl[:B]


# --------------------------------------------------------------------------- #
# Parameters
# --------------------------------------------------------------------------- #
def init_params(key):
    """PyTorch-layout parameters (nn.Linear: weight (out,in), bias (out,))."""
    ks = jax.random.split(key, 9)
    s = 0.02
    return {
        "emb": jax.random.normal(ks[0], (EMB_N, EMB_D), jnp.float32),
        "w1": jax.random.normal(ks[1], (H1, IN_X + EMB_D), jnp.float32) * s,
        "b1": jax.random.normal(ks[2], (H1,), jnp.float32) * s,
        "w2": jax.random.normal(ks[3], (H2, H1), jnp.float32) * s,
        "b2": jax.random.normal(ks[4], (H2,), jnp.float32) * s,
        "w3": jax.random.normal(ks[5], (H3, H2), jnp.float32) * s,
        "b3": jax.random.normal(ks[6], (H3,), jnp.float32) * s,
        "w4": jax.random.normal(ks[7], (1, H3), jnp.float32) * s,
        "b4": jax.random.normal(ks[8], (1,), jnp.float32) * s,
    }


def prepare_params(p):
    """One-time (outside jit) conversion to kernel layout:
    weights transposed to (in, out), first layer split, bf16 cast."""
    w1 = p["w1"].T                                    # (794, 1024)
    return {
        "emb": p["emb"],                              # (10, 10) f32
        "w1x": w1[:IN_X].astype(jnp.bfloat16),        # (784, 1024)
        "w1c": w1[IN_X:].astype(jnp.bfloat16),        # (10, 1024)
        "b1": p["b1"].reshape(1, H1).astype(jnp.float32),
        "w2": p["w2"].T.astype(jnp.bfloat16),         # (1024, 512)
        "b2": p["b2"].reshape(1, H2).astype(jnp.float32),
        "w3": p["w3"].T.astype(jnp.bfloat16),         # (512, 256)
        "b3": p["b3"].reshape(1, H3).astype(jnp.float32),
        "w4": p["w4"].astype(jnp.bfloat16),           # (1, 256) row
        "b4": p["b4"].reshape(1, 1).astype(jnp.float32),
    }


# --------------------------------------------------------------------------- #
# Pure-JAX reference (mirrors the kernel's bf16-weight / f32-accum math).
# --------------------------------------------------------------------------- #
def reference_forward(x, y, prep):
    B = x.shape[0]
    xb = x.reshape(B, IN_X).astype(jnp.bfloat16)
    cb = prep["emb"][y].astype(jnp.bfloat16)

    def leaky(v):
        return jnp.maximum(v, 0.2 * v)

    h = leaky(jnp.dot(xb, prep["w1x"], preferred_element_type=jnp.float32)
              + jnp.dot(cb, prep["w1c"], preferred_element_type=jnp.float32)
              + prep["b1"])
    h = leaky(jnp.dot(h.astype(jnp.bfloat16), prep["w2"],
                      preferred_element_type=jnp.float32) + prep["b2"])
    h = leaky(jnp.dot(h.astype(jnp.bfloat16), prep["w3"],
                      preferred_element_type=jnp.float32) + prep["b3"])
    z = jnp.sum(h * prep["w4"].astype(jnp.float32), axis=-1,
                keepdims=True) + prep["b4"]
    return h, jax.nn.sigmoid(z)


if __name__ == "__main__":
    key = jax.random.PRNGKey(0)
    kp, kx, ky = jax.random.split(key, 3)

    params = init_params(kp)          # PyTorch-layout f32 params
    prep = prepare_params(params)     # one-time kernel-layout conversion

    # B=8 hits the no-pad path; B=5 exercises the (tiny) pad-to-tile path.
    for B in (8, 5):
        x = jax.random.normal(jax.random.fold_in(kx, B),
                              (B, 1, 28, 28), jnp.float32)
        y = jax.random.randint(jax.random.fold_in(ky, B),
                               (B,), 0, EMB_N, jnp.int32)

        out, dl = jax.block_until_ready(netd_forward(x, y, prep))
        ref_out, ref_dl = reference_forward(x, y, prep)

        assert out.shape == (B, H3) and dl.shape == (B, 1)
        assert jnp.allclose(out, ref_out, atol=2e-3, rtol=2e-3)
        assert jnp.allclose(dl, ref_dl, atol=1e-3, rtol=1e-3)

    print("KERNEL_OK")
</pallas_src>

<mosaic_0001>
module attributes {stable_mosaic.version = 11 : i64} {
  func.func @netd_kernel(%arg0: i32, %arg1: memref<8x784xf32, #tpu.memory_space<vmem>>, %arg2: memref<8x10xf32, #tpu.memory_space<vmem>>, %arg3: memref<784x1024xbf16, #tpu.memory_space<vmem>>, %arg4: memref<10x1024xbf16, #tpu.memory_space<vmem>>, %arg5: memref<1x1024xf32, #tpu.memory_space<vmem>>, %arg6: memref<1024x512xbf16, #tpu.memory_space<vmem>>, %arg7: memref<1x512xf32, #tpu.memory_space<vmem>>, %arg8: memref<512x256xbf16, #tpu.memory_space<vmem>>, %arg9: memref<1x256xf32, #tpu.memory_space<vmem>>, %arg10: memref<1x256xbf16, #tpu.memory_space<vmem>>, %arg11: memref<1x1xf32, #tpu.memory_space<vmem>>, %arg12: memref<8x256xf32, #tpu.memory_space<vmem>>, %arg13: memref<8x1xf32, #tpu.memory_space<vmem>>) attributes {dimension_semantics = [#tpu.dimension_semantics<parallel>], iteration_bounds = array<i64: 1>, scalar_prefetch = 0 : i64, scratch_operands = 0 : i64, tpu.core_type = #tpu.core_type<tc>, window_params = [{transform_indices = @transform_0, window_bounds = array<i64: 8, 784>}, {transform_indices = @transform_1, window_bounds = array<i64: 8, 10>}, {pipeline_mode = #tpu.pipeline_mode<synchronous>, transform_indices = @transform_2, window_bounds = array<i64: 784, 1024>}, {pipeline_mode = #tpu.pipeline_mode<synchronous>, transform_indices = @transform_3, window_bounds = array<i64: 10, 1024>}, {pipeline_mode = #tpu.pipeline_mode<synchronous>, transform_indices = @transform_4, window_bounds = array<i64: 1, 1024>}, {pipeline_mode = #tpu.pipeline_mode<synchronous>, transform_indices = @transform_5, window_bounds = array<i64: 1024, 512>}, {pipeline_mode = #tpu.pipeline_mode<synchronous>, transform_indices = @transform_6, window_bounds = array<i64: 1, 512>}, {pipeline_mode = #tpu.pipeline_mode<synchronous>, transform_indices = @transform_7, window_bounds = array<i64: 512, 256>}, {pipeline_mode = #tpu.pipeline_mode<synchronous>, transform_indices = @transform_8, window_bounds = array<i64: 1, 256>}, {pipeline_mode = #tpu.pipeline_mode<synchronous>, transform_indices = @transform_9, window_bounds = array<i64: 1, 256>}, {pipeline_mode = #tpu.pipeline_mode<synchronous>, transform_indices = @transform_10, window_bounds = array<i64: 1, 1>}, {transform_indices = @transform_11, window_bounds = array<i64: 8, 256>}, {transform_indices = @transform_12, window_bounds = array<i64: 8, 1>}]} {
    %c0 = arith.constant 0 : index
    %c0_0 = arith.constant 0 : index
    %0 = vector.load %arg1[%c0, %c0_0] : memref<8x784xf32, #tpu.memory_space<vmem>>, vector<8x784xf32>
    %1 = arith.truncf %0 : vector<8x784xf32> to vector<8x784xbf16>
    %c0_1 = arith.constant 0 : index
    %c0_2 = arith.constant 0 : index
    %2 = vector.load %arg2[%c0_1, %c0_2] : memref<8x10xf32, #tpu.memory_space<vmem>>, vector<8x10xf32>
    %3 = arith.truncf %2 : vector<8x10xf32> to vector<8x10xbf16>
    %c0_3 = arith.constant 0 : index
    %c0_4 = arith.constant 0 : index
    %4 = vector.load %arg3[%c0_3, %c0_4] : memref<784x1024xbf16, #tpu.memory_space<vmem>>, vector<784x1024xbf16>
    %cst = arith.constant dense<0.000000e+00> : vector<8x1024xf32>
    %5 = tpu.matmul %1, %4, %cst {dimension_numbers = #tpu.dot_dimension_numbers<[1], [0], [0], [1], [0, 0, 1, 1], [], []>} : vector<8x784xbf16>, vector<784x1024xbf16>, vector<8x1024xf32> -> vector<8x1024xf32>
    %c0_5 = arith.constant 0 : index
    %c0_6 = arith.constant 0 : index
    %6 = vector.load %arg4[%c0_5, %c0_6] : memref<10x1024xbf16, #tpu.memory_space<vmem>>, vector<10x1024xbf16>
    %cst_7 = arith.constant dense<0.000000e+00> : vector<8x1024xf32>
    %7 = tpu.matmul %3, %6, %cst_7 {dimension_numbers = #tpu.dot_dimension_numbers<[1], [0], [0], [1], [0, 0, 1, 1], [], []>} : vector<8x10xbf16>, vector<10x1024xbf16>, vector<8x1024xf32> -> vector<8x1024xf32>
    %8 = arith.addf %5, %7 : vector<8x1024xf32>
    %c0_8 = arith.constant 0 : index
    %c0_9 = arith.constant 0 : index
    %9 = vector.load %arg5[%c0_8, %c0_9] : memref<1x1024xf32, #tpu.memory_space<vmem>>, vector<1x1024xf32>
    %10 = vector.broadcast %9 : vector<1x1024xf32> to vector<8x1024xf32>
    %11 = arith.addf %8, %10 : vector<8x1024xf32>
    %cst_10 = arith.constant 2.000000e-01 : f32
    %12 = vector.broadcast %cst_10 : f32 to vector<8x1024xf32>
    %13 = arith.mulf %12, %11 : vector<8x1024xf32>
    %14 = arith.maximumf %11, %13 : vector<8x1024xf32>
    %15 = arith.truncf %14 : vector<8x1024xf32> to vector<8x1024xbf16>
    %c0_11 = arith.constant 0 : index
    %c0_12 = arith.constant 0 : index
    %16 = vector.load %arg6[%c0_11, %c0_12] : memref<1024x512xbf16, #tpu.memory_space<vmem>>, vector<1024x512xbf16>
    %cst_13 = arith.constant dense<0.000000e+00> : vector<8x512xf32>
    %17 = tpu.matmul %15, %16, %cst_13 {dimension_numbers = #tpu.dot_dimension_numbers<[1], [0], [0], [1], [0, 0, 1, 1], [], []>} : vector<8x1024xbf16>, vector<1024x512xbf16>, vector<8x512xf32> -> vector<8x512xf32>
    %c0_14 = arith.constant 0 : index
    %c0_15 = arith.constant 0 : index
    %18 = vector.load %arg7[%c0_14, %c0_15] : memref<1x512xf32, #tpu.memory_space<vmem>>, vector<1x512xf32>
    %19 = vector.broadcast %18 : vector<1x512xf32> to vector<8x512xf32>
    %20 = arith.addf %17, %19 : vector<8x512xf32>
    %cst_16 = arith.constant 2.000000e-01 : f32
    %21 = vector.broadcast %cst_16 : f32 to vector<8x512xf32>
    %22 = arith.mulf %21, %20 : vector<8x512xf32>
    %23 = arith.maximumf %20, %22 : vector<8x512xf32>
    %24 = arith.truncf %23 : vector<8x512xf32> to vector<8x512xbf16>
    %c0_17 = arith.constant 0 : index
    %c0_18 = arith.constant 0 : index
    %25 = vector.load %arg8[%c0_17, %c0_18] : memref<512x256xbf16, #tpu.memory_space<vmem>>, vector<512x256xbf16>
    %cst_19 = arith.constant dense<0.000000e+00> : vector<8x256xf32>
    %26 = tpu.matmul %24, %25, %cst_19 {dimension_numbers = #tpu.dot_dimension_numbers<[1], [0], [0], [1], [0, 0, 1, 1], [], []>} : vector<8x512xbf16>, vector<512x256xbf16>, vector<8x256xf32> -> vector<8x256xf32>
    %c0_20 = arith.constant 0 : index
    %c0_21 = arith.constant 0 : index
    %27 = vector.load %arg9[%c0_20, %c0_21] : memref<1x256xf32, #tpu.memory_space<vmem>>, vector<1x256xf32>
    %28 = vector.broadcast %27 : vector<1x256xf32> to vector<8x256xf32>
    %29 = arith.addf %26, %28 : vector<8x256xf32>
    %cst_22 = arith.constant 2.000000e-01 : f32
    %30 = vector.broadcast %cst_22 : f32 to vector<8x256xf32>
    %31 = arith.mulf %30, %29 : vector<8x256xf32>
    %32 = arith.maximumf %29, %31 : vector<8x256xf32>
    %c0_23 = arith.constant 0 : index
    %c0_24 = arith.constant 0 : index
    %33 = vector.load %arg12[%c0_23, %c0_24] : memref<8x256xf32, #tpu.memory_space<vmem>>, vector<8x256xf32>
    tpu.vector_store %arg12[%c0_23, %c0_24], %32 {strides = array<i32>} : memref<8x256xf32, #tpu.memory_space<vmem>>, vector<8x256xf32>,
    %c0_25 = arith.constant 0 : index
    %c0_26 = arith.constant 0 : index
    %34 = vector.load %arg10[%c0_25, %c0_26] : memref<1x256xbf16, #tpu.memory_space<vmem>>, vector<1x256xbf16>
    %35 = arith.extf %34 : vector<1x256xbf16> to vector<1x256xf32>
    %36 = vector.broadcast %35 : vector<1x256xf32> to vector<8x256xf32>
    %37 = arith.mulf %32, %36 : vector<8x256xf32>
    %cst_27 = arith.constant dense<0.000000e+00> : vector<8xf32>
    %38 = vector.multi_reduction <add>, %37, %cst_27 [1] : vector<8x256xf32> to vector<8xf32>
    %39 = vector.shape_cast %38 : vector<8xf32> to vector<8x1xf32>
    %c0_28 = arith.constant 0 : index
    %c0_29 = arith.constant 0 : index
    %40 = vector.load %arg11[%c0_28, %c0_29] : memref<1x1xf32, #tpu.memory_space<vmem>>, vector<1x1xf32>
    %41 = vector.broadcast %40 : vector<1x1xf32> to vector<8x1xf32>
    %42 = arith.addf %39, %41 : vector<8x1xf32>
    %43 = math.absf %42 : vector<8x1xf32>
    %cst_30 = arith.constant 0.000000e+00 : f32
    %44 = vector.broadcast %cst_30 : f32 to vector<8x1xf32>
    %45 = arith.subf %44, %43 : vector<8x1xf32>
    %46 = math.exp %45 : vector<8x1xf32>
    %cst_31 = arith.constant 0.000000e+00 : f32
    %47 = vector.broadcast %cst_31 : f32 to vector<8x1xf32>
    %48 = arith.cmpf oge, %42, %47 : vector<8x1xf32>
    %cst_32 = arith.constant 1.000000e+00 : f32
    %49 = vector.broadcast %cst_32 : f32 to vector<8x1xf32>
    %50 = arith.addf %49, %46 : vector<8x1xf32>
    %cst_33 = arith.constant 1.000000e+00 : f32
    %51 = vector.broadcast %cst_33 : f32 to vector<8x1xf32>
    %52 = arith.divf %51, %50 : vector<8x1xf32>
    %cst_34 = arith.constant 1.000000e+00 : f32
    %53 = vector.broadcast %cst_34 : f32 to vector<8x1xf32>
    %54 = arith.addf %53, %46 : vector<8x1xf32>
    %55 = arith.divf %46, %54 : vector<8x1xf32>
    %56 = arith.select %48, %52, %55 : vector<8x1xi1>, vector<8x1xf32>
    %c0_35 = arith.constant 0 : index
    %c0_36 = arith.constant 0 : index
    %57 = vector.load %arg13[%c0_35, %c0_36] : memref<8x1xf32, #tpu.memory_space<vmem>>, vector<8x1xf32>
    tpu.vector_store %arg13[%c0_35, %c0_36], %56 {strides = array<i32>} : memref<8x1xf32, #tpu.memory_space<vmem>>, vector<8x1xf32>,
    return
  }
  func.func @transform_0(%arg0: i32) -> (i32, i32) {
    %c0_i32 = arith.constant 0 : i32
    %c0_i32_0 = arith.constant 0 : i32
    return %arg0, %c0_i32 : i32, i32
  }
  func.func @transform_1(%arg0: i32) -> (i32, i32) {
    %c0_i32 = arith.constant 0 : i32
    %c0_i32_0 = arith.constant 0 : i32
    return %arg0, %c0_i32 : i32, i32
  }
  func.func @transform_2(%arg0: i32) -> (i32, i32) {
    %c0_i32 = arith.constant 0 : i32
    %c0_i32_0 = arith.constant 0 : i32
    %c0_i32_1 = arith.constant 0 : i32
    return %c0_i32, %c0_i32_0 : i32, i32
  }
  func.func @transform_3(%arg0: i32) -> (i32, i32) {
    %c0_i32 = arith.constant 0 : i32
    %c0_i32_0 = arith.constant 0 : i32
    %c0_i32_1 = arith.constant 0 : i32
    return %c0_i32, %c0_i32_0 : i32, i32
  }
  func.func @transform_4(%arg0: i32) -> (i32, i32) {
    %c0_i32 = arith.constant 0 : i32
    %c0_i32_0 = arith.constant 0 : i32
    %c0_i32_1 = arith.constant 0 : i32
    return %c0_i32, %c0_i32_0 : i32, i32
  }
  func.func @transform_5(%arg0: i32) -> (i32, i32) {
    %c0_i32 = arith.constant 0 : i32
    %c0_i32_0 = arith.constant 0 : i32
    %c0_i32_1 = arith.constant 0 : i32
    return %c0_i32, %c0_i32_0 : i32, i32
  }
  func.func @transform_6(%arg0: i32) -> (i32, i32) {
    %c0_i32 = arith.constant 0 : i32
    %c0_i32_0 = arith.constant 0 : i32
    %c0_i32_1 = arith.constant 0 : i32
    return %c0_i32, %c0_i32_0 : i32, i32
  }
  func.func @transform_7(%arg0: i32) -> (i32, i32) {
    %c0_i32 = arith.constant 0 : i32
    %c0_i32_0 = arith.constant 0 : i32
    %c0_i32_1 = arith.constant 0 : i32
    return %c0_i32, %c0_i32_0 : i32, i32
  }
  func.func @transform_8(%arg0: i32) -> (i32, i32) {
    %c0_i32 = arith.constant 0 : i32
    %c0_i32_0 = arith.constant 0 : i32
    %c0_i32_1 = arith.constant 0 : i32
    return %c0_i32, %c0_i32_0 : i32, i32
  }
  func.func @transform_9(%arg0: i32) -> (i32, i32) {
    %c0_i32 = arith.constant 0 : i32
    %c0_i32_0 = arith.constant 0 : i32
    %c0_i32_1 = arith.constant 0 : i32
    return %c0_i32, %c0_i32_0 : i32, i32
  }
  func.func @transform_10(%arg0: i32) -> (i32, i32) {
    %c0_i32 = arith.constant 0 : i32
    %c0_i32_0 = arith.constant 0 : i32
    %c0_i32_1 = arith.constant 0 : i32
    return %c0_i32, %c0_i32_0 : i32, i32
  }
  func.func @transform_11(%arg0: i32) -> (i32, i32) {
    %c0_i32 = arith.constant 0 : i32
    %c0_i32_0 = arith.constant 0 : i32
    return %arg0, %c0_i32 : i32, i32
  }
  func.func @transform_12(%arg0: i32) -> (i32, i32) {
    %c0_i32 = arith.constant 0 : i32
    %c0_i32_0 = arith.constant 0 : i32
    return %arg0, %c0_i32 : i32, i32
  }
}

</mosaic_0001>

<llo_original>
// kernel: netd_forward.1
$region0: #{netd_forward.1}
  #allocation0 [shape = 'u32[]', space=smem, size = 0x4, offset = 0x4, fixed_abs, tag = 'smem constant byte address 0x4 - core index']
  #allocation1 [shape = 'u32[72,128]{1,0:T(1,128)}', space=vmem, size = 0x9000, scoped, tag = 'internal scratch']
  #allocation2 [shape = 'f32[1,1]{1,0:T(1,128)S(1)}', space=vmem, size = 0x200, scoped, tag = 'scoped memory for netd_forward.1']
  %s0 = inlined_call_operand.vmem [shape: f32[8,784], index: 0, kind: input, shape index: {}]
  %s1 = inlined_call_operand.vmem [shape: f32[8,10], index: 1, kind: input, shape index: {}]
  %s2 = inlined_call_operand.hbm [shape: bf16[784,1024], index: 2, kind: input, shape index: {}]
  %s3 = inlined_call_operand.hbm [shape: bf16[10,1024], index: 3, kind: input, shape index: {}]
  %s4 = inlined_call_operand.hbm [shape: f32[1,1024], index: 4, kind: input, shape index: {}]
  %s5 = inlined_call_operand.hbm [shape: bf16[1024,512], index: 5, kind: input, shape index: {}]
  %s6 = inlined_call_operand.hbm [shape: f32[1,512], index: 6, kind: input, shape index: {}]
  %s7 = inlined_call_operand.hbm [shape: bf16[512,256], index: 7, kind: input, shape index: {}]
  %s8 = inlined_call_operand.hbm [shape: f32[1,256], index: 8, kind: input, shape index: {}]
  %s9 = inlined_call_operand.hbm [shape: bf16[1,256], index: 9, kind: input, shape index: {}]
  %s10 = inlined_call_operand.<no memory space> [shape: f32[1,1], index: 10, kind: input, shape index: {}]
  %s11 = inlined_call_operand.hbm [shape: f32[8,256], index: 11, kind: output, shape index: {0}]
  %s12 = inlined_call_operand.vmem [shape: f32[8,1], index: 12, kind: output, shape index: {1}]
  %13 = xla_tuple %s11, %s12
  %s14 = sld [smem:[#allocation0]]
  $region94: #{netd_forward.1} parent=0
    _
  %s16 = ssub.s32 1, %s14
  %s17 = scalar_select 0, %s16, %s14
  %v18 = vstv %s10
  %19 = vst [vmem:[#allocation2] sm:$0x1] %v18
  $region1: #{netd_forward.1} parent=0
    #allocation3 [shape = 'u8[1605632]{0}', space=vmem, size = 0x188000, scoped, tag = 'input window, operand 2, single buffered']
    #allocation4 [shape = 's32[1]{0}', space=sflag, size = 0x4, scoped, tag = 'scoped memory for netd_forward.1']
    #allocation5 [shape = 's32[1]{0}', space=sflag, size = 0x4, scoped, tag = 'scoped memory for netd_forward.1']
    #allocation6 [shape = 'u8[32768]{0}', space=vmem, size = 0x8000, scoped, tag = 'input window, operand 3, single buffered']
    #allocation7 [shape = 's32[1]{0}', space=sflag, size = 0x4, scoped, tag = 'scoped memory for netd_forward.1']
    #allocation8 [shape = 'u8[4096]{0}', space=vmem, size = 0x1000, scoped, tag = 'input window, operand 4, single buffered']
    #allocation9 [shape = 'u8[1048576]{0}', space=vmem, size = 0x100000, scoped, tag = 'input window, operand 5, single buffered']
    #allocation10 [shape = 's32[1]{0}', space=sflag, size = 0x4, scoped, tag = 'scoped memory for netd_forward.1']
    #allocation11 [shape = 'u8[2048]{0}', space=vmem, size = 0x800, scoped, tag = 'input window, operand 6, single buffered']
    #allocation12 [shape = 'u8[262144]{0}', space=vmem, size = 0x40000, scoped, tag = 'input window, operand 7, single buffered']
    #allocation13 [shape = 's32[1]{0}', space=sflag, size = 0x4, scoped, tag = 'scoped memory for netd_forward.1']
    #allocation14 [shape = 'u8[1024]{0}', space=vmem, size = 0x400, scoped, tag = 'input window, operand 8, single buffered']
    #allocation15 [shape = 'u8[1024]{0}', space=vmem, size = 0x400, scoped, tag = 'input window, operand 9, single buffered']
    #allocation16 [shape = 's32[1]{0}', space=sflag, size = 0x4, scoped, tag = 'scoped memory for netd_forward.1']
    #allocation17 [shape = 'u8[8192]{0}', space=vmem, size = 0x2000, scoped, tag = 'output window, operand 0, single buffered']
    %20 = vsyncpa [#allocation4], 0
    %21 = vsyncpa [#allocation7], 0
    %22 = vsyncpa [#allocation10], 0
    %23 = vsyncpa [#allocation13], 0
    %24 = vsyncpa [#allocation16], 0
    %25 = vsyncpa [#allocation5], 0
    // Predicated region
    $region2: #{netd_forward.1} parent=1 // pred_check
      _
    $region3: #{netd_forward.1} parent=1 // pred_check_branch
      %27 = sbr.rel (0) target = $region5
    $region4: #{netd_forward.1} parent=1 // pred_region
      _
    $region5: #{netd_forward.1} parent=1 // pred_fallthru
      _
    // Predicated region
    $region6: #{netd_forward.1} parent=1 // pred_check
      _
    $region7: #{netd_forward.1} parent=1 // pred_check_branch
      %29 = sbr.rel (0) target = $region9
    $region8: #{netd_forward.1} parent=1 // pred_region
      _
    $region9: #{netd_forward.1} parent=1 // pred_fallthru
      _
    // Predicated region
    $region10: #{netd_forward.1} parent=1 // pred_check
      _
    $region11: #{netd_forward.1} parent=1 // pred_check_branch
      %31 = sbr.rel (0) target = $region13
    $region12: #{netd_forward.1} parent=1 // pred_region
      %33 = vsyncadd [#allocation4], 0
      %s34 = sshll.u32 %s2, 4
      %s35 = int_to_ptr.hbm [resolvable:$true] %s34
      %s36 = sshll.u32 [#allocation3], 4
      %s37 = int_to_ptr.vmem [resolvable:$true] %s36
      %42 = dma.hbm_to_vmem [thread:$0]  %s35, 50176, %s37, [#allocation4], 512, 512, 32
    $region13: #{netd_forward.1} parent=1 // pred_fallthru
      _
    // Predicated region
    $region14: #{netd_forward.1} parent=1 // pred_check
      _
    $region15: #{netd_forward.1} parent=1 // pred_check_branch
      %44 = sbr.rel (0) target = $region17
    $region16: #{netd_forward.1} parent=1 // pred_region
      %46 = vsyncadd [#allocation7], 0
      %s47 = sshll.u32 %s3, 4
      %s48 = int_to_ptr.hbm [resolvable:$true] %s47
      %s49 = sshll.u32 [#allocation6], 4
      %s50 = int_to_ptr.vmem [resolvable:$true] %s49
      %55 = dma.hbm_to_vmem [thread:$0]  %s48, 1024, %s50, [#allocation7], 512, 512, 32
    $region17: #{netd_forward.1} parent=1 // pred_fallthru
      _
    // Predicated region
    $region18: #{netd_forward.1} parent=1 // pred_check
      _
    $region19: #{netd_forward.1} parent=1 // pred_check_branch
      %57 = sbr.rel (0) target = $region21
    $region20: #{netd_forward.1} parent=1 // pred_region
      %59 = vsyncadd [#allocation7], 0
      %s61 = sshll.u32 %s4, 4
      %s62 = int_to_ptr.hbm [resolvable:$true] %s61
      %s63 = sshll.u32 [#allocation8], 4
      %s64 = int_to_ptr.vmem [resolvable:$true] %s63
      %66 = dma.hbm_to_vmem [thread:$0]  %s62, 128, %s64, [#allocation7]
    $region21: #{netd_forward.1} parent=1 // pred_fallthru
      _
    // Predicated region
    $region22: #{netd_forward.1} parent=1 // pred_check
      _
    $region23: #{netd_forward.1} parent=1 // pred_check_branch
      %68 = sbr.rel (0) target = $region25
    $region24: #{netd_forward.1} parent=1 // pred_region
      %70 = vsyncadd [#allocation10], 0
      %s71 = sshll.u32 %s5, 4
      %s72 = int_to_ptr.hbm [resolvable:$true] %s71
      %s73 = sshll.u32 [#allocation9], 4
      %s74 = int_to_ptr.vmem [resolvable:$true] %s73
      %79 = dma.hbm_to_vmem [thread:$0]  %s72, 32768, %s74, [#allocation10], 256, 256, 16
    $region25: #{netd_forward.1} parent=1 // pred_fallthru
      _
    // Predicated region
    $region26: #{netd_forward.1} parent=1 // pred_check
      _
    $region27: #{netd_forward.1} parent=1 // pred_check_branch
      %81 = sbr.rel (0) target = $region29
    $region28: #{netd_forward.1} parent=1 // pred_region
      %83 = vsyncadd [#allocation10], 0
      %s85 = sshll.u32 %s6, 4
      %s86 = int_to_ptr.hbm [resolvable:$true] %s85
      %s87 = sshll.u32 [#allocation11], 4
      %s88 = int_to_ptr.vmem [resolvable:$true] %s87
      %90 = dma.hbm_to_vmem [thread:$0]  %s86, 64, %s88, [#allocation10]
    $region29: #{netd_forward.1} parent=1 // pred_fallthru
      _
    // Predicated region
    $region30: #{netd_forward.1} parent=1 // pred_check
      _
    $region31: #{netd_forward.1} parent=1 // pred_check_branch
      %92 = sbr.rel (0) target = $region33
    $region32: #{netd_forward.1} parent=1 // pred_region
      %94 = vsyncadd [#allocation13], 0
      %s95 = sshll.u32 %s7, 4
      %s96 = int_to_ptr.hbm [resolvable:$true] %s95
      %s97 = sshll.u32 [#allocation12], 4
      %s98 = int_to_ptr.vmem [resolvable:$true] %s97
      %103 = dma.hbm_to_vmem [thread:$0]  %s96, 8192, %s98, [#allocation13], 128, 128, 8
    $region33: #{netd_forward.1} parent=1 // pred_fallthru
      _
    // Predicated region
    $region34: #{netd_forward.1} parent=1 // pred_check
      _
    $region35: #{netd_forward.1} parent=1 // pred_check_branch
      %105 = sbr.rel (0) target = $region37
    $region36: #{netd_forward.1} parent=1 // pred_region
      %107 = vsyncadd [#allocation13], 0
      %s109 = sshll.u32 %s8, 4
      %s110 = int_to_ptr.hbm [resolvable:$true] %s109
      %s111 = sshll.u32 [#allocation14], 4
      %s112 = int_to_ptr.vmem [resolvable:$true] %s111
      %114 = dma.hbm_to_vmem [thread:$0]  %s110, 32, %s112, [#allocation13]
    $region37: #{netd_forward.1} parent=1 // pred_fallthru
      _
    // Predicated region
    $region38: #{netd_forward.1} parent=1 // pred_check
      _
    $region39: #{netd_forward.1} parent=1 // pred_check_branch
      %116 = sbr.rel (0) target = $region41
    $region40: #{netd_forward.1} parent=1 // pred_region
      %118 = vsyncadd [#allocation16], 0
      %s120 = sshll.u32 %s9, 4
      %s121 = int_to_ptr.hbm [resolvable:$true] %s120
      %s122 = sshll.u32 [#allocation15], 4
      %s123 = int_to_ptr.vmem [resolvable:$true] %s122
      %125 = dma.hbm_to_vmem [thread:$0]  %s121, 32, %s123, [#allocation16]
    $region41: #{netd_forward.1} parent=1 // pred_fallthru
      _
    // Predicated region
    $region42: #{netd_forward.1} parent=1 // pred_check
      _
    $region43: #{netd_forward.1} parent=1 // pred_check_branch
      %127 = sbr.rel (0) target = $region45
    $region44: #{netd_forward.1} parent=1 // pred_region
      _
    $region45: #{netd_forward.1} parent=1 // pred_fallthru
      _
    // Predicated region
    $region46: #{netd_forward.1} parent=1 // pred_check
      _
    $region47: #{netd_forward.1} parent=1 // pred_check_branch
      %129 = sbr.rel (0) target = $region49
    $region48: #{netd_forward.1} parent=1 // pred_region
      %131 = dma.done [#allocation4], 50176
    $region49: #{netd_forward.1} parent=1 // pred_fallthru
      _
    // Predicated region
    $region50: #{netd_forward.1} parent=1 // pred_check
      _
    $region51: #{netd_forward.1} parent=1 // pred_check_branch
      %133 = sbr.rel (0) target = $region53
    $region52: #{netd_forward.1} parent=1 // pred_region
      %135 = dma.done [#allocation7], 1024
    $region53: #{netd_forward.1} parent=1 // pred_fallthru
      _
    // Predicated region
    $region54: #{netd_forward.1} parent=1 // pred_check
      _
    $region55: #{netd_forward.1} parent=1 // pred_check_branch
      %137 = sbr.rel (0) target = $region57
    $region56: #{netd_forward.1} parent=1 // pred_region
      %139 = dma.done [#allocation7], 128
    $region57: #{netd_forward.1} parent=1 // pred_fallthru
      _
    // Predicated region
    $region58: #{netd_forward.1} parent=1 // pred_check
      _
    $region59: #{netd_forward.1} parent=1 // pred_check_branch
      %141 = sbr.rel (0) target = $region61
    $region60: #{netd_forward.1} parent=1 // pred_region
      %143 = dma.done [#allocation10], 32768
    $region61: #{netd_forward.1} parent=1 // pred_fallthru
      _
    // Predicated region
    $region62: #{netd_forward.1} parent=1 // pred_check
      _
    $region63: #{netd_forward.1} parent=1 // pred_check_branch
      %145 = sbr.rel (0) target = $region65
    $region64: #{netd_forward.1} parent=1 // pred_region
      %147 = dma.done [#allocation10], 64
    $region65: #{netd_forward.1} parent=1 // pred_fallthru
      _
    // Predicated region
    $region66: #{netd_forward.1} parent=1 // pred_check
      _
    $region67: #{netd_forward.1} parent=1 // pred_check_branch
      %149 = sbr.rel (0) target = $region69
    $region68: #{netd_forward.1} parent=1 // pred_region
      %151 = dma.done [#allocation13], 8192
    $region69: #{netd_forward.1} parent=1 // pred_fallthru
      _
    // Predicated region
    $region70: #{netd_forward.1} parent=1 // pred_check
      _
    $region71: #{netd_forward.1} parent=1 // pred_check_branch
      %153 = sbr.rel (0) target = $region73
    $region72: #{netd_forward.1} parent=1 // pred_region
      %155 = dma.done [#allocation13], 32
    $region73: #{netd_forward.1} parent=1 // pred_fallthru
      _
    // Predicated region
    $region74: #{netd_forward.1} parent=1 // pred_check
      _
    $region75: #{netd_forward.1} parent=1 // pred_check_branch
      %157 = sbr.rel (0) target = $region77
    $region76: #{netd_forward.1} parent=1 // pred_region
      %159 = dma.done [#allocation16], 32
    $region77: #{netd_forward.1} parent=1 // pred_fallthru
      _
    %v161 = vld [vmem:[%s0] sm:$0xff]
    %v162 = vld [vmem:[%s0 + $0x8] sm:$0xff]
    %v163 = vld [vmem:[%s0 + $0x10] sm:$0xff]
    %v164 = vld [vmem:[%s0 + $0x18] sm:$0xff]
    %v165 = vld [vmem:[%s0 + $0x20] sm:$0xff]
    %v166 = vld [vmem:[%s0 + $0x28] sm:$0xff]
    %v167 = vld [vmem:[%s0 + $0x30] sm:$0xff]
    %v168 = vpack.c.bf16 %v161, %v161
    %v169 = vpack.c.bf16 %v162, %v162
    %v170 = vpack.c.bf16 %v163, %v163
    %v171 = vpack.c.bf16 %v164, %v164
    %v172 = vpack.c.bf16 %v165, %v165
    %v173 = vpack.c.bf16 %v166, %v166
    %v174 = vpack.c.bf16 %v167, %v167
    %v175 = vld [vmem:[%s1] sm:$0xff]
    %v176 = vpack.c.bf16 %v175, %v175
    %v177 = vld [vmem:[#allocation3] sm:$0xff]
    %v178 = vld [vmem:[#allocation3 + $0x8] sm:$0xff]
    %v179 = vld [vmem:[#allocation3 + $0x10] sm:$0xff]
    %v180 = vld [vmem:[#allocation3 + $0x18] sm:$0xff]
    %v181 = vld [vmem:[#allocation3 + $0x20] sm:$0xff]
    %v182 = vld [vmem:[#allocation3 + $0x28] sm:$0xff]
    %v183 = vld [vmem:[#allocation3 + $0x30] sm:$0xff]
    %v184 = vld [vmem:[#allocation3 + $0x38] sm:$0xff]
    %v185 = vld [vmem:[#allocation3 + $0x40] sm:$0xff]
    %v186 = vld [vmem:[#allocation3 + $0x48] sm:$0xff]
    %v187 = vld [vmem:[#allocation3 + $0x50] sm:$0xff]
    %v188 = vld [vmem:[#allocation3 + $0x58] sm:$0xff]
    %v189 = vld [vmem:[#allocation3 + $0x60] sm:$0xff]
    %v190 = vld [vmem:[#allocation3 + $0x68] sm:$0xff]
    %v191 = vld [vmem:[#allocation3 + $0x70] sm:$0xff]
    %v192 = vld [vmem:[#allocation3 + $0x78] sm:$0xff]
    %v193 = vld [vmem:[#allocation3 + $0x80] sm:$0xff]
    %v194 = vld [vmem:[#allocation3 + $0x88] sm:$0xff]
    %v195 = vld [vmem:[#allocation3 + $0x90] sm:$0xff]
    %v196 = vld [vmem:[#allocation3 + $0x98] sm:$0xff]
    %v197 = vld [vmem:[#allocation3 + $0xa0] sm:$0xff]
    %v198 = vld [vmem:[#allocation3 + $0xa8] sm:$0xff]
    %v199 = vld [vmem:[#allocation3 + $0xb0] sm:$0xff]
    %v200 = vld [vmem:[#allocation3 + $0xb8] sm:$0xff]
    %v201 = vld [vmem:[#allocation3 + $0xc0] sm:$0xff]
    %v202 = vld [vmem:[#allocation3 + $0xc8] sm:$0xff]
    %v203 = vld [vmem:[#allocation3 + $0xd0] sm:$0xff]
    %v204 = vld [vmem:[#allocation3 + $0xd8] sm:$0xff]
    %v205 = vld [vmem:[#allocation3 + $0xe0] sm:$0xff]
    %v206 = vld [vmem:[#allocation3 + $0xe8] sm:$0xff]
    %v207 = vld [vmem:[#allocation3 + $0xf0] sm:$0xff]
    %v208 = vld [vmem:[#allocation3 + $0xf8] sm:$0xff]
    %v209 = vld [vmem:[#allocation3 + $0x100] sm:$0xff]
    %v210 = vld [vmem:[#allocation3 + $0x108] sm:$0xff]
    %v211 = vld [vmem:[#allocation3 + $0x110] sm:$0xff]
    %v212 = vld [vmem:[#allocation3 + $0x118] sm:$0xff]
    %v213 = vld [vmem:[#allocation3 + $0x120] sm:$0xff]
    %v214 = vld [vmem:[#allocation3 + $0x128] sm:$0xff]
    %v215 = vld [vmem:[#allocation3 + $0x130] sm:$0xff]
    %v216 = vld [vmem:[#allocation3 + $0x138] sm:$0xff]
    %v217 = vld [vmem:[#allocation3 + $0x140] sm:$0xff]
    %v218 = vld [vmem:[#allocation3 + $0x148] sm:$0xff]
    %v219 = vld [vmem:[#allocation3 + $0x150] sm:$0xff]
    %v220 = vld [vmem:[#allocation3 + $0x158] sm:$0xff]
    %v221 = vld [vmem:[#allocation3 + $0x160] sm:$0xff]
    %v222 = vld [vmem:[#allocation3 + $0x168] sm:$0xff]
    %v223 = vld [vmem:[#allocation3 + $0x170] sm:$0xff]
    %v224 = vld [vmem:[#allocation3 + $0x178] sm:$0xff]
    %v225 = vld [vmem:[#allocation3 + $0x180] sm:$0xff]
    %v226 = vld [vmem:[#allocation3 + $0x188] sm:$0xff]
    %v227 = vld [vmem:[#allocation3 + $0x190] sm:$0xff]
    %v228 = vld [vmem:[#allocation3 + $0x198] sm:$0xff]
    %v229 = vld [vmem:[#allocation3 + $0x1a0] sm:$0xff]
    %v230 = vld [vmem:[#allocation3 + $0x1a8] sm:$0xff]
    %v231 = vld [vmem:[#allocation3 + $0x1b0] sm:$0xff]
    %v232 = vld [vmem:[#allocation3 + $0x1b8] sm:$0xff]
    %v233 = vld [vmem:[#allocation3 + $0x1c0] sm:$0xff]
    %v234 = vld [vmem:[#allocation3 + $0x1c8] sm:$0xff]
    %v235 = vld [vmem:[#allocation3 + $0x1d0] sm:$0xff]
    %v236 = vld [vmem:[#allocation3 + $0x1d8] sm:$0xff]
    %v237 = vld [vmem:[#allocation3 + $0x1e0] sm:$0xff]
    %v238 = vld [vmem:[#allocation3 + $0x1e8] sm:$0xff]
    %v239 = vld [vmem:[#allocation3 + $0x1f0] sm:$0xff]
    %v240 = vld [vmem:[#allocation3 + $0x1f8] sm:$0xff]
    %v241 = vld [vmem:[#allocation3 + $0x200] sm:$0xff]
    %v242 = vld [vmem:[#allocation3 + $0x208] sm:$0xff]
    %v243 = vld [vmem:[#allocation3 + $0x210] sm:$0xff]
    %v244 = vld [vmem:[#allocation3 + $0x218] sm:$0xff]
    %v245 = vld [vmem:[#allocation3 + $0x220] sm:$0xff]
    %v246 = vld [vmem:[#allocation3 + $0x228] sm:$0xff]
    %v247 = vld [vmem:[#allocation3 + $0x230] sm:$0xff]
    %v248 = vld [vmem:[#allocation3 + $0x238] sm:$0xff]
    %v249 = vld [vmem:[#allocation3 + $0x240] sm:$0xff]
    %v250 = vld [vmem:[#allocation3 + $0x248] sm:$0xff]
    %v251 = vld [vmem:[#allocation3 + $0x250] sm:$0xff]
    %v252 = vld [vmem:[#allocation3 + $0x258] sm:$0xff]
    %v253 = vld [vmem:[#allocation3 + $0x260] sm:$0xff]
    %v254 = vld [vmem:[#allocation3 + $0x268] sm:$0xff]
    %v255 = vld [vmem:[#allocation3 + $0x270] sm:$0xff]
    %v256 = vld [vmem:[#allocation3 + $0x278] sm:$0xff]
    %v257 = vld [vmem:[#allocation3 + $0x280] sm:$0xff]
    %v258 = vld [vmem:[#allocation3 + $0x288] sm:$0xff]
    %v259 = vld [vmem:[#allocation3 + $0x290] sm:$0xff]
    %v260 = vld [vmem:[#allocation3 + $0x298] sm:$0xff]
    %v261 = vld [vmem:[#allocation3 + $0x2a0] sm:$0xff]
    %v262 = vld [vmem:[#allocation3 + $0x2a8] sm:$0xff]
    %v263 = vld [vmem:[#allocation3 + $0x2b0] sm:$0xff]
    %v264 = vld [vmem:[#allocation3 + $0x2b8] sm:$0xff]
    %v265 = vld [vmem:[#allocation3 + $0x2c0] sm:$0xff]
    %v266 = vld [vmem:[#allocation3 + $0x2c8] sm:$0xff]
    %v267 = vld [vmem:[#allocation3 + $0x2d0] sm:$0xff]
    %v268 = vld [vmem:[#allocation3 + $0x2d8] sm:$0xff]
    %v269 = vld [vmem:[#allocation3 + $0x2e0] sm:$0xff]
    %v270 = vld [vmem:[#allocation3 + $0x2e8] sm:$0xff]
    %v271 = vld [vmem:[#allocation3 + $0x2f0] sm:$0xff]
    %v272 = vld [vmem:[#allocation3 + $0x2f8] sm:$0xff]
    %v273 = vld [vmem:[#allocation3 + $0x300] sm:$0xff]
    %v274 = vld [vmem:[#allocation3 + $0x308] sm:$0xff]
    %v275 = vld [vmem:[#allocation3 + $0x310] sm:$0xff]
    %v276 = vld [vmem:[#allocation3 + $0x318] sm:$0xff]
    %v277 = vld [vmem:[#allocation3 + $0x320] sm:$0xff]
    %v278 = vld [vmem:[#allocation3 + $0x328] sm:$0xff]
    %v279 = vld [vmem:[#allocation3 + $0x330] sm:$0xff]
    %v280 = vld [vmem:[#allocation3 + $0x338] sm:$0xff]
    %v281 = vld [vmem:[#allocation3 + $0x340] sm:$0xff]
    %v282 = vld [vmem:[#allocation3 + $0x348] sm:$0xff]
    %v283 = vld [vmem:[#allocation3 + $0x350] sm:$0xff]
    %v284 = vld [vmem:[#allocation3 + $0x358] sm:$0xff]
    %v285 = vld [vmem:[#allocation3 + $0x360] sm:$0xff]
    %v286 = vld [vmem:[#allocation3 + $0x368] sm:$0xff]
    %v287 = vld [vmem:[#allocation3 + $0x370] sm:$0xff]
    %v288 = vld [vmem:[#allocation3 + $0x378] sm:$0xff]
    %v289 = vld [vmem:[#allocation3 + $0x380] sm:$0xff]
    %v290 = vld [vmem:[#allocation3 + $0x388] sm:$0xff]
    %v291 = vld [vmem:[#allocation3 + $0x390] sm:$0xff]
    %v292 = vld [vmem:[#allocation3 + $0x398] sm:$0xff]
    %v293 = vld [vmem:[#allocation3 + $0x3a0] sm:$0xff]
    %v294 = vld [vmem:[#allocation3 + $0x3a8] sm:$0xff]
    %v295 = vld [vmem:[#allocation3 + $0x3b0] sm:$0xff]
    %v296 = vld [vmem:[#allocation3 + $0x3b8] sm:$0xff]
    %v297 = vld [vmem:[#allocation3 + $0x3c0] sm:$0xff]
    %v298 = vld [vmem:[#allocation3 + $0x3c8] sm:$0xff]
    %v299 = vld [vmem:[#allocation3 + $0x3d0] sm:$0xff]
    %v300 = vld [vmem:[#allocation3 + $0x3d8] sm:$0xff]
    %v301 = vld [vmem:[#allocation3 + $0x3e0] sm:$0xff]
    %v302 = vld [vmem:[#allocation3 + $0x3e8] sm:$0xff]
    %v303 = vld [vmem:[#allocation3 + $0x3f0] sm:$0xff]
    %v304 = vld [vmem:[#allocation3 + $0x3f8] sm:$0xff]
    %v305 = vld [vmem:[#allocation3 + $0x400] sm:$0xff]
    %v306 = vld [vmem:[#allocation3 + $0x408] sm:$0xff]
    %v307 = vld [vmem:[#allocation3 + $0x410] sm:$0xff]
    %v308 = vld [vmem:[#allocation3 + $0x418] sm:$0xff]
    %v309 = vld [vmem:[#allocation3 + $0x420] sm:$0xff]
    %v310 = vld [vmem:[#allocation3 + $0x428] sm:$0xff]
    %v311 = vld [vmem:[#allocation3 + $0x430] sm:$0xff]
    %v312 = vld [vmem:[#allocation3 + $0x438] sm:$0xff]
    %v313 = vld [vmem:[#allocation3 + $0x440] sm:$0xff]
    %v314 = vld [vmem:[#allocation3 + $0x448] sm:$0xff]
    %v315 = vld [vmem:[#allocation3 + $0x450] sm:$0xff]
    %v316 = vld [vmem:[#allocation3 + $0x458] sm:$0xff]
    %v317 = vld [vmem:[#allocation3 + $0x460] sm:$0xff]
    %v318 = vld [vmem:[#allocation3 + $0x468] sm:$0xff]
    %v319 = vld [vmem:[#allocation3 + $0x470] sm:$0xff]
    %v320 = vld [vmem:[#allocation3 + $0x478] sm:$0xff]
    %v321 = vld [vmem:[#allocation3 + $0x480] sm:$0xff]
    %v322 = vld [vmem:[#allocation3 + $0x488] sm:$0xff]
    %v323 = vld [vmem:[#allocation3 + $0x490] sm:$0xff]
    %v324 = vld [vmem:[#allocation3 + $0x498] sm:$0xff]
    %v325 = vld [vmem:[#allocation3 + $0x4a0] sm:$0xff]
    %v326 = vld [vmem:[#allocation3 + $0x4a8] sm:$0xff]
    %v327 = vld [vmem:[#allocation3 + $0x4b0] sm:$0xff]
    %v328 = vld [vmem:[#allocation3 + $0x4b8] sm:$0xff]
    %v329 = vld [vmem:[#allocation3 + $0x4c0] sm:$0xff]
    %v330 = vld [vmem:[#allocation3 + $0x4c8] sm:$0xff]
    %v331 = vld [vmem:[#allocation3 + $0x4d0] sm:$0xff]
    %v332 = vld [vmem:[#allocation3 + $0x4d8] sm:$0xff]
    %v333 = vld [vmem:[#allocation3 + $0x4e0] sm:$0xff]
    %v334 = vld [vmem:[#allocation3 + $0x4e8] sm:$0xff]
    %v335 = vld [vmem:[#allocation3 + $0x4f0] sm:$0xff]
    %v336 = vld [vmem:[#allocation3 + $0x4f8] sm:$0xff]
    %v337 = vld [vmem:[#allocation3 + $0x500] sm:$0xff]
    %v338 = vld [vmem:[#allocation3 + $0x508] sm:$0xff]
    %v339 = vld [vmem:[#allocation3 + $0x510] sm:$0xff]
    %v340 = vld [vmem:[#allocation3 + $0x518] sm:$0xff]
    %v341 = vld [vmem:[#allocation3 + $0x520] sm:$0xff]
    %v342 = vld [vmem:[#allocation3 + $0x528] sm:$0xff]
    %v343 = vld [vmem:[#allocation3 + $0x530] sm:$0xff]
    %v344 = vld [vmem:[#allocation3 + $0x538] sm:$0xff]
    %v345 = vld [vmem:[#allocation3 + $0x540] sm:$0xff]
    %v346 = vld [vmem:[#allocation3 + $0x548] sm:$0xff]
    %v347 = vld [vmem:[#allocation3 + $0x550] sm:$0xff]
    %v348 = vld [vmem:[#allocation3 + $0x558] sm:$0xff]
    %v349 = vld [vmem:[#allocation3 + $0x560] sm:$0xff]
    %v350 = vld [vmem:[#allocation3 + $0x568] sm:$0xff]
    %v351 = vld [vmem:[#allocation3 + $0x570] sm:$0xff]
    %v352 = vld [vmem:[#allocation3 + $0x578] sm:$0xff]
    %v353 = vld [vmem:[#allocation3 + $0x580] sm:$0xff]
    %v354 = vld [vmem:[#allocation3 + $0x588] sm:$0xff]
    %v355 = vld [vmem:[#allocation3 + $0x590] sm:$0xff]
    %v356 = vld [vmem:[#allocation3 + $0x598] sm:$0xff]
    %v357 = vld [vmem:[#allocation3 + $0x5a0] sm:$0xff]
    %v358 = vld [vmem:[#allocation3 + $0x5a8] sm:$0xff]
    %v359 = vld [vmem:[#allocation3 + $0x5b0] sm:$0xff]
    %v360 = vld [vmem:[#allocation3 + $0x5b8] sm:$0xff]
    %v361 = vld [vmem:[#allocation3 + $0x5c0] sm:$0xff]
    %v362 = vld [vmem:[#allocation3 + $0x5c8] sm:$0xff]
    %v363 = vld [vmem:[#allocation3 + $0x5d0] sm:$0xff]
    %v364 = vld [vmem:[#allocation3 + $0x5d8] sm:$0xff]
    %v365 = vld [vmem:[#allocation3 + $0x5e0] sm:$0xff]
    %v366 = vld [vmem:[#allocation3 + $0x5e8] sm:$0xff]
    %v367 = vld [vmem:[#allocation3 + $0x5f0] sm:$0xff]
    %v368 = vld [vmem:[#allocation3 + $0x5f8] sm:$0xff]
    %v369 = vld [vmem:[#allocation3 + $0x600] sm:$0xff]
    %v370 = vld [vmem:[#allocation3 + $0x608] sm:$0xff]
    %v371 = vld [vmem:[#allocation3 + $0x610] sm:$0xff]
    %v372 = vld [vmem:[#allocation3 + $0x618] sm:$0xff]
    %v373 = vld [vmem:[#allocation3 + $0x620] sm:$0xff]
    %v374 = vld [vmem:[#allocation3 + $0x628] sm:$0xff]
    %v375 = vld [vmem:[#allocation3 + $0x630] sm:$0xff]
    %v376 = vld [vmem:[#allocation3 + $0x638] sm:$0xff]
    %v377 = vld [vmem:[#allocation3 + $0x640] sm:$0xff]
    %v378 = vld [vmem:[#allocation3 + $0x648] sm:$0xff]
    %v379 = vld [vmem:[#allocation3 + $0x650] sm:$0xff]
    %v380 = vld [vmem:[#allocation3 + $0x658] sm:$0xff]
    %v381 = vld [vmem:[#allocation3 + $0x660] sm:$0xff]
    %v382 = vld [vmem:[#allocation3 + $0x668] sm:$0xff]
    %v383 = vld [vmem:[#allocation3 + $0x670] sm:$0xff]
    %v384 = vld [vmem:[#allocation3 + $0x678] sm:$0xff]
    %v385 = vld [vmem:[#allocation3 + $0x680] sm:$0xff]
    %v386 = vld [vmem:[#allocation3 + $0x688] sm:$0xff]
    %v387 = vld [vmem:[#allocation3 + $0x690] sm:$0xff]
    %v388 = vld [vmem:[#allocation3 + $0x698] sm:$0xff]
    %v389 = vld [vmem:[#allocation3 + $0x6a0] sm:$0xff]
    %v390 = vld [vmem:[#allocation3 + $0x6a8] sm:$0xff]
    %v391 = vld [vmem:[#allocation3 + $0x6b0] sm:$0xff]
    %v392 = vld [vmem:[#allocation3 + $0x6b8] sm:$0xff]
    %v393 = vld [vmem:[#allocation3 + $0x6c0] sm:$0xff]
    %v394 = vld [vmem:[#allocation3 + $0x6c8] sm:$0xff]
    %v395 = vld [vmem:[#allocation3 + $0x6d0] sm:$0xff]
    %v396 = vld [vmem:[#allocation3 + $0x6d8] sm:$0xff]
    %v397 = vld [vmem:[#allocation3 + $0x6e0] sm:$0xff]
    %v398 = vld [vmem:[#allocation3 + $0x6e8] sm:$0xff]
    %v399 = vld [vmem:[#allocation3 + $0x6f0] sm:$0xff]
    %v400 = vld [vmem:[#allocation3 + $0x6f8] sm:$0xff]
    %v401 = vld [vmem:[#allocation3 + $0x700] sm:$0xff]
    %v402 = vld [vmem:[#allocation3 + $0x708] sm:$0xff]
    %v403 = vld [vmem:[#allocation3 + $0x710] sm:$0xff]
    %v404 = vld [vmem:[#allocation3 + $0x718] sm:$0xff]
    %v405 = vld [vmem:[#allocation3 + $0x720] sm:$0xff]
    %v406 = vld [vmem:[#allocation3 + $0x728] sm:$0xff]
    %v407 = vld [vmem:[#allocation3 + $0x730] sm:$0xff]
    %v408 = vld [vmem:[#allocation3 + $0x738] sm:$0xff]
    %v409 = vld [vmem:[#allocation3 + $0x740] sm:$0xff]
    %v410 = vld [vmem:[#allocation3 + $0x748] sm:$0xff]
    %v411 = vld [vmem:[#allocation3 + $0x750] sm:$0xff]
    %v412 = vld [vmem:[#allocation3 + $0x758] sm:$0xff]
    %v413 = vld [vmem:[#allocation3 + $0x760] sm:$0xff]
    %v414 = vld [vmem:[#allocation3 + $0x768] sm:$0xff]
    %v415 = vld [vmem:[#allocation3 + $0x770] sm:$0xff]
    %v416 = vld [vmem:[#allocation3 + $0x778] sm:$0xff]
    %v417 = vld [vmem:[#allocation3 + $0x780] sm:$0xff]
    %v418 = vld [vmem:[#allocation3 + $0x788] sm:$0xff]
    %v419 = vld [vmem:[#allocation3 + $0x790] sm:$0xff]
    %v420 = vld [vmem:[#allocation3 + $0x798] sm:$0xff]
    %v421 = vld [vmem:[#allocation3 + $0x7a0] sm:$0xff]
    %v422 = vld [vmem:[#allocation3 + $0x7a8] sm:$0xff]
    %v423 = vld [vmem:[#allocation3 + $0x7b0] sm:$0xff]
    %v424 = vld [vmem:[#allocation3 + $0x7b8] sm:$0xff]
    %v425 = vld [vmem:[#allocation3 + $0x7c0] sm:$0xff]
    %v426 = vld [vmem:[#allocation3 + $0x7c8] sm:$0xff]
    %v427 = vld [vmem:[#allocation3 + $0x7d0] sm:$0xff]
    %v428 = vld [vmem:[#allocation3 + $0x7d8] sm:$0xff]
    %v429 = vld [vmem:[#allocation3 + $0x7e0] sm:$0xff]
    %v430 = vld [vmem:[#allocation3 + $0x7e8] sm:$0xff]
    %v431 = vld [vmem:[#allocation3 + $0x7f0] sm:$0xff]
    %v432 = vld [vmem:[#allocation3 + $0x7f8] sm:$0xff]
    %v433 = vld [vmem:[#allocation3 + $0x800] sm:$0xff]
    %v434 = vld [vmem:[#allocation3 + $0x808] sm:$0xff]
    %v435 = vld [vmem:[#allocation3 + $0x810] sm:$0xff]
    %v436 = vld [vmem:[#allocation3 + $0x818] sm:$0xff]
    %v437 = vld [vmem:[#allocation3 + $0x820] sm:$0xff]
    %v438 = vld [vmem:[#allocation3 + $0x828] sm:$0xff]
    %v439 = vld [vmem:[#allocation3 + $0x830] sm:$0xff]
    %v440 = vld [vmem:[#allocation3 + $0x838] sm:$0xff]
    %v441 = vld [vmem:[#allocation3 + $0x840] sm:$0xff]
    %v442 = vld [vmem:[#allocation3 + $0x848] sm:$0xff]
    %v443 = vld [vmem:[#allocation3 + $0x850] sm:$0xff]
    %v444 = vld [vmem:[#allocation3 + $0x858] sm:$0xff]
    %v445 = vld [vmem:[#allocation3 + $0x860] sm:$0xff]
    %v446 = vld [vmem:[#allocation3 + $0x868] sm:$0xff]
    %v447 = vld [vmem:[#allocation3 + $0x870] sm:$0xff]
    %v448 = vld [vmem:[#allocation3 + $0x878] sm:$0xff]
    %v449 = vld [vmem:[#allocation3 + $0x880] sm:$0xff]
    %v450 = vld [vmem:[#allocation3 + $0x888] sm:$0xff]
    %v451 = vld [vmem:[#allocation3 + $0x890] sm:$0xff]
    %v452 = vld [vmem:[#allocation3 + $0x898] sm:$0xff]
    %v453 = vld [vmem:[#allocation3 + $0x8a0] sm:$0xff]
    %v454 = vld [vmem:[#allocation3 + $0x8a8] sm:$0xff]
    %v455 = vld [vmem:[#allocation3 + $0x8b0] sm:$0xff]
    %v456 = vld [vmem:[#allocation3 + $0x8b8] sm:$0xff]
    %v457 = vld [vmem:[#allocation3 + $0x8c0] sm:$0xff]
    %v458 = vld [vmem:[#allocation3 + $0x8c8] sm:$0xff]
    %v459 = vld [vmem:[#allocation3 + $0x8d0] sm:$0xff]
    %v460 = vld [vmem:[#allocation3 + $0x8d8] sm:$0xff]
    %v461 = vld [vmem:[#allocation3 + $0x8e0] sm:$0xff]
    %v462 = vld [vmem:[#allocation3 + $0x8e8] sm:$0xff]
    %v463 = vld [vmem:[#allocation3 + $0x8f0] sm:$0xff]
    %v464 = vld [vmem:[#allocation3 + $0x8f8] sm:$0xff]
    %v465 = vld [vmem:[#allocation3 + $0x900] sm:$0xff]
    %v466 = vld [vmem:[#allocation3 + $0x908] sm:$0xff]
    %v467 = vld [vmem:[#allocation3 + $0x910] sm:$0xff]
    %v468 = vld [vmem:[#allocation3 + $0x918] sm:$0xff]
    %v469 = vld [vmem:[#allocation3 + $0x920] sm:$0xff]
    %v470 = vld [vmem:[#allocation3 + $0x928] sm:$0xff]
    %v471 = vld [vmem:[#allocation3 + $0x930] sm:$0xff]
    %v472 = vld [vmem:[#allocation3 + $0x938] sm:$0xff]
    %v473 = vld [vmem:[#allocation3 + $0x940] sm:$0xff]
    %v474 = vld [vmem:[#allocation3 + $0x948] sm:$0xff]
    %v475 = vld [vmem:[#allocation3 + $0x950] sm:$0xff]
    %v476 = vld [vmem:[#allocation3 + $0x958] sm:$0xff]
    %v477 = vld [vmem:[#allocation3 + $0x960] sm:$0xff]
    %v478 = vld [vmem:[#allocation3 + $0x968] sm:$0xff]
    %v479 = vld [vmem:[#allocation3 + $0x970] sm:$0xff]
    %v480 = vld [vmem:[#allocation3 + $0x978] sm:$0xff]
    %v481 = vld [vmem:[#allocation3 + $0x980] sm:$0xff]
    %v482 = vld [vmem:[#allocation3 + $0x988] sm:$0xff]
    %v483 = vld [vmem:[#allocation3 + $0x990] sm:$0xff]
    %v484 = vld [vmem:[#allocation3 + $0x998] sm:$0xff]
    %v485 = vld [vmem:[#allocation3 + $0x9a0] sm:$0xff]
    %v486 = vld [vmem:[#allocation3 + $0x9a8] sm:$0xff]
    %v487 = vld [vmem:[#allocation3 + $0x9b0] sm:$0xff]
    %v488 = vld [vmem:[#allocation3 + $0x9b8] sm:$0xff]
    %v489 = vld [vmem:[#allocation3 + $0x9c0] sm:$0xff]
    %v490 = vld [vmem:[#allocation3 + $0x9c8] sm:$0xff]
    %v491 = vld [vmem:[#allocation3 + $0x9d0] sm:$0xff]
    %v492 = vld [vmem:[#allocation3 + $0x9d8] sm:$0xff]
    %v493 = vld [vmem:[#allocation3 + $0x9e0] sm:$0xff]
    %v494 = vld [vmem:[#allocation3 + $0x9e8] sm:$0xff]
    %v495 = vld [vmem:[#allocation3 + $0x9f0] sm:$0xff]
    %v496 = vld [vmem:[#allocation3 + $0x9f8] sm:$0xff]
    %v497 = vld [vmem:[#allocation3 + $0xa00] sm:$0xff]
    %v498 = vld [vmem:[#allocation3 + $0xa08] sm:$0xff]
    %v499 = vld [vmem:[#allocation3 + $0xa10] sm:$0xff]
    %v500 = vld [vmem:[#allocation3 + $0xa18] sm:$0xff]
    %v501 = vld [vmem:[#allocation3 + $0xa20] sm:$0xff]
    %v502 = vld [vmem:[#allocation3 + $0xa28] sm:$0xff]
    %v503 = vld [vmem:[#allocation3 + $0xa30] sm:$0xff]
    %v504 = vld [vmem:[#allocation3 + $0xa38] sm:$0xff]
    %v505 = vld [vmem:[#allocation3 + $0xa40] sm:$0xff]
    %v506 = vld [vmem:[#allocation3 + $0xa48] sm:$0xff]
    %v507 = vld [vmem:[#allocation3 + $0xa50] sm:$0xff]
    %v508 = vld [vmem:[#allocation3 + $0xa58] sm:$0xff]
    %v509 = vld [vmem:[#allocation3 + $0xa60] sm:$0xff]
    %v510 = vld [vmem:[#allocation3 + $0xa68] sm:$0xff]
    %v511 = vld [vmem:[#allocation3 + $0xa70] sm:$0xff]
    %v512 = vld [vmem:[#allocation3 + $0xa78] sm:$0xff]
    %v513 = vld [vmem:[#allocation3 + $0xa80] sm:$0xff]
    %v514 = vld [vmem:[#allocation3 + $0xa88] sm:$0xff]
    %v515 = vld [vmem:[#allocation3 + $0xa90] sm:$0xff]
    %v516 = vld [vmem:[#allocation3 + $0xa98] sm:$0xff]
    %v517 = vld [vmem:[#allocation3 + $0xaa0] sm:$0xff]
    %v518 = vld [vmem:[#allocation3 + $0xaa8] sm:$0xff]
    %v519 = vld [vmem:[#allocation3 + $0xab0] sm:$0xff]
    %v520 = vld [vmem:[#allocation3 + $0xab8] sm:$0xff]
    %v521 = vld [vmem:[#allocation3 + $0xac0] sm:$0xff]
    %v522 = vld [vmem:[#allocation3 + $0xac8] sm:$0xff]
    %v523 = vld [vmem:[#allocation3 + $0xad0] sm:$0xff]
    %v524 = vld [vmem:[#allocation3 + $0xad8] sm:$0xff]
    %v525 = vld [vmem:[#allocation3 + $0xae0] sm:$0xff]
    %v526 = vld [vmem:[#allocation3 + $0xae8] sm:$0xff]
    %v527 = vld [vmem:[#allocation3 + $0xaf0] sm:$0xff]
    %v528 = vld [vmem:[#allocation3 + $0xaf8] sm:$0xff]
    %v529 = vld [vmem:[#allocation3 + $0xb00] sm:$0xff]
    %v530 = vld [vmem:[#allocation3 + $0xb08] sm:$0xff]
    %v531 = vld [vmem:[#allocation3 + $0xb10] sm:$0xff]
    %v532 = vld [vmem:[#allocation3 + $0xb18] sm:$0xff]
    %v533 = vld [vmem:[#allocation3 + $0xb20] sm:$0xff]
    %v534 = vld [vmem:[#allocation3 + $0xb28] sm:$0xff]
    %v535 = vld [vmem:[#allocation3 + $0xb30] sm:$0xff]
    %v536 = vld [vmem:[#allocation3 + $0xb38] sm:$0xff]
    %v537 = vld [vmem:[#allocation3 + $0xb40] sm:$0xff]
    %v538 = vld [vmem:[#allocation3 + $0xb48] sm:$0xff]
    %v539 = vld [vmem:[#allocation3 + $0xb50] sm:$0xff]
    %v540 = vld [vmem:[#allocation3 + $0xb58] sm:$0xff]
    %v541 = vld [vmem:[#allocation3 + $0xb60] sm:$0xff]
    %v542 = vld [vmem:[#allocation3 + $0xb68] sm:$0xff]
    %v543 = vld [vmem:[#allocation3 + $0xb70] sm:$0xff]
    %v544 = vld [vmem:[#allocation3 + $0xb78] sm:$0xff]
    %v545 = vld [vmem:[#allocation3 + $0xb80] sm:$0xff]
    %v546 = vld [vmem:[#allocation3 + $0xb88] sm:$0xff]
    %v547 = vld [vmem:[#allocation3 + $0xb90] sm:$0xff]
    %v548 = vld [vmem:[#allocation3 + $0xb98] sm:$0xff]
    %v549 = vld [vmem:[#allocation3 + $0xba0] sm:$0xff]
    %v550 = vld [vmem:[#allocation3 + $0xba8] sm:$0xff]
    %v551 = vld [vmem:[#allocation3 + $0xbb0] sm:$0xff]
    %v552 = vld [vmem:[#allocation3 + $0xbb8] sm:$0xff]
    %v553 = vld [vmem:[#allocation3 + $0xbc0] sm:$0xff]
    %v554 = vld [vmem:[#allocation3 + $0xbc8] sm:$0xff]
    %v555 = vld [vmem:[#allocation3 + $0xbd0] sm:$0xff]
    %v556 = vld [vmem:[#allocation3 + $0xbd8] sm:$0xff]
    %v557 = vld [vmem:[#allocation3 + $0xbe0] sm:$0xff]
    %v558 = vld [vmem:[#allocation3 + $0xbe8] sm:$0xff]
    %v559 = vld [vmem:[#allocation3 + $0xbf0] sm:$0xff]
    %v560 = vld [vmem:[#allocation3 + $0xbf8] sm:$0xff]
    %v561 = vld [vmem:[#allocation3 + $0xc00] sm:$0xff]
    %v562 = vld [vmem:[#allocation3 + $0xc08] sm:$0xff]
    %v563 = vld [vmem:[#allocation3 + $0xc10] sm:$0xff]
    %v564 = vld [vmem:[#allocation3 + $0xc18] sm:$0xff]
    %v565 = vld [vmem:[#allocation3 + $0xc20] sm:$0xff]
    %v566 = vld [vmem:[#allocation3 + $0xc28] sm:$0xff]
    %v567 = vld [vmem:[#allocation3 + $0xc30] sm:$0xff]
    %v568 = vld [vmem:[#allocation3 + $0xc38] sm:$0xff]
    %v569 = vld [vmem:[#allocation6] sm:$0xff]
    %v570 = vld [vmem:[#allocation6 + $0x8] sm:$0xff]
    %v571 = vld [vmem:[#allocation6 + $0x10] sm:$0xff]
    %v572 = vld [vmem:[#allocation6 + $0x18] sm:$0xff]
    %v573 = vld [vmem:[#allocation6 + $0x20] sm:$0x11]
    %v574 = vld [vmem:[#allocation6 + $0x28] sm:$0x11]
    %v575 = vld [vmem:[#allocation6 + $0x30] sm:$0x11]
    %v576 = vld [vmem:[#allocation6 + $0x38] sm:$0x11]
    %v585 = vunpack.c.l.b16 %v569
    %v586 = vunpack.c.h.b16 %v569
    %v587 = vunpack.c.l.b16 %v570
    %v588 = vunpack.c.h.b16 %v570
    %v589 = vunpack.c.l.b16 %v571
    %v590 = vunpack.c.h.b16 %v571
    %v591 = vunpack.c.l.b16 %v572
    %v592 = vunpack.c.h.b16 %v572
    %v593 = vunpack.c.l.b16 %v573
    %v594 = vunpack.c.h.b16 %v573
    %v595 = vunpack.c.l.b16 %v574
    %v596 = vunpack.c.h.b16 %v574
    %v597 = vunpack.c.l.b16 %v575
    %v598 = vunpack.c.h.b16 %v575
    %v599 = vunpack.c.l.b16 %v576
    %v600 = vunpack.c.h.b16 %v576
    %v601 = vpack.c.b16 %v593, %v585
    %v602 = vpack.c.b16 %v594, %v586
    %v603 = vpack.c.b16 %v595, %v587
    %v604 = vpack.c.b16 %v596, %v588
    %v605 = vpack.c.b16 %v597, %v589
    %v606 = vpack.c.b16 %v598, %v590
    %v607 = vpack.c.b16 %v599, %v591
    %v608 = vpack.c.b16 %v600, %v592
    %vm609 = vcmask 80896
    %v611 = vsel %vm609, %v176, 0
    %vm613 = vcmask 1044480
    %v615 = vsel %vm613, %v601, 0
    %v618 = vsel %vm613, %v602, 0
    %v621 = vsel %vm613, %v603, 0
    %v624 = vsel %vm613, %v604, 0
    %v627 = vsel %vm613, %v605, 0
    %v630 = vsel %vm613, %v606, 0
    %v633 = vsel %vm613, %v607, 0
    %v636 = vsel %vm613, %v608, 0
    %638 = vmatpush.bf16.msra.mxu0 0
    %639 = vmatpush.bf16.msra.mxu0 0
    %640 = vmatpush.bf16.msra.mxu0 0
    %641 = vmatpush.bf16.msra.mxu0 0
    %642 = vmatpush.bf16.msra.mxu0 0
    %643 = vmatpush.bf16.msra.mxu0 0
    %644 = vmatpush.bf16.msra.mxu0 0
    %645 = vmatpush.bf16.msra.mxu0 %v615
    %646 = vmatmul.bf16.gmra.mxu0 %v611
    %v647 = vpop.f32.mrf.mxu0
    %v648 = vadd.f32 0.0, %v647
    %v649 = vpop.f32.mrf.mxu0
    %650 = vdwg.mxu0
    %651 = vmatpush.bf16.msra.mxu0 0
    %652 = vmatpush.bf16.msra.mxu0 0
    %653 = vmatpush.bf16.msra.mxu0 0
    %654 = vmatpush.bf16.msra.mxu0 0
    %655 = vmatpush.bf16.msra.mxu0 0
    %656 = vmatpush.bf16.msra.mxu0 0
    %657 = vmatpush.bf16.msra.mxu0 0
    %658 = vmatpush.bf16.msra.mxu0 %v618
    %659 = vmatmul.bf16.gmra.mxu0 %v611
    %v660 = vpop.f32.mrf.mxu0
    %v661 = vadd.f32 0.0, %v660
    %v662 = vpop.f32.mrf.mxu0
    %663 = vdwg.mxu0
    %664 = vmatpush.bf16.msra.mxu0 0
    %665 = vmatpush.bf16.msra.mxu0 0
    %666 = vmatpush.bf16.msra.mxu0 0
    %667 = vmatpush.bf16.msra.mxu0 0
    %668 = vmatpush.bf16.msra.mxu0 0
    %669 = vmatpush.bf16.msra.mxu0 0
    %670 = vmatpush.bf16.msra.mxu0 0
    %671 = vmatpush.bf16.msra.mxu0 %v621
    %672 = vmatmul.bf16.gmra.mxu0 %v611
    %v673 = vpop.f32.mrf.mxu0
    %v674 = vadd.f32 0.0, %v673
    %v675 = vpop.f32.mrf.mxu0
    %676 = vdwg.mxu0
    %677 = vmatpush.bf16.msra.mxu0 0
    %678 = vmatpush.bf16.msra.mxu0 0
    %679 = vmatpush.bf16.msra.mxu0 0
    %680 = vmatpush.bf16.msra.mxu0 0
    %681 = vmatpush.bf16.msra.mxu0 0
    %682 = vmatpush.bf16.msra.mxu0 0
    %683 = vmatpush.bf16.msra.mxu0 0
    %684 = vmatpush.bf16.msra.mxu0 %v624
    %685 = vmatmul.bf16.gmra.mxu0 %v611
    %v686 = vpop.f32.mrf.mxu0
    %v687 = vadd.f32 0.0, %v686
    %v688 = vpop.f32.mrf.mxu0
    %689 = vdwg.mxu0
    %690 = vmatpush.bf16.msra.mxu0 0
    %691 = vmatpush.bf16.msra.mxu0 0
    %692 = vmatpush.bf16.msra.mxu0 0
    %693 = vmatpush.bf16.msra.mxu0 0
    %694 = vmatpush.bf16.msra.mxu0 0
    %695 = vmatpush.bf16.msra.mxu0 0
    %696 = vmatpush.bf16.msra.mxu0 0
    %697 = vmatpush.bf16.msra.mxu0 %v627
    %698 = vmatmul.bf16.gmra.mxu0 %v611
    %v699 = vpop.f32.mrf.mxu0
    %v700 = vadd.f32 0.0, %v699
    %v701 = vpop.f32.mrf.mxu0
    %702 = vdwg.mxu0
    %703 = vmatpush.bf16.msra.mxu0 0
    %704 = vmatpush.bf16.msra.mxu0 0
    %705 = vmatpush.bf16.msra.mxu0 0
    %706 = vmatpush.bf16.msra.mxu0 0
    %707 = vmatpush.bf16.msra.mxu0 0
    %708 = vmatpush.bf16.msra.mxu0 0
    %709 = vmatpush.bf16.msra.mxu0 0
    %710 = vmatpush.bf16.msra.mxu0 %v630
    %711 = vmatmul.bf16.gmra.mxu0 %v611
    %v712 = vpop.f32.mrf.mxu0
    %v713 = vadd.f32 0.0, %v712
    %v714 = vpop.f32.mrf.mxu0
    %715 = vdwg.mxu0
    %716 = vmatpush.bf16.msra.mxu0 0
    %717 = vmatpush.bf16.msra.mxu0 0
    %718 = vmatpush.bf16.msra.mxu0 0
    %719 = vmatpush.bf16.msra.mxu0 0
    %720 = vmatpush.bf16.msra.mxu0 0
    %721 = vmatpush.bf16.msra.mxu0 0
    %722 = vmatpush.bf16.msra.mxu0 0
    %723 = vmatpush.bf16.msra.mxu0 %v633
    %724 = vmatmul.bf16.gmra.mxu0 %v611
    %v725 = vpop.f32.mrf.mxu0
    %v726 = vadd.f32 0.0, %v725
    %v727 = vpop.f32.mrf.mxu0
    %728 = vdwg.mxu0
    %729 = vmatpush.bf16.msra.mxu0 0
    %730 = vmatpush.bf16.msra.mxu0 0
    %731 = vmatpush.bf16.msra.mxu0 0
    %732 = vmatpush.bf16.msra.mxu0 0
    %733 = vmatpush.bf16.msra.mxu0 0
    %734 = vmatpush.bf16.msra.mxu0 0
    %735 = vmatpush.bf16.msra.mxu0 0
    %736 = vmatpush.bf16.msra.mxu0 %v636
    %737 = vmatmul.bf16.gmra.mxu0 %v611
    %v738 = vpop.f32.mrf.mxu0
    %v739 = vadd.f32 0.0, %v738
    %v740 = vpop.f32.mrf.mxu0
    %741 = vdwg.mxu0
    %v1134 = vunpack.c.l.b16 %v177
    %v1135 = vunpack.c.h.b16 %v177
    %v1136 = vunpack.c.l.b16 %v178
    %v1137 = vunpack.c.h.b16 %v178
    %v1138 = vunpack.c.l.b16 %v179
    %v1139 = vunpack.c.h.b16 %v179
    %v1140 = vunpack.c.l.b16 %v180
    %v1141 = vunpack.c.h.b16 %v180
    %v1142 = vunpack.c.l.b16 %v181
    %v1143 = vunpack.c.h.b16 %v181
    %v1144 = vunpack.c.l.b16 %v182
    %v1145 = vunpack.c.h.b16 %v182
    %v1146 = vunpack.c.l.b16 %v183
    %v1147 = vunpack.c.h.b16 %v183
    %v1148 = vunpack.c.l.b16 %v184
    %v1149 = vunpack.c.h.b16 %v184
    %v1150 = vunpack.c.l.b16 %v185
    %v1151 = vunpack.c.h.b16 %v185
    %v1152 = vunpack.c.l.b16 %v186
    %v1153 = vunpack.c.h.b16 %v186
    %v1154 = vunpack.c.l.b16 %v187
    %v1155 = vunpack.c.h.b16 %v187
    %v1156 = vunpack.c.l.b16 %v188
    %v1157 = vunpack.c.h.b16 %v188
    %v1158 = vunpack.c.l.b16 %v189
    %v1159 = vunpack.c.h.b16 %v189
    %v1160 = vunpack.c.l.b16 %v190
    %v1161 = vunpack.c.h.b16 %v190
    %v1162 = vunpack.c.l.b16 %v191
    %v1163 = vunpack.c.h.b16 %v191
    %v1164 = vunpack.c.l.b16 %v192
    %v1165 = vunpack.c.h.b16 %v192
    %v1166 = vunpack.c.l.b16 %v193
    %v1167 = vunpack.c.h.b16 %v193
    %v1168 = vunpack.c.l.b16 %v194
    %v1169 = vunpack.c.h.b16 %v194
    %v1170 = vunpack.c.l.b16 %v195
    %v1171 = vunpack.c.h.b16 %v195
    %v1172 = vunpack.c.l.b16 %v196
    %v1173 = vunpack.c.h.b16 %v196
    %v1174 = vunpack.c.l.b16 %v197
    %v1175 = vunpack.c.h.b16 %v197
    %v1176 = vunpack.c.l.b16 %v198
    %v1177 = vunpack.c.h.b16 %v198
    %v1178 = vunpack.c.l.b16 %v199
    %v1179 = vunpack.c.h.b16 %v199
    %v1180 = vunpack.c.l.b16 %v200
    %v1181 = vunpack.c.h.b16 %v200
    %v1182 = vunpack.c.l.b16 %v201
    %v1183 = vunpack.c.h.b16 %v201
    %v1184 = vunpack.c.l.b16 %v202
    %v1185 = vunpack.c.h.b16 %v202
    %v1186 = vunpack.c.l.b16 %v203
    %v1187 = vunpack.c.h.b16 %v203
    %v1188 = vunpack.c.l.b16 %v204
    %v1189 = vunpack.c.h.b16 %v204
    %v1190 = vunpack.c.l.b16 %v205
    %v1191 = vunpack.c.h.b16 %v205
    %v1192 = vunpack.c.l.b16 %v206
    %v1193 = vunpack.c.h.b16 %v206
    %v1194 = vunpack.c.l.b16 %v207
    %v1195 = vunpack.c.h.b16 %v207
    %v1196 = vunpack.c.l.b16 %v208
    %v1197 = vunpack.c.h.b16 %v208
    %v1198 = vunpack.c.l.b16 %v209
    %v1199 = vunpack.c.h.b16 %v209
    %v1200 = vunpack.c.l.b16 %v210
    %v1201 = vunpack.c.h.b16 %v210
    %v1202 = vunpack.c.l.b16 %v211
    %v1203 = vunpack.c.h.b16 %v211
    %v1204 = vunpack.c.l.b16 %v212
    %v1205 = vunpack.c.h.b16 %v212
    %v1206 = vunpack.c.l.b16 %v213
    %v1207 = vunpack.c.h.b16 %v213
    %v1208 = vunpack.c.l.b16 %v214
    %v1209 = vunpack.c.h.b16 %v214
    %v1210 = vunpack.c.l.b16 %v215
    %v1211 = vunpack.c.h.b16 %v215
    %v1212 = vunpack.c.l.b16 %v216
    %v1213 = vunpack.c.h.b16 %v216
    %v1214 = vunpack.c.l.b16 %v217
    %v1215 = vunpack.c.h.b16 %v217
    %v1216 = vunpack.c.l.b16 %v218
    %v1217 = vunpack.c.h.b16 %v218
    %v1218 = vunpack.c.l.b16 %v219
    %v1219 = vunpack.c.h.b16 %v219
    %v1220 = vunpack.c.l.b16 %v220
    %v1221 = vunpack.c.h.b16 %v220
    %v1222 = vunpack.c.l.b16 %v221
    %v1223 = vunpack.c.h.b16 %v221
    %v1224 = vunpack.c.l.b16 %v222
    %v1225 = vunpack.c.h.b16 %v222
    %v1226 = vunpack.c.l.b16 %v223
    %v1227 = vunpack.c.h.b16 %v223
    %v1228 = vunpack.c.l.b16 %v224
    %v1229 = vunpack.c.h.b16 %v224
    %v1230 = vunpack.c.l.b16 %v225
    %v1231 = vunpack.c.h.b16 %v225
    %v1232 = vunpack.c.l.b16 %v226
    %v1233 = vunpack.c.h.b16 %v226
    %v1234 = vunpack.c.l.b16 %v227
    %v1235 = vunpack.c.h.b16 %v227
    %v1236 = vunpack.c.l.b16 %v228
    %v1237 = vunpack.c.h.b16 %v228
    %v1238 = vunpack.c.l.b16 %v229
    %v1239 = vunpack.c.h.b16 %v229
    %v1240 = vunpack.c.l.b16 %v230
    %v1241 = vunpack.c.h.b16 %v230
    %v1242 = vunpack.c.l.b16 %v231
    %v1243 = vunpack.c.h.b16 %v231
    %v1244 = vunpack.c.l.b16 %v232
    %v1245 = vunpack.c.h.b16 %v232
    %v1246 = vunpack.c.l.b16 %v233
    %v1247 = vunpack.c.h.b16 %v233
    %v1248 = vunpack.c.l.b16 %v234
    %v1249 = vunpack.c.h.b16 %v234
    %v1250 = vunpack.c.l.b16 %v235
    %v1251 = vunpack.c.h.b16 %v235
    %v1252 = vunpack.c.l.b16 %v236
    %v1253 = vunpack.c.h.b16 %v236
    %v1254 = vunpack.c.l.b16 %v237
    %v1255 = vunpack.c.h.b16 %v237
    %v1256 = vunpack.c.l.b16 %v238
    %v1257 = vunpack.c.h.b16 %v238
    %v1258 = vunpack.c.l.b16 %v239
    %v1259 = vunpack.c.h.b16 %v239
    %v1260 = vunpack.c.l.b16 %v240
    %v1261 = vunpack.c.h.b16 %v240
    %v1262 = vunpack.c.l.b16 %v241
    %v1263 = vunpack.c.h.b16 %v241
    %v1264 = vunpack.c.l.b16 %v242
    %v1265 = vunpack.c.h.b16 %v242
    %v1266 = vunpack.c.l.b16 %v243
    %v1267 = vunpack.c.h.b16 %v243
    %v1268 = vunpack.c.l.b16 %v244
    %v1269 = vunpack.c.h.b16 %v244
    %v1270 = vunpack.c.l.b16 %v245
    %v1271 = vunpack.c.h.b16 %v245
    %v1272 = vunpack.c.l.b16 %v246
    %v1273 = vunpack.c.h.b16 %v246
    %v1274 = vunpack.c.l.b16 %v247
    %v1275 = vunpack.c.h.b16 %v247
    %v1276 = vunpack.c.l.b16 %v248
    %v1277 = vunpack.c.h.b16 %v248
    %v1278 = vunpack.c.l.b16 %v249
    %v1279 = vunpack.c.h.b16 %v249
    %v1280 = vunpack.c.l.b16 %v250
    %v1281 = vunpack.c.h.b16 %v250
    %v1282 = vunpack.c.l.b16 %v251
    %v1283 = vunpack.c.h.b16 %v251
    %v1284 = vunpack.c.l.b16 %v252
    %v1285 = vunpack.c.h.b16 %v252
    %v1286 = vunpack.c.l.b16 %v253
    %v1287 = vunpack.c.h.b16 %v253
    %v1288 = vunpack.c.l.b16 %v254
    %v1289 = vunpack.c.h.b16 %v254
    %v1290 = vunpack.c.l.b16 %v255
    %v1291 = vunpack.c.h.b16 %v255
    %v1292 = vunpack.c.l.b16 %v256
    %v1293 = vunpack.c.h.b16 %v256
    %v1294 = vunpack.c.l.b16 %v257
    %v1295 = vunpack.c.h.b16 %v257
    %v1296 = vunpack.c.l.b16 %v258
    %v1297 = vunpack.c.h.b16 %v258
    %v1298 = vunpack.c.l.b16 %v259
    %v1299 = vunpack.c.h.b16 %v259
    %v1300 = vunpack.c.l.b16 %v260
    %v1301 = vunpack.c.h.b16 %v260
    %v1302 = vunpack.c.l.b16 %v261
    %v1303 = vunpack.c.h.b16 %v261
    %v1304 = vunpack.c.l.b16 %v262
    %v1305 = vunpack.c.h.b16 %v262
    %v1306 = vunpack.c.l.b16 %v263
    %v1307 = vunpack.c.h.b16 %v263
    %v1308 = vunpack.c.l.b16 %v264
    %v1309 = vunpack.c.h.b16 %v264
    %v1310 = vunpack.c.l.b16 %v265
    %v1311 = vunpack.c.h.b16 %v265
    %v1312 = vunpack.c.l.b16 %v266
    %v1313 = vunpack.c.h.b16 %v266
    %v1314 = vunpack.c.l.b16 %v267
    %v1315 = vunpack.c.h.b16 %v267
    %v1316 = vunpack.c.l.b16 %v268
    %v1317 = vunpack.c.h.b16 %v268
    %v1318 = vunpack.c.l.b16 %v269
    %v1319 = vunpack.c.h.b16 %v269
    %v1320 = vunpack.c.l.b16 %v270
    %v1321 = vunpack.c.h.b16 %v270
    %v1322 = vunpack.c.l.b16 %v271
    %v1323 = vunpack.c.h.b16 %v271
    %v1324 = vunpack.c.l.b16 %v272
    %v1325 = vunpack.c.h.b16 %v272
    %v1326 = vunpack.c.l.b16 %v273
    %v1327 = vunpack.c.h.b16 %v273
    %v1328 = vunpack.c.l.b16 %v274
    %v1329 = vunpack.c.h.b16 %v274
    %v1330 = vunpack.c.l.b16 %v275
    %v1331 = vunpack.c.h.b16 %v275
    %v1332 = vunpack.c.l.b16 %v276
    %v1333 = vunpack.c.h.b16 %v276
    %v1334 = vunpack.c.l.b16 %v277
    %v1335 = vunpack.c.h.b16 %v277
    %v1336 = vunpack.c.l.b16 %v278
    %v1337 = vunpack.c.h.b16 %v278
    %v1338 = vunpack.c.l.b16 %v279
    %v1339 = vunpack.c.h.b16 %v279
    %v1340 = vunpack.c.l.b16 %v280
    %v1341 = vunpack.c.h.b16 %v280
    %v1342 = vunpack.c.l.b16 %v281
    %v1343 = vunpack.c.h.b16 %v281
    %v1344 = vunpack.c.l.b16 %v282
    %v1345 = vunpack.c.h.b16 %v282
    %v1346 = vunpack.c.l.b16 %v283
    %v1347 = vunpack.c.h.b16 %v283
    %v1348 = vunpack.c.l.b16 %v284
    %v1349 = vunpack.c.h.b16 %v284
    %v1350 = vunpack.c.l.b16 %v285
    %v1351 = vunpack.c.h.b16 %v285
    %v1352 = vunpack.c.l.b16 %v286
    %v1353 = vunpack.c.h.b16 %v286
    %v1354 = vunpack.c.l.b16 %v287
    %v1355 = vunpack.c.h.b16 %v287
    %v1356 = vunpack.c.l.b16 %v288
    %v1357 = vunpack.c.h.b16 %v288
    %v1358 = vunpack.c.l.b16 %v289
    %v1359 = vunpack.c.h.b16 %v289
    %v1360 = vunpack.c.l.b16 %v290
    %v1361 = vunpack.c.h.b16 %v290
    %v1362 = vunpack.c.l.b16 %v291
    %v1363 = vunpack.c.h.b16 %v291
    %v1364 = vunpack.c.l.b16 %v292
    %v1365 = vunpack.c.h.b16 %v292
    %v1366 = vunpack.c.l.b16 %v293
    %v1367 = vunpack.c.h.b16 %v293
    %v1368 = vunpack.c.l.b16 %v294
    %v1369 = vunpack.c.h.b16 %v294
    %v1370 = vunpack.c.l.b16 %v295
    %v1371 = vunpack.c.h.b16 %v295
    %v1372 = vunpack.c.l.b16 %v296
    %v1373 = vunpack.c.h.b16 %v296
    %v1374 = vunpack.c.l.b16 %v297
    %v1375 = vunpack.c.h.b16 %v297
    %v1376 = vunpack.c.l.b16 %v298
    %v1377 = vunpack.c.h.b16 %v298
    %v1378 = vunpack.c.l.b16 %v299
    %v1379 = vunpack.c.h.b16 %v299
    %v1380 = vunpack.c.l.b16 %v300
    %v1381 = vunpack.c.h.b16 %v300
    %v1382 = vunpack.c.l.b16 %v301
    %v1383 = vunpack.c.h.b16 %v301
    %v1384 = vunpack.c.l.b16 %v302
    %v1385 = vunpack.c.h.b16 %v302
    %v1386 = vunpack.c.l.b16 %v303
    %v1387 = vunpack.c.h.b16 %v303
    %v1388 = vunpack.c.l.b16 %v304
    %v1389 = vunpack.c.h.b16 %v304
    %v1390 = vunpack.c.l.b16 %v305
    %v1391 = vunpack.c.h.b16 %v305
    %v1392 = vunpack.c.l.b16 %v306
    %v1393 = vunpack.c.h.b16 %v306
    %v1394 = vunpack.c.l.b16 %v307
    %v1395 = vunpack.c.h.b16 %v307
    %v1396 = vunpack.c.l.b16 %v308
    %v1397 = vunpack.c.h.b16 %v308
    %v1398 = vunpack.c.l.b16 %v309
    %v1399 = vunpack.c.h.b16 %v309
    %v1400 = vunpack.c.l.b16 %v310
    %v1401 = vunpack.c.h.b16 %v310
    %v1402 = vunpack.c.l.b16 %v311
    %v1403 = vunpack.c.h.b16 %v311
    %v1404 = vunpack.c.l.b16 %v312
    %v1405 = vunpack.c.h.b16 %v312
    %v1406 = vunpack.c.l.b16 %v313
    %v1407 = vunpack.c.h.b16 %v313
    %v1408 = vunpack.c.l.b16 %v314
    %v1409 = vunpack.c.h.b16 %v314
    %v1410 = vunpack.c.l.b16 %v315
    %v1411 = vunpack.c.h.b16 %v315
    %v1412 = vunpack.c.l.b16 %v316
    %v1413 = vunpack.c.h.b16 %v316
    %v1414 = vunpack.c.l.b16 %v317
    %v1415 = vunpack.c.h.b16 %v317
    %v1416 = vunpack.c.l.b16 %v318
    %v1417 = vunpack.c.h.b16 %v318
    %v1418 = vunpack.c.l.b16 %v319
    %v1419 = vunpack.c.h.b16 %v319
    %v1420 = vunpack.c.l.b16 %v320
    %v1421 = vunpack.c.h.b16 %v320
    %v1422 = vunpack.c.l.b16 %v321
    %v1423 = vunpack.c.h.b16 %v321
    %v1424 = vunpack.c.l.b16 %v322
    %v1425 = vunpack.c.h.b16 %v322
    %v1426 = vunpack.c.l.b16 %v323
    %v1427 = vunpack.c.h.b16 %v323
    %v1428 = vunpack.c.l.b16 %v324
    %v1429 = vunpack.c.h.b16 %v324
    %v1430 = vunpack.c.l.b16 %v325
    %v1431 = vunpack.c.h.b16 %v325
    %v1432 = vunpack.c.l.b16 %v326
    %v1433 = vunpack.c.h.b16 %v326
    %v1434 = vunpack.c.l.b16 %v327
    %v1435 = vunpack.c.h.b16 %v327
    %v1436 = vunpack.c.l.b16 %v328
    %v1437 = vunpack.c.h.b16 %v328
    %v1438 = vunpack.c.l.b16 %v329
    %v1439 = vunpack.c.h.b16 %v329
    %v1440 = vunpack.c.l.b16 %v330
    %v1441 = vunpack.c.h.b16 %v330
    %v1442 = vunpack.c.l.b16 %v331
    %v1443 = vunpack.c.h.b16 %v331
    %v1444 = vunpack.c.l.b16 %v332
    %v1445 = vunpack.c.h.b16 %v332
    %v1446 = vunpack.c.l.b16 %v333
    %v1447 = vunpack.c.h.b16 %v333
    %v1448 = vunpack.c.l.b16 %v334
    %v1449 = vunpack.c.h.b16 %v334
    %v1450 = vunpack.c.l.b16 %v335
    %v1451 = vunpack.c.h.b16 %v335
    %v1452 = vunpack.c.l.b16 %v336
    %v1453 = vunpack.c.h.b16 %v336
    %v1454 = vunpack.c.l.b16 %v337
    %v1455 = vunpack.c.h.b16 %v337
    %v1456 = vunpack.c.l.b16 %v338
    %v1457 = vunpack.c.h.b16 %v338
    %v1458 = vunpack.c.l.b16 %v339
    %v1459 = vunpack.c.h.b16 %v339
    %v1460 = vunpack.c.l.b16 %v340
    %v1461 = vunpack.c.h.b16 %v340
    %v1462 = vunpack.c.l.b16 %v341
    %v1463 = vunpack.c.h.b16 %v341
    %v1464 = vunpack.c.l.b16 %v342
    %v1465 = vunpack.c.h.b16 %v342
    %v1466 = vunpack.c.l.b16 %v343
    %v1467 = vunpack.c.h.b16 %v343
    %v1468 = vunpack.c.l.b16 %v344
    %v1469 = vunpack.c.h.b16 %v344
    %v1470 = vunpack.c.l.b16 %v345
    %v1471 = vunpack.c.h.b16 %v345
    %v1472 = vunpack.c.l.b16 %v346
    %v1473 = vunpack.c.h.b16 %v346
    %v1474 = vunpack.c.l.b16 %v347
    %v1475 = vunpack.c.h.b16 %v347
    %v1476 = vunpack.c.l.b16 %v348
    %v1477 = vunpack.c.h.b16 %v348
    %v1478 = vunpack.c.l.b16 %v349
    %v1479 = vunpack.c.h.b16 %v349
    %v1480 = vunpack.c.l.b16 %v350
    %v1481 = vunpack.c.h.b16 %v350
    %v1482 = vunpack.c.l.b16 %v351
    %v1483 = vunpack.c.h.b16 %v351
    %v1484 = vunpack.c.l.b16 %v352
    %v1485 = vunpack.c.h.b16 %v352
    %v1486 = vunpack.c.l.b16 %v353
    %v1487 = vunpack.c.h.b16 %v353
    %v1488 = vunpack.c.l.b16 %v354
    %v1489 = vunpack.c.h.b16 %v354
    %v1490 = vunpack.c.l.b16 %v355
    %v1491 = vunpack.c.h.b16 %v355
    %v1492 = vunpack.c.l.b16 %v356
    %v1493 = vunpack.c.h.b16 %v356
    %v1494 = vunpack.c.l.b16 %v357
    %v1495 = vunpack.c.h.b16 %v357
    %v1496 = vunpack.c.l.b16 %v358
    %v1497 = vunpack.c.h.b16 %v358
    %v1498 = vunpack.c.l.b16 %v359
    %v1499 = vunpack.c.h.b16 %v359
    %v1500 = vunpack.c.l.b16 %v360
    %v1501 = vunpack.c.h.b16 %v360
    %v1502 = vunpack.c.l.b16 %v361
    %v1503 = vunpack.c.h.b16 %v361
    %v1504 = vunpack.c.l.b16 %v362
    %v1505 = vunpack.c.h.b16 %v362
    %v1506 = vunpack.c.l.b16 %v363
    %v1507 = vunpack.c.h.b16 %v363
    %v1508 = vunpack.c.l.b16 %v364
    %v1509 = vunpack.c.h.b16 %v364
    %v1510 = vunpack.c.l.b16 %v365
    %v1511 = vunpack.c.h.b16 %v365
    %v1512 = vunpack.c.l.b16 %v366
    %v1513 = vunpack.c.h.b16 %v366
    %v1514 = vunpack.c.l.b16 %v367
    %v1515 = vunpack.c.h.b16 %v367
    %v1516 = vunpack.c.l.b16 %v368
    %v1517 = vunpack.c.h.b16 %v368
    %v1518 = vunpack.c.l.b16 %v369
    %v1519 = vunpack.c.h.b16 %v369
    %v1520 = vunpack.c.l.b16 %v370
    %v1521 = vunpack.c.h.b16 %v370
    %v1522 = vunpack.c.l.b16 %v371
    %v1523 = vunpack.c.h.b16 %v371
    %v1524 = vunpack.c.l.b16 %v372
    %v1525 = vunpack.c.h.b16 %v372
    %v1526 = vunpack.c.l.b16 %v373
    %v1527 = vunpack.c.h.b16 %v373
    %v1528 = vunpack.c.l.b16 %v374
    %v1529 = vunpack.c.h.b16 %v374
    %v1530 = vunpack.c.l.b16 %v375
    %v1531 = vunpack.c.h.b16 %v375
    %v1532 = vunpack.c.l.b16 %v376
    %v1533 = vunpack.c.h.b16 %v376
    %v1534 = vunpack.c.l.b16 %v377
    %v1535 = vunpack.c.h.b16 %v377
    %v1536 = vunpack.c.l.b16 %v378
    %v1537 = vunpack.c.h.b16 %v378
    %v1538 = vunpack.c.l.b16 %v379
    %v1539 = vunpack.c.h.b16 %v379
    %v1540 = vunpack.c.l.b16 %v380
    %v1541 = vunpack.c.h.b16 %v380
    %v1542 = vunpack.c.l.b16 %v381
    %v1543 = vunpack.c.h.b16 %v381
    %v1544 = vunpack.c.l.b16 %v382
    %v1545 = vunpack.c.h.b16 %v382
    %v1546 = vunpack.c.l.b16 %v383
    %v1547 = vunpack.c.h.b16 %v383
    %v1548 = vunpack.c.l.b16 %v384
    %v1549 = vunpack.c.h.b16 %v384
    %v1550 = vunpack.c.l.b16 %v385
    %v1551 = vunpack.c.h.b16 %v385
    %v1552 = vunpack.c.l.b16 %v386
    %v1553 = vunpack.c.h.b16 %v386
    %v1554 = vunpack.c.l.b16 %v387
    %v1555 = vunpack.c.h.b16 %v387
    %v1556 = vunpack.c.l.b16 %v388
    %v1557 = vunpack.c.h.b16 %v388
    %v1558 = vunpack.c.l.b16 %v389
    %v1559 = vunpack.c.h.b16 %v389
    %v1560 = vunpack.c.l.b16 %v390
    %v1561 = vunpack.c.h.b16 %v390
    %v1562 = vunpack.c.l.b16 %v391
    %v1563 = vunpack.c.h.b16 %v391
    %v1564 = vunpack.c.l.b16 %v392
    %v1565 = vunpack.c.h.b16 %v392
    %v1566 = vunpack.c.l.b16 %v393
    %v1567 = vunpack.c.h.b16 %v393
    %v1568 = vunpack.c.l.b16 %v394
    %v1569 = vunpack.c.h.b16 %v394
    %v1570 = vunpack.c.l.b16 %v395
    %v1571 = vunpack.c.h.b16 %v395
    %v1572 = vunpack.c.l.b16 %v396
    %v1573 = vunpack.c.h.b16 %v396
    %v1574 = vunpack.c.l.b16 %v397
    %v1575 = vunpack.c.h.b16 %v397
    %v1576 = vunpack.c.l.b16 %v398
    %v1577 = vunpack.c.h.b16 %v398
    %v1578 = vunpack.c.l.b16 %v399
    %v1579 = vunpack.c.h.b16 %v399
    %v1580 = vunpack.c.l.b16 %v400
    %v1581 = vunpack.c.h.b16 %v400
    %v1582 = vunpack.c.l.b16 %v401
    %v1583 = vunpack.c.h.b16 %v401
    %v1584 = vunpack.c.l.b16 %v402
    %v1585 = vunpack.c.h.b16 %v402
    %v1586 = vunpack.c.l.b16 %v403
    %v1587 = vunpack.c.h.b16 %v403
    %v1588 = vunpack.c.l.b16 %v404
    %v1589 = vunpack.c.h.b16 %v404
    %v1590 = vunpack.c.l.b16 %v405
    %v1591 = vunpack.c.h.b16 %v405
    %v1592 = vunpack.c.l.b16 %v406
    %v1593 = vunpack.c.h.b16 %v406
    %v1594 = vunpack.c.l.b16 %v407
    %v1595 = vunpack.c.h.b16 %v407
    %v1596 = vunpack.c.l.b16 %v408
    %v1597 = vunpack.c.h.b16 %v408
    %v1598 = vunpack.c.l.b16 %v409
    %v1599 = vunpack.c.h.b16 %v409
    %v1600 = vunpack.c.l.b16 %v410
    %v1601 = vunpack.c.h.b16 %v410
    %v1602 = vunpack.c.l.b16 %v411
    %v1603 = vunpack.c.h.b16 %v411
    %v1604 = vunpack.c.l.b16 %v412
    %v1605 = vunpack.c.h.b16 %v412
    %v1606 = vunpack.c.l.b16 %v413
    %v1607 = vunpack.c.h.b16 %v413
    %v1608 = vunpack.c.l.b16 %v414
    %v1609 = vunpack.c.h.b16 %v414
    %v1610 = vunpack.c.l.b16 %v415
    %v1611 = vunpack.c.h.b16 %v415
    %v1612 = vunpack.c.l.b16 %v416
    %v1613 = vunpack.c.h.b16 %v416
    %v1614 = vunpack.c.l.b16 %v417
    %v1615 = vunpack.c.h.b16 %v417
    %v1616 = vunpack.c.l.b16 %v418
    %v1617 = vunpack.c.h.b16 %v418
    %v1618 = vunpack.c.l.b16 %v419
    %v1619 = vunpack.c.h.b16 %v419
    %v1620 = vunpack.c.l.b16 %v420
    %v1621 = vunpack.c.h.b16 %v420
    %v1622 = vunpack.c.l.b16 %v421
    %v1623 = vunpack.c.h.b16 %v421
    %v1624 = vunpack.c.l.b16 %v422
    %v1625 = vunpack.c.h.b16 %v422
    %v1626 = vunpack.c.l.b16 %v423
    %v1627 = vunpack.c.h.b16 %v423
    %v1628 = vunpack.c.l.b16 %v424
    %v1629 = vunpack.c.h.b16 %v424
    %v1630 = vunpack.c.l.b16 %v425
    %v1631 = vunpack.c.h.b16 %v425
    %v1632 = vunpack.c.l.b16 %v426
    %v1633 = vunpack.c.h.b16 %v426
    %v1634 = vunpack.c.l.b16 %v427
    %v1635 = vunpack.c.h.b16 %v427
    %v1636 = vunpack.c.l.b16 %v428
    %v1637 = vunpack.c.h.b16 %v428
    %v1638 = vunpack.c.l.b16 %v429
    %v1639 = vunpack.c.h.b16 %v429
    %v1640 = vunpack.c.l.b16 %v430
    %v1641 = vunpack.c.h.b16 %v430
    %v1642 = vunpack.c.l.b16 %v431
    %v1643 = vunpack.c.h.b16 %v431
    %v1644 = vunpack.c.l.b16 %v432
    %v1645 = vunpack.c.h.b16 %v432
    %v1646 = vunpack.c.l.b16 %v433
    %v1647 = vunpack.c.h.b16 %v433
    %v1648 = vunpack.c.l.b16 %v434
    %v1649 = vunpack.c.h.b16 %v434
    %v1650 = vunpack.c.l.b16 %v435
    %v1651 = vunpack.c.h.b16 %v435
    %v1652 = vunpack.c.l.b16 %v436
    %v1653 = vunpack.c.h.b16 %v436
    %v1654 = vunpack.c.l.b16 %v437
    %v1655 = vunpack.c.h.b16 %v437
    %v1656 = vunpack.c.l.b16 %v438
    %v1657 = vunpack.c.h.b16 %v438
    %v1658 = vunpack.c.l.b16 %v439
    %v1659 = vunpack.c.h.b16 %v439
    %v1660 = vunpack.c.l.b16 %v440
    %v1661 = vunpack.c.h.b16 %v440
    %v1662 = vunpack.c.l.b16 %v441
    %v1663 = vunpack.c.h.b16 %v441
    %v1664 = vunpack.c.l.b16 %v442
    %v1665 = vunpack.c.h.b16 %v442
    %v1666 = vunpack.c.l.b16 %v443
    %v1667 = vunpack.c.h.b16 %v443
    %v1668 = vunpack.c.l.b16 %v444
    %v1669 = vunpack.c.h.b16 %v444
    %v1670 = vunpack.c.l.b16 %v445
    %v1671 = vunpack.c.h.b16 %v445
    %v1672 = vunpack.c.l.b16 %v446
    %v1673 = vunpack.c.h.b16 %v446
    %v1674 = vunpack.c.l.b16 %v447
    %v1675 = vunpack.c.h.b16 %v447
    %v1676 = vunpack.c.l.b16 %v448
    %v1677 = vunpack.c.h.b16 %v448
    %v1678 = vunpack.c.l.b16 %v449
    %v1679 = vunpack.c.h.b16 %v449
    %v1680 = vunpack.c.l.b16 %v450
    %v1681 = vunpack.c.h.b16 %v450
    %v1682 = vunpack.c.l.b16 %v451
    %v1683 = vunpack.c.h.b16 %v451
    %v1684 = vunpack.c.l.b16 %v452
    %v1685 = vunpack.c.h.b16 %v452
    %v1686 = vunpack.c.l.b16 %v453
    %v1687 = vunpack.c.h.b16 %v453
    %v1688 = vunpack.c.l.b16 %v454
    %v1689 = vunpack.c.h.b16 %v454
    %v1690 = vunpack.c.l.b16 %v455
    %v1691 = vunpack.c.h.b16 %v455
    %v1692 = vunpack.c.l.b16 %v456
    %v1693 = vunpack.c.h.b16 %v456
    %v1694 = vunpack.c.l.b16 %v457
    %v1695 = vunpack.c.h.b16 %v457
    %v1696 = vunpack.c.l.b16 %v458
    %v1697 = vunpack.c.h.b16 %v458
    %v1698 = vunpack.c.l.b16 %v459
    %v1699 = vunpack.c.h.b16 %v459
    %v1700 = vunpack.c.l.b16 %v460
    %v1701 = vunpack.c.h.b16 %v460
    %v1702 = vunpack.c.l.b16 %v461
    %v1703 = vunpack.c.h.b16 %v461
    %v1704 = vunpack.c.l.b16 %v462
    %v1705 = vunpack.c.h.b16 %v462
    %v1706 = vunpack.c.l.b16 %v463
    %v1707 = vunpack.c.h.b16 %v463
    %v1708 = vunpack.c.l.b16 %v464
    %v1709 = vunpack.c.h.b16 %v464
    %v1710 = vunpack.c.l.b16 %v465
    %v1711 = vunpack.c.h.b16 %v465
    %v1712 = vunpack.c.l.b16 %v466
    %v1713 = vunpack.c.h.b16 %v466
    %v1714 = vunpack.c.l.b16 %v467
    %v1715 = vunpack.c.h.b16 %v467
    %v1716 = vunpack.c.l.b16 %v468
    %v1717 = vunpack.c.h.b16 %v468
    %v1718 = vunpack.c.l.b16 %v469
    %v1719 = vunpack.c.h.b16 %v469
    %v1720 = vunpack.c.l.b16 %v470
    %v1721 = vunpack.c.h.b16 %v470
    %v1722 = vunpack.c.l.b16 %v471
    %v1723 = vunpack.c.h.b16 %v471
    %v1724 = vunpack.c.l.b16 %v472
    %v1725 = vunpack.c.h.b16 %v472
    %v1726 = vunpack.c.l.b16 %v473
    %v1727 = vunpack.c.h.b16 %v473
    %v1728 = vunpack.c.l.b16 %v474
    %v1729 = vunpack.c.h.b16 %v474
    %v1730 = vunpack.c.l.b16 %v475
    %v1731 = vunpack.c.h.b16 %v475
    %v1732 = vunpack.c.l.b16 %v476
    %v1733 = vunpack.c.h.b16 %v476
    %v1734 = vunpack.c.l.b16 %v477
    %v1735 = vunpack.c.h.b16 %v477
    %v1736 = vunpack.c.l.b16 %v478
    %v1737 = vunpack.c.h.b16 %v478
    %v1738 = vunpack.c.l.b16 %v479
    %v1739 = vunpack.c.h.b16 %v479
    %v1740 = vunpack.c.l.b16 %v480
    %v1741 = vunpack.c.h.b16 %v480
    %v1742 = vunpack.c.l.b16 %v481
    %v1743 = vunpack.c.h.b16 %v481
    %v1744 = vunpack.c.l.b16 %v482
    %v1745 = vunpack.c.h.b16 %v482
    %v1746 = vunpack.c.l.b16 %v483
    %v1747 = vunpack.c.h.b16 %v483
    %v1748 = vunpack.c.l.b16 %v484
    %v1749 = vunpack.c.h.b16 %v484
    %v1750 = vunpack.c.l.b16 %v485
    %v1751 = vunpack.c.h.b16 %v485
    %v1752 = vunpack.c.l.b16 %v486
    %v1753 = vunpack.c.h.b16 %v486
    %v1754 = vunpack.c.l.b16 %v487
    %v1755 = vunpack.c.h.b16 %v487
    %v1756 = vunpack.c.l.b16 %v488
    %v1757 = vunpack.c.h.b16 %v488
    %v1758 = vunpack.c.l.b16 %v489
    %v1759 = vunpack.c.h.b16 %v489
    %v1760 = vunpack.c.l.b16 %v490
    %v1761 = vunpack.c.h.b16 %v490
    %v1762 = vunpack.c.l.b16 %v491
    %v1763 = vunpack.c.h.b16 %v491
    %v1764 = vunpack.c.l.b16 %v492
    %v1765 = vunpack.c.h.b16 %v492
    %v1766 = vunpack.c.l.b16 %v493
    %v1767 = vunpack.c.h.b16 %v493
    %v1768 = vunpack.c.l.b16 %v494
    %v1769 = vunpack.c.h.b16 %v494
    %v1770 = vunpack.c.l.b16 %v495
    %v1771 = vunpack.c.h.b16 %v495
    %v1772 = vunpack.c.l.b16 %v496
    %v1773 = vunpack.c.h.b16 %v496
    %v1774 = vunpack.c.l.b16 %v497
    %v1775 = vunpack.c.h.b16 %v497
    %v1776 = vunpack.c.l.b16 %v498
    %v1777 = vunpack.c.h.b16 %v498
    %v1778 = vunpack.c.l.b16 %v499
    %v1779 = vunpack.c.h.b16 %v499
    %v1780 = vunpack.c.l.b16 %v500
    %v1781 = vunpack.c.h.b16 %v500
    %v1782 = vunpack.c.l.b16 %v501
    %v1783 = vunpack.c.h.b16 %v501
    %v1784 = vunpack.c.l.b16 %v502
    %v1785 = vunpack.c.h.b16 %v502
    %v1786 = vunpack.c.l.b16 %v503
    %v1787 = vunpack.c.h.b16 %v503
    %v1788 = vunpack.c.l.b16 %v504
    %v1789 = vunpack.c.h.b16 %v504
    %v1790 = vunpack.c.l.b16 %v505
    %v1791 = vunpack.c.h.b16 %v505
    %v1792 = vunpack.c.l.b16 %v506
    %v1793 = vunpack.c.h.b16 %v506
    %v1794 = vunpack.c.l.b16 %v507
    %v1795 = vunpack.c.h.b16 %v507
    %v1796 = vunpack.c.l.b16 %v508
    %v1797 = vunpack.c.h.b16 %v508
    %v1798 = vunpack.c.l.b16 %v509
    %v1799 = vunpack.c.h.b16 %v509
    %v1800 = vunpack.c.l.b16 %v510
    %v1801 = vunpack.c.h.b16 %v510
    %v1802 = vunpack.c.l.b16 %v511
    %v1803 = vunpack.c.h.b16 %v511
    %v1804 = vunpack.c.l.b16 %v512
    %v1805 = vunpack.c.h.b16 %v512
    %v1806 = vunpack.c.l.b16 %v513
    %v1807 = vunpack.c.h.b16 %v513
    %v1808 = vunpack.c.l.b16 %v514
    %v1809 = vunpack.c.h.b16 %v514
    %v1810 = vunpack.c.l.b16 %v515
    %v1811 = vunpack.c.h.b16 %v515
    %v1812 = vunpack.c.l.b16 %v516
    %v1813 = vunpack.c.h.b16 %v516
    %v1814 = vunpack.c.l.b16 %v517
    %v1815 = vunpack.c.h.b16 %v517
    %v1816 = vunpack.c.l.b16 %v518
    %v1817 = vunpack.c.h.b16 %v518
    %v1818 = vunpack.c.l.b16 %v519
    %v1819 = vunpack.c.h.b16 %v519
    %v1820 = vunpack.c.l.b16 %v520
    %v1821 = vunpack.c.h.b16 %v520
    %v1822 = vunpack.c.l.b16 %v521
    %v1823 = vunpack.c.h.b16 %v521
    %v1824 = vunpack.c.l.b16 %v522
    %v1825 = vunpack.c.h.b16 %v522
    %v1826 = vunpack.c.l.b16 %v523
    %v1827 = vunpack.c.h.b16 %v523
    %v1828 = vunpack.c.l.b16 %v524
    %v1829 = vunpack.c.h.b16 %v524
    %v1830 = vunpack.c.l.b16 %v525
    %v1831 = vunpack.c.h.b16 %v525
    %v1832 = vunpack.c.l.b16 %v526
    %v1833 = vunpack.c.h.b16 %v526
    %v1834 = vunpack.c.l.b16 %v527
    %v1835 = vunpack.c.h.b16 %v527
    %v1836 = vunpack.c.l.b16 %v528
    %v1837 = vunpack.c.h.b16 %v528
    %v1838 = vunpack.c.l.b16 %v529
    %v1839 = vunpack.c.h.b16 %v529
    %v1840 = vunpack.c.l.b16 %v530
    %v1841 = vunpack.c.h.b16 %v530
    %v1842 = vunpack.c.l.b16 %v531
    %v1843 = vunpack.c.h.b16 %v531
    %v1844 = vunpack.c.l.b16 %v532
    %v1845 = vunpack.c.h.b16 %v532
    %v1846 = vunpack.c.l.b16 %v533
    %v1847 = vunpack.c.h.b16 %v533
    %v1848 = vunpack.c.l.b16 %v534
    %v1849 = vunpack.c.h.b16 %v534
    %v1850 = vunpack.c.l.b16 %v535
    %v1851 = vunpack.c.h.b16 %v535
    %v1852 = vunpack.c.l.b16 %v536
    %v1853 = vunpack.c.h.b16 %v536
    %v1854 = vunpack.c.l.b16 %v537
    %v1855 = vunpack.c.h.b16 %v537
    %v1856 = vunpack.c.l.b16 %v538
    %v1857 = vunpack.c.h.b16 %v538
    %v1858 = vunpack.c.l.b16 %v539
    %v1859 = vunpack.c.h.b16 %v539
    %v1860 = vunpack.c.l.b16 %v540
    %v1861 = vunpack.c.h.b16 %v540
    %v1862 = vunpack.c.l.b16 %v541
    %v1863 = vunpack.c.h.b16 %v541
    %v1864 = vunpack.c.l.b16 %v542
    %v1865 = vunpack.c.h.b16 %v542
    %v1866 = vunpack.c.l.b16 %v543
    %v1867 = vunpack.c.h.b16 %v543
    %v1868 = vunpack.c.l.b16 %v544
    %v1869 = vunpack.c.h.b16 %v544
    %v1870 = vunpack.c.l.b16 %v545
    %v1871 = vunpack.c.h.b16 %v545
    %v1872 = vunpack.c.l.b16 %v546
    %v1873 = vunpack.c.h.b16 %v546
    %v1874 = vunpack.c.l.b16 %v547
    %v1875 = vunpack.c.h.b16 %v547
    %v1876 = vunpack.c.l.b16 %v548
    %v1877 = vunpack.c.h.b16 %v548
    %v1878 = vunpack.c.l.b16 %v549
    %v1879 = vunpack.c.h.b16 %v549
    %v1880 = vunpack.c.l.b16 %v550
    %v1881 = vunpack.c.h.b16 %v550
    %v1882 = vunpack.c.l.b16 %v551
    %v1883 = vunpack.c.h.b16 %v551
    %v1884 = vunpack.c.l.b16 %v552
    %v1885 = vunpack.c.h.b16 %v552
    %v1886 = vunpack.c.l.b16 %v553
    %v1887 = vunpack.c.h.b16 %v553
    %v1888 = vunpack.c.l.b16 %v554
    %v1889 = vunpack.c.h.b16 %v554
    %v1890 = vunpack.c.l.b16 %v555
    %v1891 = vunpack.c.h.b16 %v555
    %v1892 = vunpack.c.l.b16 %v556
    %v1893 = vunpack.c.h.b16 %v556
    %v1894 = vunpack.c.l.b16 %v557
    %v1895 = vunpack.c.h.b16 %v557
    %v1896 = vunpack.c.l.b16 %v558
    %v1897 = vunpack.c.h.b16 %v558
    %v1898 = vunpack.c.l.b16 %v559
    %v1899 = vunpack.c.h.b16 %v559
    %v1900 = vunpack.c.l.b16 %v560
    %v1901 = vunpack.c.h.b16 %v560
    %v1902 = vunpack.c.l.b16 %v561
    %v1903 = vunpack.c.h.b16 %v561
    %v1904 = vunpack.c.l.b16 %v562
    %v1905 = vunpack.c.h.b16 %v562
    %v1906 = vunpack.c.l.b16 %v563
    %v1907 = vunpack.c.h.b16 %v563
    %v1908 = vunpack.c.l.b16 %v564
    %v1909 = vunpack.c.h.b16 %v564
    %v1910 = vunpack.c.l.b16 %v565
    %v1911 = vunpack.c.h.b16 %v565
    %v1912 = vunpack.c.l.b16 %v566
    %v1913 = vunpack.c.h.b16 %v566
    %v1914 = vunpack.c.l.b16 %v567
    %v1915 = vunpack.c.h.b16 %v567
    %v1916 = vunpack.c.l.b16 %v568
    %v1917 = vunpack.c.h.b16 %v568
    %v1918 = vpack.c.b16 %v1142, %v1134
    %v1919 = vpack.c.b16 %v1143, %v1135
    %v1920 = vpack.c.b16 %v1144, %v1136
    %v1921 = vpack.c.b16 %v1145, %v1137
    %v1922 = vpack.c.b16 %v1146, %v1138
    %v1923 = vpack.c.b16 %v1147, %v1139
    %v1924 = vpack.c.b16 %v1148, %v1140
    %v1925 = vpack.c.b16 %v1149, %v1141
    %v1926 = vpack.c.b16 %v1158, %v1150
    %v1927 = vpack.c.b16 %v1159, %v1151
    %v1928 = vpack.c.b16 %v1160, %v1152
    %v1929 = vpack.c.b16 %v1161, %v1153
    %v1930 = vpack.c.b16 %v1162, %v1154
    %v1931 = vpack.c.b16 %v1163, %v1155
    %v1932 = vpack.c.b16 %v1164, %v1156
    %v1933 = vpack.c.b16 %v1165, %v1157
    %v1934 = vpack.c.b16 %v1174, %v1166
    %v1935 = vpack.c.b16 %v1175, %v1167
    %v1936 = vpack.c.b16 %v1176, %v1168
    %v1937 = vpack.c.b16 %v1177, %v1169
    %v1938 = vpack.c.b16 %v1178, %v1170
    %v1939 = vpack.c.b16 %v1179, %v1171
    %v1940 = vpack.c.b16 %v1180, %v1172
    %v1941 = vpack.c.b16 %v1181, %v1173
    %v1942 = vpack.c.b16 %v1190, %v1182
    %v1943 = vpack.c.b16 %v1191, %v1183
    %v1944 = vpack.c.b16 %v1192, %v1184
    %v1945 = vpack.c.b16 %v1193, %v1185
    %v1946 = vpack.c.b16 %v1194, %v1186
    %v1947 = vpack.c.b16 %v1195, %v1187
    %v1948 = vpack.c.b16 %v1196, %v1188
    %v1949 = vpack.c.b16 %v1197, %v1189
    %v1950 = vpack.c.b16 %v1206, %v1198
    %v1951 = vpack.c.b16 %v1207, %v1199
    %v1952 = vpack.c.b16 %v1208, %v1200
    %v1953 = vpack.c.b16 %v1209, %v1201
    %v1954 = vpack.c.b16 %v1210, %v1202
    %v1955 = vpack.c.b16 %v1211, %v1203
    %v1956 = vpack.c.b16 %v1212, %v1204
    %v1957 = vpack.c.b16 %v1213, %v1205
    %v1958 = vpack.c.b16 %v1222, %v1214
    %v1959 = vpack.c.b16 %v1223, %v1215
    %v1960 = vpack.c.b16 %v1224, %v1216
    %v1961 = vpack.c.b16 %v1225, %v1217
    %v1962 = vpack.c.b16 %v1226, %v1218
    %v1963 = vpack.c.b16 %v1227, %v1219
    %v1964 = vpack.c.b16 %v1228, %v1220
    %v1965 = vpack.c.b16 %v1229, %v1221
    %v1966 = vpack.c.b16 %v1238, %v1230
    %v1967 = vpack.c.b16 %v1239, %v1231
    %v1968 = vpack.c.b16 %v1240, %v1232
    %v1969 = vpack.c.b16 %v1241, %v1233
    %v1970 = vpack.c.b16 %v1242, %v1234
    %v1971 = vpack.c.b16 %v1243, %v1235
    %v1972 = vpack.c.b16 %v1244, %v1236
    %v1973 = vpack.c.b16 %v1245, %v1237
    %v1974 = vpack.c.b16 %v1254, %v1246
    %v1975 = vpack.c.b16 %v1255, %v1247
    %v1976 = vpack.c.b16 %v1256, %v1248
    %v1977 = vpack.c.b16 %v1257, %v1249
    %v1978 = vpack.c.b16 %v1258, %v1250
    %v1979 = vpack.c.b16 %v1259, %v1251
    %v1980 = vpack.c.b16 %v1260, %v1252
    %v1981 = vpack.c.b16 %v1261, %v1253
    %v1982 = vpack.c.b16 %v1270, %v1262
    %v1983 = vpack.c.b16 %v1271, %v1263
    %v1984 = vpack.c.b16 %v1272, %v1264
    %v1985 = vpack.c.b16 %v1273, %v1265
    %v1986 = vpack.c.b16 %v1274, %v1266
    %v1987 = vpack.c.b16 %v1275, %v1267
    %v1988 = vpack.c.b16 %v1276, %v1268
    %v1989 = vpack.c.b16 %v1277, %v1269
    %v1990 = vpack.c.b16 %v1286, %v1278
    %v1991 = vpack.c.b16 %v1287, %v1279
    %v1992 = vpack.c.b16 %v1288, %v1280
    %v1993 = vpack.c.b16 %v1289, %v1281
    %v1994 = vpack.c.b16 %v1290, %v1282
    %v1995 = vpack.c.b16 %v1291, %v1283
    %v1996 = vpack.c.b16 %v1292, %v1284
    %v1997 = vpack.c.b16 %v1293, %v1285
    %v1998 = vpack.c.b16 %v1302, %v1294
    %v1999 = vpack.c.b16 %v1303, %v1295
    %v2000 = vpack.c.b16 %v1304, %v1296
    %v2001 = vpack.c.b16 %v1305, %v1297
    %v2002 = vpack.c.b16 %v1306, %v1298
    %v2003 = vpack.c.b16 %v1307, %v1299
    %v2004 = vpack.c.b16 %v1308, %v1300
    %v2005 = vpack.c.b16 %v1309, %v1301
    %v2006 = vpack.c.b16 %v1318, %v1310
    %v2007 = vpack.c.b16 %v1319, %v1311
    %v2008 = vpack.c.b16 %v1320, %v1312
    %v2009 = vpack.c.b16 %v1321, %v1313
    %v2010 = vpack.c.b16 %v1322, %v1314
    %v2011 = vpack.c.b16 %v1323, %v1315
    %v2012 = vpack.c.b16 %v1324, %v1316
    %v2013 = vpack.c.b16 %v1325, %v1317
    %v2014 = vpack.c.b16 %v1334, %v1326
    %v2015 = vpack.c.b16 %v1335, %v1327
    %v2016 = vpack.c.b16 %v1336, %v1328
    %v2017 = vpack.c.b16 %v1337, %v1329
    %v2018 = vpack.c.b16 %v1338, %v1330
    %v2019 = vpack.c.b16 %v1339, %v1331
    %v2020 = vpack.c.b16 %v1340, %v1332
    %v2021 = vpack.c.b16 %v1341, %v1333
    %v2022 = vpack.c.b16 %v1350, %v1342
    %v2023 = vpack.c.b16 %v1351, %v1343
    %v2024 = vpack.c.b16 %v1352, %v1344
    %v2025 = vpack.c.b16 %v1353, %v1345
    %v2026 = vpack.c.b16 %v1354, %v1346
    %v2027 = vpack.c.b16 %v1355, %v1347
    %v2028 = vpack.c.b16 %v1356, %v1348
    %v2029 = vpack.c.b16 %v1357, %v1349
    %v2030 = vpack.c.b16 %v1366, %v1358
    %v2031 = vpack.c.b16 %v1367, %v1359
    %v2032 = vpack.c.b16 %v1368, %v1360
    %v2033 = vpack.c.b16 %v1369, %v1361
    %v2034 = vpack.c.b16 %v1370, %v1362
    %v2035 = vpack.c.b16 %v1371, %v1363
    %v2036 = vpack.c.b16 %v1372, %v1364
    %v2037 = vpack.c.b16 %v1373, %v1365
    %v2038 = vpack.c.b16 %v1382, %v1374
    %v2039 = vpack.c.b16 %v1383, %v1375
    %v2040 = vpack.c.b16 %v1384, %v1376
    %v2041 = vpack.c.b16 %v1385, %v1377
    %v2042 = vpack.c.b16 %v1386, %v1378
    %v2043 = vpack.c.b16 %v1387, %v1379
    %v2044 = vpack.c.b16 %v1388, %v1380
    %v2045 = vpack.c.b16 %v1389, %v1381
    %v2046 = vpack.c.b16 %v1398, %v1390
    %v2047 = vpack.c.b16 %v1399, %v1391
    %v2048 = vpack.c.b16 %v1400, %v1392
    %v2049 = vpack.c.b16 %v1401, %v1393
    %v2050 = vpack.c.b16 %v1402, %v1394
    %v2051 = vpack.c.b16 %v1403, %v1395
    %v2052 = vpack.c.b16 %v1404, %v1396
    %v2053 = vpack.c.b16 %v1405, %v1397
    %v2054 = vpack.c.b16 %v1414, %v1406
    %v2055 = vpack.c.b16 %v1415, %v1407
    %v2056 = vpack.c.b16 %v1416, %v1408
    %v2057 = vpack.c.b16 %v1417, %v1409
    %v2058 = vpack.c.b16 %v1418, %v1410
    %v2059 = vpack.c.b16 %v1419, %v1411
    %v2060 = vpack.c.b16 %v1420, %v1412
    %v2061 = vpack.c.b16 %v1421, %v1413
    %v2062 = vpack.c.b16 %v1430, %v1422
    %v2063 = vpack.c.b16 %v1431, %v1423
    %v2064 = vpack.c.b16 %v1432, %v1424
    %v2065 = vpack.c.b16 %v1433, %v1425
    %v2066 = vpack.c.b16 %v1434, %v1426
    %v2067 = vpack.c.b16 %v1435, %v1427
    %v2068 = vpack.c.b16 %v1436, %v1428
    %v2069 = vpack.c.b16 %v1437, %v1429
    %v2070 = vpack.c.b16 %v1446, %v1438
    %v2071 = vpack.c.b16 %v1447, %v1439
    %v2072 = vpack.c.b16 %v1448, %v1440
    %v2073 = vpack.c.b16 %v1449, %v1441
    %v2074 = vpack.c.b16 %v1450, %v1442
    %v2075 = vpack.c.b16 %v1451, %v1443
    %v2076 = vpack.c.b16 %v1452, %v1444
    %v2077 = vpack.c.b16 %v1453, %v1445
    %v2078 = vpack.c.b16 %v1462, %v1454
    %v2079 = vpack.c.b16 %v1463, %v1455
    %v2080 = vpack.c.b16 %v1464, %v1456
    %v2081 = vpack.c.b16 %v1465, %v1457
    %v2082 = vpack.c.b16 %v1466, %v1458
    %v2083 = vpack.c.b16 %v1467, %v1459
    %v2084 = vpack.c.b16 %v1468, %v1460
    %v2085 = vpack.c.b16 %v1469, %v1461
    %v2086 = vpack.c.b16 %v1478, %v1470
    %v2087 = vpack.c.b16 %v1479, %v1471
    %v2088 = vpack.c.b16 %v1480, %v1472
    %v2089 = vpack.c.b16 %v1481, %v1473
    %v2090 = vpack.c.b16 %v1482, %v1474
    %v2091 = vpack.c.b16 %v1483, %v1475
    %v2092 = vpack.c.b16 %v1484, %v1476
    %v2093 = vpack.c.b16 %v1485, %v1477
    %v2094 = vpack.c.b16 %v1494, %v1486
    %v2095 = vpack.c.b16 %v1495, %v1487
    %v2096 = vpack.c.b16 %v1496, %v1488
    %v2097 = vpack.c.b16 %v1497, %v1489
    %v2098 = vpack.c.b16 %v1498, %v1490
    %v2099 = vpack.c.b16 %v1499, %v1491
    %v2100 = vpack.c.b16 %v1500, %v1492
    %v2101 = vpack.c.b16 %v1501, %v1493
    %v2102 = vpack.c.b16 %v1510, %v1502
    %v2103 = vpack.c.b16 %v1511, %v1503
    %v2104 = vpack.c.b16 %v1512, %v1504
    %v2105 = vpack.c.b16 %v1513, %v1505
    %v2106 = vpack.c.b16 %v1514, %v1506
    %v2107 = vpack.c.b16 %v1515, %v1507
    %v2108 = vpack.c.b16 %v1516, %v1508
    %v2109 = vpack.c.b16 %v1517, %v1509
    %v2110 = vpack.c.b16 %v1526, %v1518
    %v2111 = vpack.c.b16 %v1527, %v1519
    %v2112 = vpack.c.b16 %v1528, %v1520
    %v2113 = vpack.c.b16 %v1529, %v1521
    %v2114 = vpack.c.b16 %v1530, %v1522
    %v2115 = vpack.c.b16 %v1531, %v1523
    %v2116 = vpack.c.b16 %v1532, %v1524
    %v2117 = vpack.c.b16 %v1533, %v1525
    %v2118 = vpack.c.b16 %v1542, %v1534
    %v2119 = vpack.c.b16 %v1543, %v1535
    %v2120 = vpack.c.b16 %v1544, %v1536
    %v2121 = vpack.c.b16 %v1545, %v1537
    %v2122 = vpack.c.b16 %v1546, %v1538
    %v2123 = vpack.c.b16 %v1547, %v1539
    %v2124 = vpack.c.b16 %v1548, %v1540
    %v2125 = vpack.c.b16 %v1549, %v1541
    %v2126 = vpack.c.b16 %v1558, %v1550
    %v2127 = vpack.c.b16 %v1559, %v1551
    %v2128 = vpack.c.b16 %v1560, %v1552
    %v2129 = vpack.c.b16 %v1561, %v1553
    %v2130 = vpack.c.b16 %v1562, %v1554
    %v2131 = vpack.c.b16 %v1563, %v1555
    %v2132 = vpack.c.b16 %v1564, %v1556
    %v2133 = vpack.c.b16 %v1565, %v1557
    %v2134 = vpack.c.b16 %v1574, %v1566
    %v2135 = vpack.c.b16 %v1575, %v1567
    %v2136 = vpack.c.b16 %v1576, %v1568
    %v2137 = vpack.c.b16 %v1577, %v1569
    %v2138 = vpack.c.b16 %v1578, %v1570
    %v2139 = vpack.c.b16 %v1579, %v1571
    %v2140 = vpack.c.b16 %v1580, %v1572
    %v2141 = vpack.c.b16 %v1581, %v1573
    %v2142 = vpack.c.b16 %v1590, %v1582
    %v2143 = vpack.c.b16 %v1591, %v1583
    %v2144 = vpack.c.b16 %v1592, %v1584
    %v2145 = vpack.c.b16 %v1593, %v1585
    %v2146 = vpack.c.b16 %v1594, %v1586
    %v2147 = vpack.c.b16 %v1595, %v1587
    %v2148 = vpack.c.b16 %v1596, %v1588
    %v2149 = vpack.c.b16 %v1597, %v1589
    %v2150 = vpack.c.b16 %v1606, %v1598
    %v2151 = vpack.c.b16 %v1607, %v1599
    %v2152 = vpack.c.b16 %v1608, %v1600
    %v2153 = vpack.c.b16 %v1609, %v1601
    %v2154 = vpack.c.b16 %v1610, %v1602
    %v2155 = vpack.c.b16 %v1611, %v1603
    %v2156 = vpack.c.b16 %v1612, %v1604
    %v2157 = vpack.c.b16 %v1613, %v1605
    %v2158 = vpack.c.b16 %v1622, %v1614
    %v2159 = vpack.c.b16 %v1623, %v1615
    %v2160 = vpack.c.b16 %v1624, %v1616
    %v2161 = vpack.c.b16 %v1625, %v1617
    %v2162 = vpack.c.b16 %v1626, %v1618
    %v2163 = vpack.c.b16 %v1627, %v1619
    %v2164 = vpack.c.b16 %v1628, %v1620
    %v2165 = vpack.c.b16 %v1629, %v1621
    %v2166 = vpack.c.b16 %v1638, %v1630
    %v2167 = vpack.c.b16 %v1639, %v1631
    %v2168 = vpack.c.b16 %v1640, %v1632
    %v2169 = vpack.c.b16 %v1641, %v1633
    %v2170 = vpack.c.b16 %v1642, %v1634
    %v2171 = vpack.c.b16 %v1643, %v1635
    %v2172 = vpack.c.b16 %v1644, %v1636
    %v2173 = vpack.c.b16 %v1645, %v1637
    %v2174 = vpack.c.b16 %v1654, %v1646
    %v2175 = vpack.c.b16 %v1655, %v1647
    %v2176 = vpack.c.b16 %v1656, %v1648
    %v2177 = vpack.c.b16 %v1657, %v1649
    %v2178 = vpack.c.b16 %v1658, %v1650
    %v2179 = vpack.c.b16 %v1659, %v1651
    %v2180 = vpack.c.b16 %v1660, %v1652
    %v2181 = vpack.c.b16 %v1661, %v1653
    %v2182 = vpack.c.b16 %v1670, %v1662
    %v2183 = vpack.c.b16 %v1671, %v1663
    %v2184 = vpack.c.b16 %v1672, %v1664
    %v2185 = vpack.c.b16 %v1673, %v1665
    %v2186 = vpack.c.b16 %v1674, %v1666
    %v2187 = vpack.c.b16 %v1675, %v1667
    %v2188 = vpack.c.b16 %v1676, %v1668
    %v2189 = vpack.c.b16 %v1677, %v1669
    %v2190 = vpack.c.b16 %v1686, %v1678
    %v2191 = vpack.c.b16 %v1687, %v1679
    %v2192 = vpack.c.b16 %v1688, %v1680
    %v2193 = vpack.c.b16 %v1689, %v1681
    %v2194 = vpack.c.b16 %v1690, %v1682
    %v2195 = vpack.c.b16 %v1691, %v1683
    %v2196 = vpack.c.b16 %v1692, %v1684
    %v2197 = vpack.c.b16 %v1693, %v1685
    %v2198 = vpack.c.b16 %v1702, %v1694
    %v2199 = vpack.c.b16 %v1703, %v1695
    %v2200 = vpack.c.b16 %v1704, %v1696
    %v2201 = vpack.c.b16 %v1705, %v1697
    %v2202 = vpack.c.b16 %v1706, %v1698
    %v2203 = vpack.c.b16 %v1707, %v1699
    %v2204 = vpack.c.b16 %v1708, %v1700
    %v2205 = vpack.c.b16 %v1709, %v1701
    %v2206 = vpack.c.b16 %v1718, %v1710
    %v2207 = vpack.c.b16 %v1719, %v1711
    %v2208 = vpack.c.b16 %v1720, %v1712
    %v2209 = vpack.c.b16 %v1721, %v1713
    %v2210 = vpack.c.b16 %v1722, %v1714
    %v2211 = vpack.c.b16 %v1723, %v1715
    %v2212 = vpack.c.b16 %v1724, %v1716
    %v2213 = vpack.c.b16 %v1725, %v1717
    %v2214 = vpack.c.b16 %v1734, %v1726
    %v2215 = vpack.c.b16 %v1735, %v1727
    %v2216 = vpack.c.b16 %v1736, %v1728
    %v2217 = vpack.c.b16 %v1737, %v1729
    %v2218 = vpack.c.b16 %v1738, %v1730
    %v2219 = vpack.c.b16 %v1739, %v1731
    %v2220 = vpack.c.b16 %v1740, %v1732
    %v2221 = vpack.c.b16 %v1741, %v1733
    %v2222 = vpack.c.b16 %v1750, %v1742
    %v2223 = vpack.c.b16 %v1751, %v1743
    %v2224 = vpack.c.b16 %v1752, %v1744
    %v2225 = vpack.c.b16 %v1753, %v1745
    %v2226 = vpack.c.b16 %v1754, %v1746
    %v2227 = vpack.c.b16 %v1755, %v1747
    %v2228 = vpack.c.b16 %v1756, %v1748
    %v2229 = vpack.c.b16 %v1757, %v1749
    %v2230 = vpack.c.b16 %v1766, %v1758
    %v2231 = vpack.c.b16 %v1767, %v1759
    %v2232 = vpack.c.b16 %v1768, %v1760
    %v2233 = vpack.c.b16 %v1769, %v1761
    %v2234 = vpack.c.b16 %v1770, %v1762
    %v2235 = vpack.c.b16 %v1771, %v1763
    %v2236 = vpack.c.b16 %v1772, %v1764
    %v2237 = vpack.c.b16 %v1773, %v1765
    %v2238 = vpack.c.b16 %v1782, %v1774
    %v2239 = vpack.c.b16 %v1783, %v1775
    %v2240 = vpack.c.b16 %v1784, %v1776
    %v2241 = vpack.c.b16 %v1785, %v1777
    %v2242 = vpack.c.b16 %v1786, %v1778
    %v2243 = vpack.c.b16 %v1787, %v1779
    %v2244 = vpack.c.b16 %v1788, %v1780
    %v2245 = vpack.c.b16 %v1789, %v1781
    %v2246 = vpack.c.b16 %v1798, %v1790
    %v2247 = vpack.c.b16 %v1799, %v1791
    %v2248 = vpack.c.b16 %v1800, %v1792
    %v2249 = vpack.c.b16 %v1801, %v1793
    %v2250 = vpack.c.b16 %v1802, %v1794
    %v2251 = vpack.c.b16 %v1803, %v1795
    %v2252 = vpack.c.b16 %v1804, %v1796
    %v2253 = vpack.c.b16 %v1805, %v1797
    %v2254 = vpack.c.b16 %v1814, %v1806
    %v2255 = vpack.c.b16 %v1815, %v1807
    %v2256 = vpack.c.b16 %v1816, %v1808
    %v2257 = vpack.c.b16 %v1817, %v1809
    %v2258 = vpack.c.b16 %v1818, %v1810
    %v2259 = vpack.c.b16 %v1819, %v1811
    %v2260 = vpack.c.b16 %v1820, %v1812
    %v2261 = vpack.c.b16 %v1821, %v1813
    %v2262 = vpack.c.b16 %v1830, %v1822
    %v2263 = vpack.c.b16 %v1831, %v1823
    %v2264 = vpack.c.b16 %v1832, %v1824
    %v2265 = vpack.c.b16 %v1833, %v1825
    %v2266 = vpack.c.b16 %v1834, %v1826
    %v2267 = vpack.c.b16 %v1835, %v1827
    %v2268 = vpack.c.b16 %v1836, %v1828
    %v2269 = vpack.c.b16 %v1837, %v1829
    %v2270 = vpack.c.b16 %v1846, %v1838
    %v2271 = vpack.c.b16 %v1847, %v1839
    %v2272 = vpack.c.b16 %v1848, %v1840
    %v2273 = vpack.c.b16 %v1849, %v1841
    %v2274 = vpack.c.b16 %v1850, %v1842
    %v2275 = vpack.c.b16 %v1851, %v1843
    %v2276 = vpack.c.b16 %v1852, %v1844
    %v2277 = vpack.c.b16 %v1853, %v1845
    %v2278 = vpack.c.b16 %v1862, %v1854
    %v2279 = vpack.c.b16 %v1863, %v1855
    %v2280 = vpack.c.b16 %v1864, %v1856
    %v2281 = vpack.c.b16 %v1865, %v1857
    %v2282 = vpack.c.b16 %v1866, %v1858
    %v2283 = vpack.c.b16 %v1867, %v1859
    %v2284 = vpack.c.b16 %v1868, %v1860
    %v2285 = vpack.c.b16 %v1869, %v1861
    %v2286 = vpack.c.b16 %v1878, %v1870
    %v2287 = vpack.c.b16 %v1879, %v1871
    %v2288 = vpack.c.b16 %v1880, %v1872
    %v2289 = vpack.c.b16 %v1881, %v1873
    %v2290 = vpack.c.b16 %v1882, %v1874
    %v2291 = vpack.c.b16 %v1883, %v1875
    %v2292 = vpack.c.b16 %v1884, %v1876
    %v2293 = vpack.c.b16 %v1885, %v1877
    %v2294 = vpack.c.b16 %v1894, %v1886
    %v2295 = vpack.c.b16 %v1895, %v1887
    %v2296 = vpack.c.b16 %v1896, %v1888
    %v2297 = vpack.c.b16 %v1897, %v1889
    %v2298 = vpack.c.b16 %v1898, %v1890
    %v2299 = vpack.c.b16 %v1899, %v1891
    %v2300 = vpack.c.b16 %v1900, %v1892
    %v2301 = vpack.c.b16 %v1901, %v1893
    %v2302 = vpack.c.b16 %v1910, %v1902
    %v2303 = vpack.c.b16 %v1911, %v1903
    %v2304 = vpack.c.b16 %v1912, %v1904
    %v2305 = vpack.c.b16 %v1913, %v1905
    %v2306 = vpack.c.b16 %v1914, %v1906
    %v2307 = vpack.c.b16 %v1915, %v1907
    %v2308 = vpack.c.b16 %v1916, %v1908
    %v2309 = vpack.c.b16 %v1917, %v1909
    %vm2702 = vcmask 130048
    %v2704 = vsel %vm2702, %v174, 0
    %2706 = vmatpush.bf16.msra.mxu0 %v1974
    %2707 = vmatpush.bf16.msra.mxu0 %v1966
    %2708 = vmatpush.bf16.msra.mxu0 %v1958
    %2709 = vmatpush.bf16.msra.mxu0 %v1950
    %2710 = vmatpush.bf16.msra.mxu0 %v1942
    %2711 = vmatpush.bf16.msra.mxu0 %v1934
    %2712 = vmatpush.bf16.msra.mxu0 %v1926
    %2713 = vmatpush.bf16.msra.mxu0 %v1918
    %2714 = vmatmul.bf16.gmra.mxu0 %v168
    %v2715 = vpop.f32.mrf.mxu0
    %v2716 = vadd.f32 %v648, %v2715
    %v2717 = vpop.f32.mrf.mxu0
    %2718 = vdwg.mxu0
    %2719 = vmatpush.bf16.msra.mxu0 %v2038
    %2720 = vmatpush.bf16.msra.mxu0 %v2030
    %2721 = vmatpush.bf16.msra.mxu0 %v2022
    %2722 = vmatpush.bf16.msra.mxu0 %v2014
    %2723 = vmatpush.bf16.msra.mxu0 %v2006
    %2724 = vmatpush.bf16.msra.mxu0 %v1998
    %2725 = vmatpush.bf16.msra.mxu0 %v1990
    %2726 = vmatpush.bf16.msra.mxu0 %v1982
    %2727 = vmatmul.bf16.gmra.mxu0 %v169
    %v2728 = vpop.f32.mrf.mxu0
    %v2729 = vadd.f32 %v2716, %v2728
    %v2730 = vpop.f32.mrf.mxu0
    %2731 = vdwg.mxu0
    %2732 = vmatpush.bf16.msra.mxu0 %v2102
    %2733 = vmatpush.bf16.msra.mxu0 %v2094
    %2734 = vmatpush.bf16.msra.mxu0 %v2086
    %2735 = vmatpush.bf16.msra.mxu0 %v2078
    %2736 = vmatpush.bf16.msra.mxu0 %v2070
    %2737 = vmatpush.bf16.msra.mxu0 %v2062
    %2738 = vmatpush.bf16.msra.mxu0 %v2054
    %2739 = vmatpush.bf16.msra.mxu0 %v2046
    %2740 = vmatmul.bf16.gmra.mxu0 %v170
    %v2741 = vpop.f32.mrf.mxu0
    %v2742 = vadd.f32 %v2729, %v2741
    %v2743 = vpop.f32.mrf.mxu0
    %2744 = vdwg.mxu0
    %2745 = vmatpush.bf16.msra.mxu0 %v2166
    %2746 = vmatpush.bf16.msra.mxu0 %v2158
    %2747 = vmatpush.bf16.msra.mxu0 %v2150
    %2748 = vmatpush.bf16.msra.mxu0 %v2142
    %2749 = vmatpush.bf16.msra.mxu0 %v2134
    %2750 = vmatpush.bf16.msra.mxu0 %v2126
    %2751 = vmatpush.bf16.msra.mxu0 %v2118
    %2752 = vmatpush.bf16.msra.mxu0 %v2110
    %2753 = vmatmul.bf16.gmra.mxu0 %v171
    %v2754 = vpop.f32.mrf.mxu0
    %v2755 = vadd.f32 %v2742, %v2754
    %v2756 = vpop.f32.mrf.mxu0
    %2757 = vdwg.mxu0
    %2758 = vmatpush.bf16.msra.mxu0 %v2230
    %2759 = vmatpush.bf16.msra.mxu0 %v2222
    %2760 = vmatpush.bf16.msra.mxu0 %v2214
    %2761 = vmatpush.bf16.msra.mxu0 %v2206
    %2762 = vmatpush.bf16.msra.mxu0 %v2198
    %2763 = vmatpush.bf16.msra.mxu0 %v2190
    %2764 = vmatpush.bf16.msra.mxu0 %v2182
    %2765 = vmatpush.bf16.msra.mxu0 %v2174
    %2766 = vmatmul.bf16.gmra.mxu0 %v172
    %v2767 = vpop.f32.mrf.mxu0
    %v2768 = vadd.f32 %v2755, %v2767
    %v2769 = vpop.f32.mrf.mxu0
    %2770 = vdwg.mxu0
    %2771 = vmatpush.bf16.msra.mxu0 %v2294
    %2772 = vmatpush.bf16.msra.mxu0 %v2286
    %2773 = vmatpush.bf16.msra.mxu0 %v2278
    %2774 = vmatpush.bf16.msra.mxu0 %v2270
    %2775 = vmatpush.bf16.msra.mxu0 %v2262
    %2776 = vmatpush.bf16.msra.mxu0 %v2254
    %2777 = vmatpush.bf16.msra.mxu0 %v2246
    %2778 = vmatpush.bf16.msra.mxu0 %v2238
    %2779 = vmatmul.bf16.gmra.mxu0 %v173
    %v2780 = vpop.f32.mrf.mxu0
    %v2781 = vadd.f32 %v2768, %v2780
    %v2782 = vpop.f32.mrf.mxu0
    %2783 = vdwg.mxu0
    %2784 = vmatpush.bf16.msra.mxu0 0
    %2785 = vmatpush.bf16.msra.mxu0 0
    %2786 = vmatpush.bf16.msra.mxu0 0
    %2787 = vmatpush.bf16.msra.mxu0 0
    %2788 = vmatpush.bf16.msra.mxu0 0
    %2789 = vmatpush.bf16.msra.mxu0 0
    %2790 = vmatpush.bf16.msra.mxu0 0
    %2791 = vmatpush.bf16.msra.mxu0 %v2302
    %2792 = vmatmul.bf16.gmra.mxu0 %v2704
    %v2793 = vpop.f32.mrf.mxu0
    %v2794 = vadd.f32 %v2781, %v2793
    %v2795 = vpop.f32.mrf.mxu0
    %2796 = vdwg.mxu0
    %2797 = vmatpush.bf16.msra.mxu0 %v1975
    %2798 = vmatpush.bf16.msra.mxu0 %v1967
    %2799 = vmatpush.bf16.msra.mxu0 %v1959
    %2800 = vmatpush.bf16.msra.mxu0 %v1951
    %2801 = vmatpush.bf16.msra.mxu0 %v1943
    %2802 = vmatpush.bf16.msra.mxu0 %v1935
    %2803 = vmatpush.bf16.msra.mxu0 %v1927
    %2804 = vmatpush.bf16.msra.mxu0 %v1919
    %2805 = vmatmul.bf16.gmra.mxu0 %v168
    %v2806 = vpop.f32.mrf.mxu0
    %v2807 = vadd.f32 %v661, %v2806
    %v2808 = vpop.f32.mrf.mxu0
    %2809 = vdwg.mxu0
    %2810 = vmatpush.bf16.msra.mxu0 %v2039
    %2811 = vmatpush.bf16.msra.mxu0 %v2031
    %2812 = vmatpush.bf16.msra.mxu0 %v2023
    %2813 = vmatpush.bf16.msra.mxu0 %v2015
    %2814 = vmatpush.bf16.msra.mxu0 %v2007
    %2815 = vmatpush.bf16.msra.mxu0 %v1999
    %2816 = vmatpush.bf16.msra.mxu0 %v1991
    %2817 = vmatpush.bf16.msra.mxu0 %v1983
    %2818 = vmatmul.bf16.gmra.mxu0 %v169
    %v2819 = vpop.f32.mrf.mxu0
    %v2820 = vadd.f32 %v2807, %v2819
    %v2821 = vpop.f32.mrf.mxu0
    %2822 = vdwg.mxu0
    %2823 = vmatpush.bf16.msra.mxu0 %v2103
    %2824 = vmatpush.bf16.msra.mxu0 %v2095
    %2825 = vmatpush.bf16.msra.mxu0 %v2087
    %2826 = vmatpush.bf16.msra.mxu0 %v2079
    %2827 = vmatpush.bf16.msra.mxu0 %v2071
    %2828 = vmatpush.bf16.msra.mxu0 %v2063
    %2829 = vmatpush.bf16.msra.mxu0 %v2055
    %2830 = vmatpush.bf16.msra.mxu0 %v2047
    %2831 = vmatmul.bf16.gmra.mxu0 %v170
    %v2832 = vpop.f32.mrf.mxu0
    %v2833 = vadd.f32 %v2820, %v2832
    %v2834 = vpop.f32.mrf.mxu0
    %2835 = vdwg.mxu0
    %2836 = vmatpush.bf16.msra.mxu0 %v2167
    %2837 = vmatpush.bf16.msra.mxu0 %v2159
    %2838 = vmatpush.bf16.msra.mxu0 %v2151
    %2839 = vmatpush.bf16.msra.mxu0 %v2143
    %2840 = vmatpush.bf16.msra.mxu0 %v2135
    %2841 = vmatpush.bf16.msra.mxu0 %v2127
    %2842 = vmatpush.bf16.msra.mxu0 %v2119
    %2843 = vmatpush.bf16.msra.mxu0 %v2111
    %2844 = vmatmul.bf16.gmra.mxu0 %v171
    %v2845 = vpop.f32.mrf.mxu0
    %v2846 = vadd.f32 %v2833, %v2845
    %v2847 = vpop.f32.mrf.mxu0
    %2848 = vdwg.mxu0
    %2849 = vmatpush.bf16.msra.mxu0 %v2231
    %2850 = vmatpush.bf16.msra.mxu0 %v2223
    %2851 = vmatpush.bf16.msra.mxu0 %v2215
    %2852 = vmatpush.bf16.msra.mxu0 %v2207
    %2853 = vmatpush.bf16.msra.mxu0 %v2199
    %2854 = vmatpush.bf16.msra.mxu0 %v2191
    %2855 = vmatpush.bf16.msra.mxu0 %v2183
    %2856 = vmatpush.bf16.msra.mxu0 %v2175
    %2857 = vmatmul.bf16.gmra.mxu0 %v172
    %v2858 = vpop.f32.mrf.mxu0
    %v2859 = vadd.f32 %v2846, %v2858
    %v2860 = vpop.f32.mrf.mxu0
    %2861 = vdwg.mxu0
    %2862 = vmatpush.bf16.msra.mxu0 %v2295
    %2863 = vmatpush.bf16.msra.mxu0 %v2287
    %2864 = vmatpush.bf16.msra.mxu0 %v2279
    %2865 = vmatpush.bf16.msra.mxu0 %v2271
    %2866 = vmatpush.bf16.msra.mxu0 %v2263
    %2867 = vmatpush.bf16.msra.mxu0 %v2255
    %2868 = vmatpush.bf16.msra.mxu0 %v2247
    %2869 = vmatpush.bf16.msra.mxu0 %v2239
    %2870 = vmatmul.bf16.gmra.mxu0 %v173
    %v2871 = vpop.f32.mrf.mxu0
    %v2872 = vadd.f32 %v2859, %v2871
    %v2873 = vpop.f32.mrf.mxu0
    %2874 = vdwg.mxu0
    %2875 = vmatpush.bf16.msra.mxu0 0
    %2876 = vmatpush.bf16.msra.mxu0 0
    %2877 = vmatpush.bf16.msra.mxu0 0
    %2878 = vmatpush.bf16.msra.mxu0 0
    %2879 = vmatpush.bf16.msra.mxu0 0
    %2880 = vmatpush.bf16.msra.mxu0 0
    %2881 = vmatpush.bf16.msra.mxu0 0
    %2882 = vmatpush.bf16.msra.mxu0 %v2303
    %2883 = vmatmul.bf16.gmra.mxu0 %v2704
    %v2884 = vpop.f32.mrf.mxu0
    %v2885 = vadd.f32 %v2872, %v2884
    %v2886 = vpop.f32.mrf.mxu0
    %2887 = vdwg.mxu0
    %2888 = vmatpush.bf16.msra.mxu0 %v1976
    %2889 = vmatpush.bf16.msra.mxu0 %v1968
    %2890 = vmatpush.bf16.msra.mxu0 %v1960
    %2891 = vmatpush.bf16.msra.mxu0 %v1952
    %2892 = vmatpush.bf16.msra.mxu0 %v1944
    %2893 = vmatpush.bf16.msra.mxu0 %v1936
    %2894 = vmatpush.bf16.msra.mxu0 %v1928
    %2895 = vmatpush.bf16.msra.mxu0 %v1920
    %2896 = vmatmul.bf16.gmra.mxu0 %v168
    %v2897 = vpop.f32.mrf.mxu0
    %v2898 = vadd.f32 %v674, %v2897
    %v2899 = vpop.f32.mrf.mxu0
    %2900 = vdwg.mxu0
    %2901 = vmatpush.bf16.msra.mxu0 %v2040
    %2902 = vmatpush.bf16.msra.mxu0 %v2032
    %2903 = vmatpush.bf16.msra.mxu0 %v2024
    %2904 = vmatpush.bf16.msra.mxu0 %v2016
    %2905 = vmatpush.bf16.msra.mxu0 %v2008
    %2906 = vmatpush.bf16.msra.mxu0 %v2000
    %2907 = vmatpush.bf16.msra.mxu0 %v1992
    %2908 = vmatpush.bf16.msra.mxu0 %v1984
    %2909 = vmatmul.bf16.gmra.mxu0 %v169
    %v2910 = vpop.f32.mrf.mxu0
    %v2911 = vadd.f32 %v2898, %v2910
    %v2912 = vpop.f32.mrf.mxu0
    %2913 = vdwg.mxu0
    %2914 = vmatpush.bf16.msra.mxu0 %v2104
    %2915 = vmatpush.bf16.msra.mxu0 %v2096
    %2916 = vmatpush.bf16.msra.mxu0 %v2088
    %2917 = vmatpush.bf16.msra.mxu0 %v2080
    %2918 = vmatpush.bf16.msra.mxu0 %v2072
    %2919 = vmatpush.bf16.msra.mxu0 %v2064
    %2920 = vmatpush.bf16.msra.mxu0 %v2056
    %2921 = vmatpush.bf16.msra.mxu0 %v2048
    %2922 = vmatmul.bf16.gmra.mxu0 %v170
    %v2923 = vpop.f32.mrf.mxu0
    %v2924 = vadd.f32 %v2911, %v2923
    %v2925 = vpop.f32.mrf.mxu0
    %2926 = vdwg.mxu0
    %2927 = vmatpush.bf16.msra.mxu0 %v2168
    %2928 = vmatpush.bf16.msra.mxu0 %v2160
    %2929 = vmatpush.bf16.msra.mxu0 %v2152
    %2930 = vmatpush.bf16.msra.mxu0 %v2144
    %2931 = vmatpush.bf16.msra.mxu0 %v2136
    %2932 = vmatpush.bf16.msra.mxu0 %v2128
    %2933 = vmatpush.bf16.msra.mxu0 %v2120
    %2934 = vmatpush.bf16.msra.mxu0 %v2112
    %2935 = vmatmul.bf16.gmra.mxu0 %v171
    %v2936 = vpop.f32.mrf.mxu0
    %v2937 = vadd.f32 %v2924, %v2936
    %v2938 = vpop.f32.mrf.mxu0
    %2939 = vdwg.mxu0
    %2940 = vmatpush.bf16.msra.mxu0 %v2232
    %2941 = vmatpush.bf16.msra.mxu0 %v2224
    %2942 = vmatpush.bf16.msra.mxu0 %v2216
    %2943 = vmatpush.bf16.msra.mxu0 %v2208
    %2944 = vmatpush.bf16.msra.mxu0 %v2200
    %2945 = vmatpush.bf16.msra.mxu0 %v2192
    %2946 = vmatpush.bf16.msra.mxu0 %v2184
    %2947 = vmatpush.bf16.msra.mxu0 %v2176
    %2948 = vmatmul.bf16.gmra.mxu0 %v172
    %v2949 = vpop.f32.mrf.mxu0
    %v2950 = vadd.f32 %v2937, %v2949
    %v2951 = vpop.f32.mrf.mxu0
    %2952 = vdwg.mxu0
    %2953 = vmatpush.bf16.msra.mxu0 %v2296
    %2954 = vmatpush.bf16.msra.mxu0 %v2288
    %2955 = vmatpush.bf16.msra.mxu0 %v2280
    %2956 = vmatpush.bf16.msra.mxu0 %v2272
    %2957 = vmatpush.bf16.msra.mxu0 %v2264
    %2958 = vmatpush.bf16.msra.mxu0 %v2256
    %2959 = vmatpush.bf16.msra.mxu0 %v2248
    %2960 = vmatpush.bf16.msra.mxu0 %v2240
    %2961 = vmatmul.bf16.gmra.mxu0 %v173
    %v2962 = vpop.f32.mrf.mxu0
    %v2963 = vadd.f32 %v2950, %v2962
    %v2964 = vpop.f32.mrf.mxu0
    %2965 = vdwg.mxu0
    %2966 = vmatpush.bf16.msra.mxu0 0
    %2967 = vmatpush.bf16.msra.mxu0 0
    %2968 = vmatpush.bf16.msra.mxu0 0
    %2969 = vmatpush.bf16.msra.mxu0 0
    %2970 = vmatpush.bf16.msra.mxu0 0
    %2971 = vmatpush.bf16.msra.mxu0 0
    %2972 = vmatpush.bf16.msra.mxu0 0
    %2973 = vmatpush.bf16.msra.mxu0 %v2304
    %2974 = vmatmul.bf16.gmra.mxu0 %v2704
    %v2975 = vpop.f32.mrf.mxu0
    %v2976 = vadd.f32 %v2963, %v2975
    %v2977 = vpop.f32.mrf.mxu0
    %2978 = vdwg.mxu0
    %2979 = vmatpush.bf16.msra.mxu0 %v1977
    %2980 = vmatpush.bf16.msra.mxu0 %v1969
    %2981 = vmatpush.bf16.msra.mxu0 %v1961
    %2982 = vmatpush.bf16.msra.mxu0 %v1953
    %2983 = vmatpush.bf16.msra.mxu0 %v1945
    %2984 = vmatpush.bf16.msra.mxu0 %v1937
    %2985 = vmatpush.bf16.msra.mxu0 %v1929
    %2986 = vmatpush.bf16.msra.mxu0 %v1921
    %2987 = vmatmul.bf16.gmra.mxu0 %v168
    %v2988 = vpop.f32.mrf.mxu0
    %v2989 = vadd.f32 %v687, %v2988
    %v2990 = vpop.f32.mrf.mxu0
    %2991 = vdwg.mxu0
    %2992 = vmatpush.bf16.msra.mxu0 %v2041
    %2993 = vmatpush.bf16.msra.mxu0 %v2033
    %2994 = vmatpush.bf16.msra.mxu0 %v2025
    %2995 = vmatpush.bf16.msra.mxu0 %v2017
    %2996 = vmatpush.bf16.msra.mxu0 %v2009
    %2997 = vmatpush.bf16.msra.mxu0 %v2001
    %2998 = vmatpush.bf16.msra.mxu0 %v1993
    %2999 = vmatpush.bf16.msra.mxu0 %v1985
    %3000 = vmatmul.bf16.gmra.mxu0 %v169
    %v3001 = vpop.f32.mrf.mxu0
    %v3002 = vadd.f32 %v2989, %v3001
    %v3003 = vpop.f32.mrf.mxu0
    %3004 = vdwg.mxu0
    %3005 = vmatpush.bf16.msra.mxu0 %v2105
    %3006 = vmatpush.bf16.msra.mxu0 %v2097
    %3007 = vmatpush.bf16.msra.mxu0 %v2089
    %3008 = vmatpush.bf16.msra.mxu0 %v2081
    %3009 = vmatpush.bf16.msra.mxu0 %v2073
    %3010 = vmatpush.bf16.msra.mxu0 %v2065
    %3011 = vmatpush.bf16.msra.mxu0 %v2057
    %3012 = vmatpush.bf16.msra.mxu0 %v2049
    %3013 = vmatmul.bf16.gmra.mxu0 %v170
    %v3014 = vpop.f32.mrf.mxu0
    %v3015 = vadd.f32 %v3002, %v3014
    %v3016 = vpop.f32.mrf.mxu0
    %3017 = vdwg.mxu0
    %3018 = vmatpush.bf16.msra.mxu0 %v2169
    %3019 = vmatpush.bf16.msra.mxu0 %v2161
    %3020 = vmatpush.bf16.msra.mxu0 %v2153
    %3021 = vmatpush.bf16.msra.mxu0 %v2145
    %3022 = vmatpush.bf16.msra.mxu0 %v2137
    %3023 = vmatpush.bf16.msra.mxu0 %v2129
    %3024 = vmatpush.bf16.msra.mxu0 %v2121
    %3025 = vmatpush.bf16.msra.mxu0 %v2113
    %3026 = vmatmul.bf16.gmra.mxu0 %v171
    %v3027 = vpop.f32.mrf.mxu0
    %v3028 = vadd.f32 %v3015, %v3027
    %v3029 = vpop.f32.mrf.mxu0
    %3030 = vdwg.mxu0
    %3031 = vmatpush.bf16.msra.mxu0 %v2233
    %3032 = vmatpush.bf16.msra.mxu0 %v2225
    %3033 = vmatpush.bf16.msra.mxu0 %v2217
    %3034 = vmatpush.bf16.msra.mxu0 %v2209
    %3035 = vmatpush.bf16.msra.mxu0 %v2201
    %3036 = vmatpush.bf16.msra.mxu0 %v2193
    %3037 = vmatpush.bf16.msra.mxu0 %v2185
    %3038 = vmatpush.bf16.msra.mxu0 %v2177
    %3039 = vmatmul.bf16.gmra.mxu0 %v172
    %v3040 = vpop.f32.mrf.mxu0
    %v3041 = vadd.f32 %v3028, %v3040
    %v3042 = vpop.f32.mrf.mxu0
    %3043 = vdwg.mxu0
    %3044 = vmatpush.bf16.msra.mxu0 %v2297
    %3045 = vmatpush.bf16.msra.mxu0 %v2289
    %3046 = vmatpush.bf16.msra.mxu0 %v2281
    %3047 = vmatpush.bf16.msra.mxu0 %v2273
    %3048 = vmatpush.bf16.msra.mxu0 %v2265
    %3049 = vmatpush.bf16.msra.mxu0 %v2257
    %3050 = vmatpush.bf16.msra.mxu0 %v2249
    %3051 = vmatpush.bf16.msra.mxu0 %v2241
    %3052 = vmatmul.bf16.gmra.mxu0 %v173
    %v3053 = vpop.f32.mrf.mxu0
    %v3054 = vadd.f32 %v3041, %v3053
    %v3055 = vpop.f32.mrf.mxu0
    %3056 = vdwg.mxu0
    %3057 = vmatpush.bf16.msra.mxu0 0
    %3058 = vmatpush.bf16.msra.mxu0 0
    %3059 = vmatpush.bf16.msra.mxu0 0
    %3060 = vmatpush.bf16.msra.mxu0 0
    %3061 = vmatpush.bf16.msra.mxu0 0
    %3062 = vmatpush.bf16.msra.mxu0 0
    %3063 = vmatpush.bf16.msra.mxu0 0
    %3064 = vmatpush.bf16.msra.mxu0 %v2305
    %3065 = vmatmul.bf16.gmra.mxu0 %v2704
    %v3066 = vpop.f32.mrf.mxu0
    %v3067 = vadd.f32 %v3054, %v3066
    %v3068 = vpop.f32.mrf.mxu0
    %3069 = vdwg.mxu0
    %3070 = vmatpush.bf16.msra.mxu0 %v1978
    %3071 = vmatpush.bf16.msra.mxu0 %v1970
    %3072 = vmatpush.bf16.msra.mxu0 %v1962
    %3073 = vmatpush.bf16.msra.mxu0 %v1954
    %3074 = vmatpush.bf16.msra.mxu0 %v1946
    %3075 = vmatpush.bf16.msra.mxu0 %v1938
    %3076 = vmatpush.bf16.msra.mxu0 %v1930
    %3077 = vmatpush.bf16.msra.mxu0 %v1922
    %3078 = vmatmul.bf16.gmra.mxu0 %v168
    %v3079 = vpop.f32.mrf.mxu0
    %v3080 = vadd.f32 %v700, %v3079
    %v3081 = vpop.f32.mrf.mxu0
    %3082 = vdwg.mxu0
    %3083 = vmatpush.bf16.msra.mxu0 %v2042
    %3084 = vmatpush.bf16.msra.mxu0 %v2034
    %3085 = vmatpush.bf16.msra.mxu0 %v2026
    %3086 = vmatpush.bf16.msra.mxu0 %v2018
    %3087 = vmatpush.bf16.msra.mxu0 %v2010
    %3088 = vmatpush.bf16.msra.mxu0 %v2002
    %3089 = vmatpush.bf16.msra.mxu0 %v1994
    %3090 = vmatpush.bf16.msra.mxu0 %v1986
    %3091 = vmatmul.bf16.gmra.mxu0 %v169
    %v3092 = vpop.f32.mrf.mxu0
    %v3093 = vadd.f32 %v3080, %v3092
    %v3094 = vpop.f32.mrf.mxu0
    %3095 = vdwg.mxu0
    %3096 = vmatpush.bf16.msra.mxu0 %v2106
    %3097 = vmatpush.bf16.msra.mxu0 %v2098
    %3098 = vmatpush.bf16.msra.mxu0 %v2090
    %3099 = vmatpush.bf16.msra.mxu0 %v2082
    %3100 = vmatpush.bf16.msra.mxu0 %v2074
    %3101 = vmatpush.bf16.msra.mxu0 %v2066
    %3102 = vmatpush.bf16.msra.mxu0 %v2058
    %3103 = vmatpush.bf16.msra.mxu0 %v2050
    %3104 = vmatmul.bf16.gmra.mxu0 %v170
    %v3105 = vpop.f32.mrf.mxu0
    %v3106 = vadd.f32 %v3093, %v3105
    %v3107 = vpop.f32.mrf.mxu0
    %3108 = vdwg.mxu0
    %3109 = vmatpush.bf16.msra.mxu0 %v2170
    %3110 = vmatpush.bf16.msra.mxu0 %v2162
    %3111 = vmatpush.bf16.msra.mxu0 %v2154
    %3112 = vmatpush.bf16.msra.mxu0 %v2146
    %3113 = vmatpush.bf16.msra.mxu0 %v2138
    %3114 = vmatpush.bf16.msra.mxu0 %v2130
    %3115 = vmatpush.bf16.msra.mxu0 %v2122
    %3116 = vmatpush.bf16.msra.mxu0 %v2114
    %3117 = vmatmul.bf16.gmra.mxu0 %v171
    %v3118 = vpop.f32.mrf.mxu0
    %v3119 = vadd.f32 %v3106, %v3118
    %v3120 = vpop.f32.mrf.mxu0
    %3121 = vdwg.mxu0
    %3122 = vmatpush.bf16.msra.mxu0 %v2234
    %3123 = vmatpush.bf16.msra.mxu0 %v2226
    %3124 = vmatpush.bf16.msra.mxu0 %v2218
    %3125 = vmatpush.bf16.msra.mxu0 %v2210
    %3126 = vmatpush.bf16.msra.mxu0 %v2202
    %3127 = vmatpush.bf16.msra.mxu0 %v2194
    %3128 = vmatpush.bf16.msra.mxu0 %v2186
    %3129 = vmatpush.bf16.msra.mxu0 %v2178
    %3130 = vmatmul.bf16.gmra.mxu0 %v172
    %v3131 = vpop.f32.mrf.mxu0
    %v3132 = vadd.f32 %v3119, %v3131
    %v3133 = vpop.f32.mrf.mxu0
    %3134 = vdwg.mxu0
    %3135 = vmatpush.bf16.msra.mxu0 %v2298
    %3136 = vmatpush.bf16.msra.mxu0 %v2290
    %3137 = vmatpush.bf16.msra.mxu0 %v2282
    %3138 = vmatpush.bf16.msra.mxu0 %v2274
    %3139 = vmatpush.bf16.msra.mxu0 %v2266
    %3140 = vmatpush.bf16.msra.mxu0 %v2258
    %3141 = vmatpush.bf16.msra.mxu0 %v2250
    %3142 = vmatpush.bf16.msra.mxu0 %v2242
    %3143 = vmatmul.bf16.gmra.mxu0 %v173
    %v3144 = vpop.f32.mrf.mxu0
    %v3145 = vadd.f32 %v3132, %v3144
    %v3146 = vpop.f32.mrf.mxu0
    %3147 = vdwg.mxu0
    %3148 = vmatpush.bf16.msra.mxu0 0
    %3149 = vmatpush.bf16.msra.mxu0 0
    %3150 = vmatpush.bf16.msra.mxu0 0
    %3151 = vmatpush.bf16.msra.mxu0 0
    %3152 = vmatpush.bf16.msra.mxu0 0
    %3153 = vmatpush.bf16.msra.mxu0 0
    %3154 = vmatpush.bf16.msra.mxu0 0
    %3155 = vmatpush.bf16.msra.mxu0 %v2306
    %3156 = vmatmul.bf16.gmra.mxu0 %v2704
    %v3157 = vpop.f32.mrf.mxu0
    %v3158 = vadd.f32 %v3145, %v3157
    %v3159 = vpop.f32.mrf.mxu0
    %3160 = vdwg.mxu0
    %3161 = vmatpush.bf16.msra.mxu0 %v1979
    %3162 = vmatpush.bf16.msra.mxu0 %v1971
    %3163 = vmatpush.bf16.msra.mxu0 %v1963
    %3164 = vmatpush.bf16.msra.mxu0 %v1955
    %3165 = vmatpush.bf16.msra.mxu0 %v1947
    %3166 = vmatpush.bf16.msra.mxu0 %v1939
    %3167 = vmatpush.bf16.msra.mxu0 %v1931
    %3168 = vmatpush.bf16.msra.mxu0 %v1923
    %3169 = vmatmul.bf16.gmra.mxu0 %v168
    %v3170 = vpop.f32.mrf.mxu0
    %v3171 = vadd.f32 %v713, %v3170
    %v3172 = vpop.f32.mrf.mxu0
    %3173 = vdwg.mxu0
    %3174 = vmatpush.bf16.msra.mxu0 %v2043
    %3175 = vmatpush.bf16.msra.mxu0 %v2035
    %3176 = vmatpush.bf16.msra.mxu0 %v2027
    %3177 = vmatpush.bf16.msra.mxu0 %v2019
    %3178 = vmatpush.bf16.msra.mxu0 %v2011
    %3179 = vmatpush.bf16.msra.mxu0 %v2003
    %3180 = vmatpush.bf16.msra.mxu0 %v1995
    %3181 = vmatpush.bf16.msra.mxu0 %v1987
    %3182 = vmatmul.bf16.gmra.mxu0 %v169
    %v3183 = vpop.f32.mrf.mxu0
    %v3184 = vadd.f32 %v3171, %v3183
    %v3185 = vpop.f32.mrf.mxu0
    %3186 = vdwg.mxu0
    %3187 = vmatpush.bf16.msra.mxu0 %v2107
    %3188 = vmatpush.bf16.msra.mxu0 %v2099
    %3189 = vmatpush.bf16.msra.mxu0 %v2091
    %3190 = vmatpush.bf16.msra.mxu0 %v2083
    %3191 = vmatpush.bf16.msra.mxu0 %v2075
    %3192 = vmatpush.bf16.msra.mxu0 %v2067
    %3193 = vmatpush.bf16.msra.mxu0 %v2059
    %3194 = vmatpush.bf16.msra.mxu0 %v2051
    %3195 = vmatmul.bf16.gmra.mxu0 %v170
    %v3196 = vpop.f32.mrf.mxu0
    %v3197 = vadd.f32 %v3184, %v3196
    %v3198 = vpop.f32.mrf.mxu0
    %3199 = vdwg.mxu0
    %3200 = vmatpush.bf16.msra.mxu0 %v2171
    %3201 = vmatpush.bf16.msra.mxu0 %v2163
    %3202 = vmatpush.bf16.msra.mxu0 %v2155
    %3203 = vmatpush.bf16.msra.mxu0 %v2147
    %3204 = vmatpush.bf16.msra.mxu0 %v2139
    %3205 = vmatpush.bf16.msra.mxu0 %v2131
    %3206 = vmatpush.bf16.msra.mxu0 %v2123
    %3207 = vmatpush.bf16.msra.mxu0 %v2115
    %3208 = vmatmul.bf16.gmra.mxu0 %v171
    %v3209 = vpop.f32.mrf.mxu0
    %v3210 = vadd.f32 %v3197, %v3209
    %v3211 = vpop.f32.mrf.mxu0
    %3212 = vdwg.mxu0
    %3213 = vmatpush.bf16.msra.mxu0 %v2235
    %3214 = vmatpush.bf16.msra.mxu0 %v2227
    %3215 = vmatpush.bf16.msra.mxu0 %v2219
    %3216 = vmatpush.bf16.msra.mxu0 %v2211
    %3217 = vmatpush.bf16.msra.mxu0 %v2203
    %3218 = vmatpush.bf16.msra.mxu0 %v2195
    %3219 = vmatpush.bf16.msra.mxu0 %v2187
    %3220 = vmatpush.bf16.msra.mxu0 %v2179
    %3221 = vmatmul.bf16.gmra.mxu0 %v172
    %v3222 = vpop.f32.mrf.mxu0
    %v3223 = vadd.f32 %v3210, %v3222
    %v3224 = vpop.f32.mrf.mxu0
    %3225 = vdwg.mxu0
    %3226 = vmatpush.bf16.msra.mxu0 %v2299
    %3227 = vmatpush.bf16.msra.mxu0 %v2291
    %3228 = vmatpush.bf16.msra.mxu0 %v2283
    %3229 = vmatpush.bf16.msra.mxu0 %v2275
    %3230 = vmatpush.bf16.msra.mxu0 %v2267
    %3231 = vmatpush.bf16.msra.mxu0 %v2259
    %3232 = vmatpush.bf16.msra.mxu0 %v2251
    %3233 = vmatpush.bf16.msra.mxu0 %v2243
    %3234 = vmatmul.bf16.gmra.mxu0 %v173
    %v3235 = vpop.f32.mrf.mxu0
    %v3236 = vadd.f32 %v3223, %v3235
    %v3237 = vpop.f32.mrf.mxu0
    %3238 = vdwg.mxu0
    %3239 = vmatpush.bf16.msra.mxu0 0
    %3240 = vmatpush.bf16.msra.mxu0 0
    %3241 = vmatpush.bf16.msra.mxu0 0
    %3242 = vmatpush.bf16.msra.mxu0 0
    %3243 = vmatpush.bf16.msra.mxu0 0
    %3244 = vmatpush.bf16.msra.mxu0 0
    %3245 = vmatpush.bf16.msra.mxu0 0
    %3246 = vmatpush.bf16.msra.mxu0 %v2307
    %3247 = vmatmul.bf16.gmra.mxu0 %v2704
    %v3248 = vpop.f32.mrf.mxu0
    %v3249 = vadd.f32 %v3236, %v3248
    %v3250 = vpop.f32.mrf.mxu0
    %3251 = vdwg.mxu0
    %3252 = vmatpush.bf16.msra.mxu0 %v1980
    %3253 = vmatpush.bf16.msra.mxu0 %v1972
    %3254 = vmatpush.bf16.msra.mxu0 %v1964
    %3255 = vmatpush.bf16.msra.mxu0 %v1956
    %3256 = vmatpush.bf16.msra.mxu0 %v1948
    %3257 = vmatpush.bf16.msra.mxu0 %v1940
    %3258 = vmatpush.bf16.msra.mxu0 %v1932
    %3259 = vmatpush.bf16.msra.mxu0 %v1924
    %3260 = vmatmul.bf16.gmra.mxu0 %v168
    %v3261 = vpop.f32.mrf.mxu0
    %v3262 = vadd.f32 %v726, %v3261
    %v3263 = vpop.f32.mrf.mxu0
    %3264 = vdwg.mxu0
    %3265 = vmatpush.bf16.msra.mxu0 %v2044
    %3266 = vmatpush.bf16.msra.mxu0 %v2036
    %3267 = vmatpush.bf16.msra.mxu0 %v2028
    %3268 = vmatpush.bf16.msra.mxu0 %v2020
    %3269 = vmatpush.bf16.msra.mxu0 %v2012
    %3270 = vmatpush.bf16.msra.mxu0 %v2004
    %3271 = vmatpush.bf16.msra.mxu0 %v1996
    %3272 = vmatpush.bf16.msra.mxu0 %v1988
    %3273 = vmatmul.bf16.gmra.mxu0 %v169
    %v3274 = vpop.f32.mrf.mxu0
    %v3275 = vadd.f32 %v3262, %v3274
    %v3276 = vpop.f32.mrf.mxu0
    %3277 = vdwg.mxu0
    %3278 = vmatpush.bf16.msra.mxu0 %v2108
    %3279 = vmatpush.bf16.msra.mxu0 %v2100
    %3280 = vmatpush.bf16.msra.mxu0 %v2092
    %3281 = vmatpush.bf16.msra.mxu0 %v2084
    %3282 = vmatpush.bf16.msra.mxu0 %v2076
    %3283 = vmatpush.bf16.msra.mxu0 %v2068
    %3284 = vmatpush.bf16.msra.mxu0 %v2060
    %3285 = vmatpush.bf16.msra.mxu0 %v2052
    %3286 = vmatmul.bf16.gmra.mxu0 %v170
    %v3287 = vpop.f32.mrf.mxu0
    %v3288 = vadd.f32 %v3275, %v3287
    %v3289 = vpop.f32.mrf.mxu0
    %3290 = vdwg.mxu0
    %3291 = vmatpush.bf16.msra.mxu0 %v2172
    %3292 = vmatpush.bf16.msra.mxu0 %v2164
    %3293 = vmatpush.bf16.msra.mxu0 %v2156
    %3294 = vmatpush.bf16.msra.mxu0 %v2148
    %3295 = vmatpush.bf16.msra.mxu0 %v2140
    %3296 = vmatpush.bf16.msra.mxu0 %v2132
    %3297 = vmatpush.bf16.msra.mxu0 %v2124
    %3298 = vmatpush.bf16.msra.mxu0 %v2116
    %3299 = vmatmul.bf16.gmra.mxu0 %v171
    %v3300 = vpop.f32.mrf.mxu0
    %v3301 = vadd.f32 %v3288, %v3300
    %v3302 = vpop.f32.mrf.mxu0
    %3303 = vdwg.mxu0
    %3304 = vmatpush.bf16.msra.mxu0 %v2236
    %3305 = vmatpush.bf16.msra.mxu0 %v2228
    %3306 = vmatpush.bf16.msra.mxu0 %v2220
    %3307 = vmatpush.bf16.msra.mxu0 %v2212
    %3308 = vmatpush.bf16.msra.mxu0 %v2204
    %3309 = vmatpush.bf16.msra.mxu0 %v2196
    %3310 = vmatpush.bf16.msra.mxu0 %v2188
    %3311 = vmatpush.bf16.msra.mxu0 %v2180
    %3312 = vmatmul.bf16.gmra.mxu0 %v172
    %v3313 = vpop.f32.mrf.mxu0
    %v3314 = vadd.f32 %v3301, %v3313
    %v3315 = vpop.f32.mrf.mxu0
    %3316 = vdwg.mxu0
    %3317 = vmatpush.bf16.msra.mxu0 %v2300
    %3318 = vmatpush.bf16.msra.mxu0 %v2292
    %3319 = vmatpush.bf16.msra.mxu0 %v2284
    %3320 = vmatpush.bf16.msra.mxu0 %v2276
    %3321 = vmatpush.bf16.msra.mxu0 %v2268
    %3322 = vmatpush.bf16.msra.mxu0 %v2260
    %3323 = vmatpush.bf16.msra.mxu0 %v2252
    %3324 = vmatpush.bf16.msra.mxu0 %v2244
    %3325 = vmatmul.bf16.gmra.mxu0 %v173
    %v3326 = vpop.f32.mrf.mxu0
    %v3327 = vadd.f32 %v3314, %v3326
    %v3328 = vpop.f32.mrf.mxu0
    %3329 = vdwg.mxu0
    %3330 = vmatpush.bf16.msra.mxu0 0
    %3331 = vmatpush.bf16.msra.mxu0 0
    %3332 = vmatpush.bf16.msra.mxu0 0
    %3333 = vmatpush.bf16.msra.mxu0 0
    %3334 = vmatpush.bf16.msra.mxu0 0
    %3335 = vmatpush.bf16.msra.mxu0 0
    %3336 = vmatpush.bf16.msra.mxu0 0
    %3337 = vmatpush.bf16.msra.mxu0 %v2308
    %3338 = vmatmul.bf16.gmra.mxu0 %v2704
    %v3339 = vpop.f32.mrf.mxu0
    %v3340 = vadd.f32 %v3327, %v3339
    %v3341 = vpop.f32.mrf.mxu0
    %3342 = vdwg.mxu0
    %3343 = vmatpush.bf16.msra.mxu0 %v1981
    %3344 = vmatpush.bf16.msra.mxu0 %v1973
    %3345 = vmatpush.bf16.msra.mxu0 %v1965
    %3346 = vmatpush.bf16.msra.mxu0 %v1957
    %3347 = vmatpush.bf16.msra.mxu0 %v1949
    %3348 = vmatpush.bf16.msra.mxu0 %v1941
    %3349 = vmatpush.bf16.msra.mxu0 %v1933
    %3350 = vmatpush.bf16.msra.mxu0 %v1925
    %3351 = vmatmul.bf16.gmra.mxu0 %v168
    %v3352 = vpop.f32.mrf.mxu0
    %v3353 = vadd.f32 %v739, %v3352
    %v3354 = vpop.f32.mrf.mxu0
    %3355 = vdwg.mxu0
    %3356 = vmatpush.bf16.msra.mxu0 %v2045
    %3357 = vmatpush.bf16.msra.mxu0 %v2037
    %3358 = vmatpush.bf16.msra.mxu0 %v2029
    %3359 = vmatpush.bf16.msra.mxu0 %v2021
    %3360 = vmatpush.bf16.msra.mxu0 %v2013
    %3361 = vmatpush.bf16.msra.mxu0 %v2005
    %3362 = vmatpush.bf16.msra.mxu0 %v1997
    %3363 = vmatpush.bf16.msra.mxu0 %v1989
    %3364 = vmatmul.bf16.gmra.mxu0 %v169
    %v3365 = vpop.f32.mrf.mxu0
    %v3366 = vadd.f32 %v3353, %v3365
    %v3367 = vpop.f32.mrf.mxu0
    %3368 = vdwg.mxu0
    %3369 = vmatpush.bf16.msra.mxu0 %v2109
    %3370 = vmatpush.bf16.msra.mxu0 %v2101
    %3371 = vmatpush.bf16.msra.mxu0 %v2093
    %3372 = vmatpush.bf16.msra.mxu0 %v2085
    %3373 = vmatpush.bf16.msra.mxu0 %v2077
    %3374 = vmatpush.bf16.msra.mxu0 %v2069
    %3375 = vmatpush.bf16.msra.mxu0 %v2061
    %3376 = vmatpush.bf16.msra.mxu0 %v2053
    %3377 = vmatmul.bf16.gmra.mxu0 %v170
    %v3378 = vpop.f32.mrf.mxu0
    %v3379 = vadd.f32 %v3366, %v3378
    %v3380 = vpop.f32.mrf.mxu0
    %3381 = vdwg.mxu0
    %3382 = vmatpush.bf16.msra.mxu0 %v2173
    %3383 = vmatpush.bf16.msra.mxu0 %v2165
    %3384 = vmatpush.bf16.msra.mxu0 %v2157
    %3385 = vmatpush.bf16.msra.mxu0 %v2149
    %3386 = vmatpush.bf16.msra.mxu0 %v2141
    %3387 = vmatpush.bf16.msra.mxu0 %v2133
    %3388 = vmatpush.bf16.msra.mxu0 %v2125
    %3389 = vmatpush.bf16.msra.mxu0 %v2117
    %3390 = vmatmul.bf16.gmra.mxu0 %v171
    %v3391 = vpop.f32.mrf.mxu0
    %v3392 = vadd.f32 %v3379, %v3391
    %v3393 = vpop.f32.mrf.mxu0
    %3394 = vdwg.mxu0
    %3395 = vmatpush.bf16.msra.mxu0 %v2237
    %3396 = vmatpush.bf16.msra.mxu0 %v2229
    %3397 = vmatpush.bf16.msra.mxu0 %v2221
    %3398 = vmatpush.bf16.msra.mxu0 %v2213
    %3399 = vmatpush.bf16.msra.mxu0 %v2205
    %3400 = vmatpush.bf16.msra.mxu0 %v2197
    %3401 = vmatpush.bf16.msra.mxu0 %v2189
    %3402 = vmatpush.bf16.msra.mxu0 %v2181
    %3403 = vmatmul.bf16.gmra.mxu0 %v172
    %v3404 = vpop.f32.mrf.mxu0
    %v3405 = vadd.f32 %v3392, %v3404
    %v3406 = vpop.f32.mrf.mxu0
    %3407 = vdwg.mxu0
    %3408 = vmatpush.bf16.msra.mxu0 %v2301
    %3409 = vmatpush.bf16.msra.mxu0 %v2293
    %3410 = vmatpush.bf16.msra.mxu0 %v2285
    %3411 = vmatpush.bf16.msra.mxu0 %v2277
    %3412 = vmatpush.bf16.msra.mxu0 %v2269
    %3413 = vmatpush.bf16.msra.mxu0 %v2261
    %3414 = vmatpush.bf16.msra.mxu0 %v2253
    %3415 = vmatpush.bf16.msra.mxu0 %v2245
    %3416 = vmatmul.bf16.gmra.mxu0 %v173
    %v3417 = vpop.f32.mrf.mxu0
    %v3418 = vadd.f32 %v3405, %v3417
    %v3419 = vpop.f32.mrf.mxu0
    %3420 = vdwg.mxu0
    %3421 = vmatpush.bf16.msra.mxu0 0
    %3422 = vmatpush.bf16.msra.mxu0 0
    %3423 = vmatpush.bf16.msra.mxu0 0
    %3424 = vmatpush.bf16.msra.mxu0 0
    %3425 = vmatpush.bf16.msra.mxu0 0
    %3426 = vmatpush.bf16.msra.mxu0 0
    %3427 = vmatpush.bf16.msra.mxu0 0
    %3428 = vmatpush.bf16.msra.mxu0 %v2309
    %3429 = vmatmul.bf16.gmra.mxu0 %v2704
    %v3430 = vpop.f32.mrf.mxu0
    %v3431 = vadd.f32 %v3418, %v3430
    %v3432 = vpop.f32.mrf.mxu0
    %3433 = vdwg.mxu0
    %v3434 = vld [vmem:[#allocation8] sm:$0xff]
    %v3436 = vperm.slane %v3434, 0
    %v3437 = vperm.slane %v3434, 1
    %v3438 = vperm.slane %v3434, 2
    %v3439 = vperm.slane %v3434, 3
    %v3440 = vperm.slane %v3434, 4
    %v3441 = vperm.slane %v3434, 5
    %v3442 = vperm.slane %v3434, 6
    %v3443 = vperm.slane %v3434, 7
    %v3452 = vadd.f32 %v2794, %v3436
    %v3453 = vadd.f32 %v2885, %v3437
    %v3454 = vadd.f32 %v2976, %v3438
    %v3455 = vadd.f32 %v3067, %v3439
    %v3456 = vadd.f32 %v3158, %v3440
    %v3457 = vadd.f32 %v3249, %v3441
    %v3458 = vadd.f32 %v3340, %v3442
    %v3459 = vadd.f32 %v3431, %v3443
    %v3460 = vmul.f32 %v3452, 0.2
    %v3461 = vmul.f32 %v3453, 0.2
    %v3462 = vmul.f32 %v3454, 0.2
    %v3463 = vmul.f32 %v3455, 0.2
    %v3464 = vmul.f32 %v3456, 0.2
    %v3465 = vmul.f32 %v3457, 0.2
    %v3466 = vmul.f32 %v3458, 0.2
    %v3467 = vmul.f32 %v3459, 0.2
    %v3468 = vmax.f32 %v3452, %v3460
    %v3469 = vmax.f32 %v3453, %v3461
    %v3470 = vmax.f32 %v3454, %v3462
    %v3471 = vmax.f32 %v3455, %v3463
    %v3472 = vmax.f32 %v3456, %v3464
    %v3473 = vmax.f32 %v3457, %v3465
    %v3474 = vmax.f32 %v3458, %v3466
    %v3475 = vmax.f32 %v3459, %v3467
    %v3476 = vpack.c.bf16 %v3468, %v3468
    %v3477 = vpack.c.bf16 %v3469, %v3469
    %v3478 = vpack.c.bf16 %v3470, %v3470
    %v3479 = vpack.c.bf16 %v3471, %v3471
    %v3480 = vpack.c.bf16 %v3472, %v3472
    %v3481 = vpack.c.bf16 %v3473, %v3473
    %v3482 = vpack.c.bf16 %v3474, %v3474
    %v3483 = vpack.c.bf16 %v3475, %v3475
    %v3484 = vld [vmem:[#allocation9] sm:$0xff]
    %v3485 = vld [vmem:[#allocation9 + $0x8] sm:$0xff]
    %v3486 = vld [vmem:[#allocation9 + $0x10] sm:$0xff]
    %v3487 = vld [vmem:[#allocation9 + $0x18] sm:$0xff]
    %v3488 = vld [vmem:[#allocation9 + $0x20] sm:$0xff]
    %v3489 = vld [vmem:[#allocation9 + $0x28] sm:$0xff]
    %v3490 = vld [vmem:[#allocation9 + $0x30] sm:$0xff]
    %v3491 = vld [vmem:[#allocation9 + $0x38] sm:$0xff]
    %v3492 = vld [vmem:[#allocation9 + $0x40] sm:$0xff]
    %v3493 = vld [vmem:[#allocation9 + $0x48] sm:$0xff]
    %v3494 = vld [vmem:[#allocation9 + $0x50] sm:$0xff]
    %v3495 = vld [vmem:[#allocation9 + $0x58] sm:$0xff]
    %v3496 = vld [vmem:[#allocation9 + $0x60] sm:$0xff]
    %v3497 = vld [vmem:[#allocation9 + $0x68] sm:$0xff]
    %v3498 = vld [vmem:[#allocation9 + $0x70] sm:$0xff]
    %v3499 = vld [vmem:[#allocation9 + $0x78] sm:$0xff]
    %v3500 = vld [vmem:[#allocation9 + $0x80] sm:$0xff]
    %v3501 = vld [vmem:[#allocation9 + $0x88] sm:$0xff]
    %v3502 = vld [vmem:[#allocation9 + $0x90] sm:$0xff]
    %v3503 = vld [vmem:[#allocation9 + $0x98] sm:$0xff]
    %v3504 = vld [vmem:[#allocation9 + $0xa0] sm:$0xff]
    %v3505 = vld [vmem:[#allocation9 + $0xa8] sm:$0xff]
    %v3506 = vld [vmem:[#allocation9 + $0xb0] sm:$0xff]
    %v3507 = vld [vmem:[#allocation9 + $0xb8] sm:$0xff]
    %v3508 = vld [vmem:[#allocation9 + $0xc0] sm:$0xff]
    %v3509 = vld [vmem:[#allocation9 + $0xc8] sm:$0xff]
    %v3510 = vld [vmem:[#allocation9 + $0xd0] sm:$0xff]
    %v3511 = vld [vmem:[#allocation9 + $0xd8] sm:$0xff]
    %v3512 = vld [vmem:[#allocation9 + $0xe0] sm:$0xff]
    %v3513 = vld [vmem:[#allocation9 + $0xe8] sm:$0xff]
    %v3514 = vld [vmem:[#allocation9 + $0xf0] sm:$0xff]
    %v3515 = vld [vmem:[#allocation9 + $0xf8] sm:$0xff]
    %v3516 = vld [vmem:[#allocation9 + $0x100] sm:$0xff]
    %v3517 = vld [vmem:[#allocation9 + $0x108] sm:$0xff]
    %v3518 = vld [vmem:[#allocation9 + $0x110] sm:$0xff]
    %v3519 = vld [vmem:[#allocation9 + $0x118] sm:$0xff]
    %v3520 = vld [vmem:[#allocation9 + $0x120] sm:$0xff]
    %v3521 = vld [vmem:[#allocation9 + $0x128] sm:$0xff]
    %v3522 = vld [vmem:[#allocation9 + $0x130] sm:$0xff]
    %v3523 = vld [vmem:[#allocation9 + $0x138] sm:$0xff]
    %v3524 = vld [vmem:[#allocation9 + $0x140] sm:$0xff]
    %v3525 = vld [vmem:[#allocation9 + $0x148] sm:$0xff]
    %v3526 = vld [vmem:[#allocation9 + $0x150] sm:$0xff]
    %v3527 = vld [vmem:[#allocation9 + $0x158] sm:$0xff]
    %v3528 = vld [vmem:[#allocation9 + $0x160] sm:$0xff]
    %v3529 = vld [vmem:[#allocation9 + $0x168] sm:$0xff]
    %v3530 = vld [vmem:[#allocation9 + $0x170] sm:$0xff]
    %v3531 = vld [vmem:[#allocation9 + $0x178] sm:$0xff]
    %v3532 = vld [vmem:[#allocation9 + $0x180] sm:$0xff]
    %v3533 = vld [vmem:[#allocation9 + $0x188] sm:$0xff]
    %v3534 = vld [vmem:[#allocation9 + $0x190] sm:$0xff]
    %v3535 = vld [vmem:[#allocation9 + $0x198] sm:$0xff]
    %v3536 = vld [vmem:[#allocation9 + $0x1a0] sm:$0xff]
    %v3537 = vld [vmem:[#allocation9 + $0x1a8] sm:$0xff]
    %v3538 = vld [vmem:[#allocation9 + $0x1b0] sm:$0xff]
    %v3539 = vld [vmem:[#allocation9 + $0x1b8] sm:$0xff]
    %v3540 = vld [vmem:[#allocation9 + $0x1c0] sm:$0xff]
    %v3541 = vld [vmem:[#allocation9 + $0x1c8] sm:$0xff]
    %v3542 = vld [vmem:[#allocation9 + $0x1d0] sm:$0xff]
    %v3543 = vld [vmem:[#allocation9 + $0x1d8] sm:$0xff]
    %v3544 = vld [vmem:[#allocation9 + $0x1e0] sm:$0xff]
    %v3545 = vld [vmem:[#allocation9 + $0x1e8] sm:$0xff]
    %v3546 = vld [vmem:[#allocation9 + $0x1f0] sm:$0xff]
    %v3547 = vld [vmem:[#allocation9 + $0x1f8] sm:$0xff]
    %v3548 = vld [vmem:[#allocation9 + $0x200] sm:$0xff]
    %v3549 = vld [vmem:[#allocation9 + $0x208] sm:$0xff]
    %v3550 = vld [vmem:[#allocation9 + $0x210] sm:$0xff]
    %v3551 = vld [vmem:[#allocation9 + $0x218] sm:$0xff]
    %v3552 = vld [vmem:[#allocation9 + $0x220] sm:$0xff]
    %v3553 = vld [vmem:[#allocation9 + $0x228] sm:$0xff]
    %v3554 = vld [vmem:[#allocation9 + $0x230] sm:$0xff]
    %v3555 = vld [vmem:[#allocation9 + $0x238] sm:$0xff]
    %v3556 = vld [vmem:[#allocation9 + $0x240] sm:$0xff]
    %v3557 = vld [vmem:[#allocation9 + $0x248] sm:$0xff]
    %v3558 = vld [vmem:[#allocation9 + $0x250] sm:$0xff]
    %v3559 = vld [vmem:[#allocation9 + $0x258] sm:$0xff]
    %v3560 = vld [vmem:[#allocation9 + $0x260] sm:$0xff]
    %v3561 = vld [vmem:[#allocation9 + $0x268] sm:$0xff]
    %v3562 = vld [vmem:[#allocation9 + $0x270] sm:$0xff]
    %v3563 = vld [vmem:[#allocation9 + $0x278] sm:$0xff]
    %v3564 = vld [vmem:[#allocation9 + $0x280] sm:$0xff]
    %v3565 = vld [vmem:[#allocation9 + $0x288] sm:$0xff]
    %v3566 = vld [vmem:[#allocation9 + $0x290] sm:$0xff]
    %v3567 = vld [vmem:[#allocation9 + $0x298] sm:$0xff]
    %v3568 = vld [vmem:[#allocation9 + $0x2a0] sm:$0xff]
    %v3569 = vld [vmem:[#allocation9 + $0x2a8] sm:$0xff]
    %v3570 = vld [vmem:[#allocation9 + $0x2b0] sm:$0xff]
    %v3571 = vld [vmem:[#allocation9 + $0x2b8] sm:$0xff]
    %v3572 = vld [vmem:[#allocation9 + $0x2c0] sm:$0xff]
    %v3573 = vld [vmem:[#allocation9 + $0x2c8] sm:$0xff]
    %v3574 = vld [vmem:[#allocation9 + $0x2d0] sm:$0xff]
    %v3575 = vld [vmem:[#allocation9 + $0x2d8] sm:$0xff]
    %v3576 = vld [vmem:[#allocation9 + $0x2e0] sm:$0xff]
    %v3577 = vld [vmem:[#allocation9 + $0x2e8] sm:$0xff]
    %v3578 = vld [vmem:[#allocation9 + $0x2f0] sm:$0xff]
    %v3579 = vld [vmem:[#allocation9 + $0x2f8] sm:$0xff]
    %v3580 = vld [vmem:[#allocation9 + $0x300] sm:$0xff]
    %v3581 = vld [vmem:[#allocation9 + $0x308] sm:$0xff]
    %v3582 = vld [vmem:[#allocation9 + $0x310] sm:$0xff]
    %v3583 = vld [vmem:[#allocation9 + $0x318] sm:$0xff]
    %v3584 = vld [vmem:[#allocation9 + $0x320] sm:$0xff]
    %v3585 = vld [vmem:[#allocation9 + $0x328] sm:$0xff]
    %v3586 = vld [vmem:[#allocation9 + $0x330] sm:$0xff]
    %v3587 = vld [vmem:[#allocation9 + $0x338] sm:$0xff]
    %v3588 = vld [vmem:[#allocation9 + $0x340] sm:$0xff]
    %v3589 = vld [vmem:[#allocation9 + $0x348] sm:$0xff]
    %v3590 = vld [vmem:[#allocation9 + $0x350] sm:$0xff]
    %v3591 = vld [vmem:[#allocation9 + $0x358] sm:$0xff]
    %v3592 = vld [vmem:[#allocation9 + $0x360] sm:$0xff]
    %v3593 = vld [vmem:[#allocation9 + $0x368] sm:$0xff]
    %v3594 = vld [vmem:[#allocation9 + $0x370] sm:$0xff]
    %v3595 = vld [vmem:[#allocation9 + $0x378] sm:$0xff]
    %v3596 = vld [vmem:[#allocation9 + $0x380] sm:$0xff]
    %v3597 = vld [vmem:[#allocation9 + $0x388] sm:$0xff]
    %v3598 = vld [vmem:[#allocation9 + $0x390] sm:$0xff]
    %v3599 = vld [vmem:[#allocation9 + $0x398] sm:$0xff]
    %v3600 = vld [vmem:[#allocation9 + $0x3a0] sm:$0xff]
    %v3601 = vld [vmem:[#allocation9 + $0x3a8] sm:$0xff]
    %v3602 = vld [vmem:[#allocation9 + $0x3b0] sm:$0xff]
    %v3603 = vld [vmem:[#allocation9 + $0x3b8] sm:$0xff]
    %v3604 = vld [vmem:[#allocation9 + $0x3c0] sm:$0xff]
    %v3605 = vld [vmem:[#allocation9 + $0x3c8] sm:$0xff]
    %v3606 = vld [vmem:[#allocation9 + $0x3d0] sm:$0xff]
    %v3607 = vld [vmem:[#allocation9 + $0x3d8] sm:$0xff]
    %v3608 = vld [vmem:[#allocation9 + $0x3e0] sm:$0xff]
    %v3609 = vld [vmem:[#allocation9 + $0x3e8] sm:$0xff]
    %v3610 = vld [vmem:[#allocation9 + $0x3f0] sm:$0xff]
    %v3611 = vld [vmem:[#allocation9 + $0x3f8] sm:$0xff]
    %v3612 = vld [vmem:[#allocation9 + $0x400] sm:$0xff]
    %v3613 = vld [vmem:[#allocation9 + $0x408] sm:$0xff]
    %v3614 = vld [vmem:[#allocation9 + $0x410] sm:$0xff]
    %v3615 = vld [vmem:[#allocation9 + $0x418] sm:$0xff]
    %v3616 = vld [vmem:[#allocation9 + $0x420] sm:$0xff]
    %v3617 = vld [vmem:[#allocation9 + $0x428] sm:$0xff]
    %v3618 = vld [vmem:[#allocation9 + $0x430] sm:$0xff]
    %v3619 = vld [vmem:[#allocation9 + $0x438] sm:$0xff]
    %v3620 = vld [vmem:[#allocation9 + $0x440] sm:$0xff]
    %v3621 = vld [vmem:[#allocation9 + $0x448] sm:$0xff]
    %v3622 = vld [vmem:[#allocation9 + $0x450] sm:$0xff]
    %v3623 = vld [vmem:[#allocation9 + $0x458] sm:$0xff]
    %v3624 = vld [vmem:[#allocation9 + $0x460] sm:$0xff]
    %v3625 = vld [vmem:[#allocation9 + $0x468] sm:$0xff]
    %v3626 = vld [vmem:[#allocation9 + $0x470] sm:$0xff]
    %v3627 = vld [vmem:[#allocation9 + $0x478] sm:$0xff]
    %v3628 = vld [vmem:[#allocation9 + $0x480] sm:$0xff]
    %v3629 = vld [vmem:[#allocation9 + $0x488] sm:$0xff]
    %v3630 = vld [vmem:[#allocation9 + $0x490] sm:$0xff]
    %v3631 = vld [vmem:[#allocation9 + $0x498] sm:$0xff]
    %v3632 = vld [vmem:[#allocation9 + $0x4a0] sm:$0xff]
    %v3633 = vld [vmem:[#allocation9 + $0x4a8] sm:$0xff]
    %v3634 = vld [vmem:[#allocation9 + $0x4b0] sm:$0xff]
    %v3635 = vld [vmem:[#allocation9 + $0x4b8] sm:$0xff]
    %v3636 = vld [vmem:[#allocation9 + $0x4c0] sm:$0xff]
    %v3637 = vld [vmem:[#allocation9 + $0x4c8] sm:$0xff]
    %v3638 = vld [vmem:[#allocation9 + $0x4d0] sm:$0xff]
    %v3639 = vld [vmem:[#allocation9 + $0x4d8] sm:$0xff]
    %v3640 = vld [vmem:[#allocation9 + $0x4e0] sm:$0xff]
    %v3641 = vld [vmem:[#allocation9 + $0x4e8] sm:$0xff]
    %v3642 = vld [vmem:[#allocation9 + $0x4f0] sm:$0xff]
    %v3643 = vld [vmem:[#allocation9 + $0x4f8] sm:$0xff]
    %v3644 = vld [vmem:[#allocation9 + $0x500] sm:$0xff]
    %v3645 = vld [vmem:[#allocation9 + $0x508] sm:$0xff]
    %v3646 = vld [vmem:[#allocation9 + $0x510] sm:$0xff]
    %v3647 = vld [vmem:[#allocation9 + $0x518] sm:$0xff]
    %v3648 = vld [vmem:[#allocation9 + $0x520] sm:$0xff]
    %v3649 = vld [vmem:[#allocation9 + $0x528] sm:$0xff]
    %v3650 = vld [vmem:[#allocation9 + $0x530] sm:$0xff]
    %v3651 = vld [vmem:[#allocation9 + $0x538] sm:$0xff]
    %v3652 = vld [vmem:[#allocation9 + $0x540] sm:$0xff]
    %v3653 = vld [vmem:[#allocation9 + $0x548] sm:$0xff]
    %v3654 = vld [vmem:[#allocation9 + $0x550] sm:$0xff]
    %v3655 = vld [vmem:[#allocation9 + $0x558] sm:$0xff]
    %v3656 = vld [vmem:[#allocation9 + $0x560] sm:$0xff]
    %v3657 = vld [vmem:[#allocation9 + $0x568] sm:$0xff]
    %v3658 = vld [vmem:[#allocation9 + $0x570] sm:$0xff]
    %v3659 = vld [vmem:[#allocation9 + $0x578] sm:$0xff]
    %v3660 = vld [vmem:[#allocation9 + $0x580] sm:$0xff]
    %v3661 = vld [vmem:[#allocation9 + $0x588] sm:$0xff]
    %v3662 = vld [vmem:[#allocation9 + $0x590] sm:$0xff]
    %v3663 = vld [vmem:[#allocation9 + $0x598] sm:$0xff]
    %v3664 = vld [vmem:[#allocation9 + $0x5a0] sm:$0xff]
    %v3665 = vld [vmem:[#allocation9 + $0x5a8] sm:$0xff]
    %v3666 = vld [vmem:[#allocation9 + $0x5b0] sm:$0xff]
    %v3667 = vld [vmem:[#allocation9 + $0x5b8] sm:$0xff]
    %v3668 = vld [vmem:[#allocation9 + $0x5c0] sm:$0xff]
    %v3669 = vld [vmem:[#allocation9 + $0x5c8] sm:$0xff]
    %v3670 = vld [vmem:[#allocation9 + $0x5d0] sm:$0xff]
    %v3671 = vld [vmem:[#allocation9 + $0x5d8] sm:$0xff]
    %v3672 = vld [vmem:[#allocation9 + $0x5e0] sm:$0xff]
    %v3673 = vld [vmem:[#allocation9 + $0x5e8] sm:$0xff]
    %v3674 = vld [vmem:[#allocation9 + $0x5f0] sm:$0xff]
    %v3675 = vld [vmem:[#allocation9 + $0x5f8] sm:$0xff]
    %v3676 = vld [vmem:[#allocation9 + $0x600] sm:$0xff]
    %v3677 = vld [vmem:[#allocation9 + $0x608] sm:$0xff]
    %v3678 = vld [vmem:[#allocation9 + $0x610] sm:$0xff]
    %v3679 = vld [vmem:[#allocation9 + $0x618] sm:$0xff]
    %v3680 = vld [vmem:[#allocation9 + $0x620] sm:$0xff]
    %v3681 = vld [vmem:[#allocation9 + $0x628] sm:$0xff]
    %v3682 = vld [vmem:[#allocation9 + $0x630] sm:$0xff]
    %v3683 = vld [vmem:[#allocation9 + $0x638] sm:$0xff]
    %v3684 = vld [vmem:[#allocation9 + $0x640] sm:$0xff]
    %v3685 = vld [vmem:[#allocation9 + $0x648] sm:$0xff]
    %v3686 = vld [vmem:[#allocation9 + $0x650] sm:$0xff]
    %v3687 = vld [vmem:[#allocation9 + $0x658] sm:$0xff]
    %v3688 = vld [vmem:[#allocation9 + $0x660] sm:$0xff]
    %v3689 = vld [vmem:[#allocation9 + $0x668] sm:$0xff]
    %v3690 = vld [vmem:[#allocation9 + $0x670] sm:$0xff]
    %v3691 = vld [vmem:[#allocation9 + $0x678] sm:$0xff]
    %v3692 = vld [vmem:[#allocation9 + $0x680] sm:$0xff]
    %v3693 = vld [vmem:[#allocation9 + $0x688] sm:$0xff]
    %v3694 = vld [vmem:[#allocation9 + $0x690] sm:$0xff]
    %v3695 = vld [vmem:[#allocation9 + $0x698] sm:$0xff]
    %v3696 = vld [vmem:[#allocation9 + $0x6a0] sm:$0xff]
    %v3697 = vld [vmem:[#allocation9 + $0x6a8] sm:$0xff]
    %v3698 = vld [vmem:[#allocation9 + $0x6b0] sm:$0xff]
    %v3699 = vld [vmem:[#allocation9 + $0x6b8] sm:$0xff]
    %v3700 = vld [vmem:[#allocation9 + $0x6c0] sm:$0xff]
    %v3701 = vld [vmem:[#allocation9 + $0x6c8] sm:$0xff]
    %v3702 = vld [vmem:[#allocation9 + $0x6d0] sm:$0xff]
    %v3703 = vld [vmem:[#allocation9 + $0x6d8] sm:$0xff]
    %v3704 = vld [vmem:[#allocation9 + $0x6e0] sm:$0xff]
    %v3705 = vld [vmem:[#allocation9 + $0x6e8] sm:$0xff]
    %v3706 = vld [vmem:[#allocation9 + $0x6f0] sm:$0xff]
    %v3707 = vld [vmem:[#allocation9 + $0x6f8] sm:$0xff]
    %v3708 = vld [vmem:[#allocation9 + $0x700] sm:$0xff]
    %v3709 = vld [vmem:[#allocation9 + $0x708] sm:$0xff]
    %v3710 = vld [vmem:[#allocation9 + $0x710] sm:$0xff]
    %v3711 = vld [vmem:[#allocation9 + $0x718] sm:$0xff]
    %v3712 = vld [vmem:[#allocation9 + $0x720] sm:$0xff]
    %v3713 = vld [vmem:[#allocation9 + $0x728] sm:$0xff]
    %v3714 = vld [vmem:[#allocation9 + $0x730] sm:$0xff]
    %v3715 = vld [vmem:[#allocation9 + $0x738] sm:$0xff]
    %v3716 = vld [vmem:[#allocation9 + $0x740] sm:$0xff]
    %v3717 = vld [vmem:[#allocation9 + $0x748] sm:$0xff]
    %v3718 = vld [vmem:[#allocation9 + $0x750] sm:$0xff]
    %v3719 = vld [vmem:[#allocation9 + $0x758] sm:$0xff]
    %v3720 = vld [vmem:[#allocation9 + $0x760] sm:$0xff]
    %v3721 = vld [vmem:[#allocation9 + $0x768] sm:$0xff]
    %v3722 = vld [vmem:[#allocation9 + $0x770] sm:$0xff]
    %v3723 = vld [vmem:[#allocation9 + $0x778] sm:$0xff]
    %v3724 = vld [vmem:[#allocation9 + $0x780] sm:$0xff]
    %v3725 = vld [vmem:[#allocation9 + $0x788] sm:$0xff]
    %v3726 = vld [vmem:[#allocation9 + $0x790] sm:$0xff]
    %v3727 = vld [vmem:[#allocation9 + $0x798] sm:$0xff]
    %v3728 = vld [vmem:[#allocation9 + $0x7a0] sm:$0xff]
    %v3729 = vld [vmem:[#allocation9 + $0x7a8] sm:$0xff]
    %v3730 = vld [vmem:[#allocation9 + $0x7b0] sm:$0xff]
    %v3731 = vld [vmem:[#allocation9 + $0x7b8] sm:$0xff]
    %v3732 = vld [vmem:[#allocation9 + $0x7c0] sm:$0xff]
    %v3733 = vld [vmem:[#allocation9 + $0x7c8] sm:$0xff]
    %v3734 = vld [vmem:[#allocation9 + $0x7d0] sm:$0xff]
    %v3735 = vld [vmem:[#allocation9 + $0x7d8] sm:$0xff]
    %v3736 = vld [vmem:[#allocation9 + $0x7e0] sm:$0xff]
    %v3737 = vld [vmem:[#allocation9 + $0x7e8] sm:$0xff]
    %v3738 = vld [vmem:[#allocation9 + $0x7f0] sm:$0xff]
    %v3739 = vld [vmem:[#allocation9 + $0x7f8] sm:$0xff]
    %v3740 = vld [vmem:[#allocation11] sm:$0xf]
    %v3742 = vperm.slane %v3740, 0
    %v3743 = vperm.slane %v3740, 1
    %v3744 = vperm.slane %v3740, 2
    %v3745 = vperm.slane %v3740, 3
    %v4006 = vunpack.c.l.b16 %v3484
    %v4007 = vunpack.c.h.b16 %v3484
    %v4008 = vunpack.c.l.b16 %v3485
    %v4009 = vunpack.c.h.b16 %v3485
    %v4010 = vunpack.c.l.b16 %v3486
    %v4011 = vunpack.c.h.b16 %v3486
    %v4012 = vunpack.c.l.b16 %v3487
    %v4013 = vunpack.c.h.b16 %v3487
    %v4014 = vunpack.c.l.b16 %v3488
    %v4015 = vunpack.c.h.b16 %v3488
    %v4016 = vunpack.c.l.b16 %v3489
    %v4017 = vunpack.c.h.b16 %v3489
    %v4018 = vunpack.c.l.b16 %v3490
    %v4019 = vunpack.c.h.b16 %v3490
    %v4020 = vunpack.c.l.b16 %v3491
    %v4021 = vunpack.c.h.b16 %v3491
    %v4022 = vunpack.c.l.b16 %v3492
    %v4023 = vunpack.c.h.b16 %v3492
    %v4024 = vunpack.c.l.b16 %v3493
    %v4025 = vunpack.c.h.b16 %v3493
    %v4026 = vunpack.c.l.b16 %v3494
    %v4027 = vunpack.c.h.b16 %v3494
    %v4028 = vunpack.c.l.b16 %v3495
    %v4029 = vunpack.c.h.b16 %v3495
    %v4030 = vunpack.c.l.b16 %v3496
    %v4031 = vunpack.c.h.b16 %v3496
    %v4032 = vunpack.c.l.b16 %v3497
    %v4033 = vunpack.c.h.b16 %v3497
    %v4034 = vunpack.c.l.b16 %v3498
    %v4035 = vunpack.c.h.b16 %v3498
    %v4036 = vunpack.c.l.b16 %v3499
    %v4037 = vunpack.c.h.b16 %v3499
    %v4038 = vunpack.c.l.b16 %v3500
    %v4039 = vunpack.c.h.b16 %v3500
    %v4040 = vunpack.c.l.b16 %v3501
    %v4041 = vunpack.c.h.b16 %v3501
    %v4042 = vunpack.c.l.b16 %v3502
    %v4043 = vunpack.c.h.b16 %v3502
    %v4044 = vunpack.c.l.b16 %v3503
    %v4045 = vunpack.c.h.b16 %v3503
    %v4046 = vunpack.c.l.b16 %v3504
    %v4047 = vunpack.c.h.b16 %v3504
    %v4048 = vunpack.c.l.b16 %v3505
    %v4049 = vunpack.c.h.b16 %v3505
    %v4050 = vunpack.c.l.b16 %v3506
    %v4051 = vunpack.c.h.b16 %v3506
    %v4052 = vunpack.c.l.b16 %v3507
    %v4053 = vunpack.c.h.b16 %v3507
    %v4054 = vunpack.c.l.b16 %v3508
    %v4055 = vunpack.c.h.b16 %v3508
    %v4056 = vunpack.c.l.b16 %v3509
    %v4057 = vunpack.c.h.b16 %v3509
    %v4058 = vunpack.c.l.b16 %v3510
    %v4059 = vunpack.c.h.b16 %v3510
    %v4060 = vunpack.c.l.b16 %v3511
    %v4061 = vunpack.c.h.b16 %v3511
    %v4062 = vunpack.c.l.b16 %v3512
    %v4063 = vunpack.c.h.b16 %v3512
    %v4064 = vunpack.c.l.b16 %v3513
    %v4065 = vunpack.c.h.b16 %v3513
    %v4066 = vunpack.c.l.b16 %v3514
    %v4067 = vunpack.c.h.b16 %v3514
    %v4068 = vunpack.c.l.b16 %v3515
    %v4069 = vunpack.c.h.b16 %v3515
    %v4070 = vunpack.c.l.b16 %v3516
    %v4071 = vunpack.c.h.b16 %v3516
    %v4072 = vunpack.c.l.b16 %v3517
    %v4073 = vunpack.c.h.b16 %v3517
    %v4074 = vunpack.c.l.b16 %v3518
    %v4075 = vunpack.c.h.b16 %v3518
    %v4076 = vunpack.c.l.b16 %v3519
    %v4077 = vunpack.c.h.b16 %v3519
    %v4078 = vunpack.c.l.b16 %v3520
    %v4079 = vunpack.c.h.b16 %v3520
    %v4080 = vunpack.c.l.b16 %v3521
    %v4081 = vunpack.c.h.b16 %v3521
    %v4082 = vunpack.c.l.b16 %v3522
    %v4083 = vunpack.c.h.b16 %v3522
    %v4084 = vunpack.c.l.b16 %v3523
    %v4085 = vunpack.c.h.b16 %v3523
    %v4086 = vunpack.c.l.b16 %v3524
    %v4087 = vunpack.c.h.b16 %v3524
    %v4088 = vunpack.c.l.b16 %v3525
    %v4089 = vunpack.c.h.b16 %v3525
    %v4090 = vunpack.c.l.b16 %v3526
    %v4091 = vunpack.c.h.b16 %v3526
    %v4092 = vunpack.c.l.b16 %v3527
    %v4093 = vunpack.c.h.b16 %v3527
    %v4094 = vunpack.c.l.b16 %v3528
    %v4095 = vunpack.c.h.b16 %v3528
    %v4096 = vunpack.c.l.b16 %v3529
    %v4097 = vunpack.c.h.b16 %v3529
    %v4098 = vunpack.c.l.b16 %v3530
    %v4099 = vunpack.c.h.b16 %v3530
    %v4100 = vunpack.c.l.b16 %v3531
    %v4101 = vunpack.c.h.b16 %v3531
    %v4102 = vunpack.c.l.b16 %v3532
    %v4103 = vunpack.c.h.b16 %v3532
    %v4104 = vunpack.c.l.b16 %v3533
    %v4105 = vunpack.c.h.b16 %v3533
    %v4106 = vunpack.c.l.b16 %v3534
    %v4107 = vunpack.c.h.b16 %v3534
    %v4108 = vunpack.c.l.b16 %v3535
    %v4109 = vunpack.c.h.b16 %v3535
    %v4110 = vunpack.c.l.b16 %v3536
    %v4111 = vunpack.c.h.b16 %v3536
    %v4112 = vunpack.c.l.b16 %v3537
    %v4113 = vunpack.c.h.b16 %v3537
    %v4114 = vunpack.c.l.b16 %v3538
    %v4115 = vunpack.c.h.b16 %v3538
    %v4116 = vunpack.c.l.b16 %v3539
    %v4117 = vunpack.c.h.b16 %v3539
    %v4118 = vunpack.c.l.b16 %v3540
    %v4119 = vunpack.c.h.b16 %v3540
    %v4120 = vunpack.c.l.b16 %v3541
    %v4121 = vunpack.c.h.b16 %v3541
    %v4122 = vunpack.c.l.b16 %v3542
    %v4123 = vunpack.c.h.b16 %v3542
    %v4124 = vunpack.c.l.b16 %v3543
    %v4125 = vunpack.c.h.b16 %v3543
    %v4126 = vunpack.c.l.b16 %v3544
    %v4127 = vunpack.c.h.b16 %v3544
    %v4128 = vunpack.c.l.b16 %v3545
    %v4129 = vunpack.c.h.b16 %v3545
    %v4130 = vunpack.c.l.b16 %v3546
    %v4131 = vunpack.c.h.b16 %v3546
    %v4132 = vunpack.c.l.b16 %v3547
    %v4133 = vunpack.c.h.b16 %v3547
    %v4134 = vunpack.c.l.b16 %v3548
    %v4135 = vunpack.c.h.b16 %v3548
    %v4136 = vunpack.c.l.b16 %v3549
    %v4137 = vunpack.c.h.b16 %v3549
    %v4138 = vunpack.c.l.b16 %v3550
    %v4139 = vunpack.c.h.b16 %v3550
    %v4140 = vunpack.c.l.b16 %v3551
    %v4141 = vunpack.c.h.b16 %v3551
    %v4142 = vunpack.c.l.b16 %v3552
    %v4143 = vunpack.c.h.b16 %v3552
    %v4144 = vunpack.c.l.b16 %v3553
    %v4145 = vunpack.c.h.b16 %v3553
    %v4146 = vunpack.c.l.b16 %v3554
    %v4147 = vunpack.c.h.b16 %v3554
    %v4148 = vunpack.c.l.b16 %v3555
    %v4149 = vunpack.c.h.b16 %v3555
    %v4150 = vunpack.c.l.b16 %v3556
    %v4151 = vunpack.c.h.b16 %v3556
    %v4152 = vunpack.c.l.b16 %v3557
    %v4153 = vunpack.c.h.b16 %v3557
    %v4154 = vunpack.c.l.b16 %v3558
    %v4155 = vunpack.c.h.b16 %v3558
    %v4156 = vunpack.c.l.b16 %v3559
    %v4157 = vunpack.c.h.b16 %v3559
    %v4158 = vunpack.c.l.b16 %v3560
    %v4159 = vunpack.c.h.b16 %v3560
    %v4160 = vunpack.c.l.b16 %v3561
    %v4161 = vunpack.c.h.b16 %v3561
    %v4162 = vunpack.c.l.b16 %v3562
    %v4163 = vunpack.c.h.b16 %v3562
    %v4164 = vunpack.c.l.b16 %v3563
    %v4165 = vunpack.c.h.b16 %v3563
    %v4166 = vunpack.c.l.b16 %v3564
    %v4167 = vunpack.c.h.b16 %v3564
    %v4168 = vunpack.c.l.b16 %v3565
    %v4169 = vunpack.c.h.b16 %v3565
    %v4170 = vunpack.c.l.b16 %v3566
    %v4171 = vunpack.c.h.b16 %v3566
    %v4172 = vunpack.c.l.b16 %v3567
    %v4173 = vunpack.c.h.b16 %v3567
    %v4174 = vunpack.c.l.b16 %v3568
    %v4175 = vunpack.c.h.b16 %v3568
    %v4176 = vunpack.c.l.b16 %v3569
    %v4177 = vunpack.c.h.b16 %v3569
    %v4178 = vunpack.c.l.b16 %v3570
    %v4179 = vunpack.c.h.b16 %v3570
    %v4180 = vunpack.c.l.b16 %v3571
    %v4181 = vunpack.c.h.b16 %v3571
    %v4182 = vunpack.c.l.b16 %v3572
    %v4183 = vunpack.c.h.b16 %v3572
    %v4184 = vunpack.c.l.b16 %v3573
    %v4185 = vunpack.c.h.b16 %v3573
    %v4186 = vunpack.c.l.b16 %v3574
    %v4187 = vunpack.c.h.b16 %v3574
    %v4188 = vunpack.c.l.b16 %v3575
    %v4189 = vunpack.c.h.b16 %v3575
    %v4190 = vunpack.c.l.b16 %v3576
    %v4191 = vunpack.c.h.b16 %v3576
    %v4192 = vunpack.c.l.b16 %v3577
    %v4193 = vunpack.c.h.b16 %v3577
    %v4194 = vunpack.c.l.b16 %v3578
    %v4195 = vunpack.c.h.b16 %v3578
    %v4196 = vunpack.c.l.b16 %v3579
    %v4197 = vunpack.c.h.b16 %v3579
    %v4198 = vunpack.c.l.b16 %v3580
    %v4199 = vunpack.c.h.b16 %v3580
    %v4200 = vunpack.c.l.b16 %v3581
    %v4201 = vunpack.c.h.b16 %v3581
    %v4202 = vunpack.c.l.b16 %v3582
    %v4203 = vunpack.c.h.b16 %v3582
    %v4204 = vunpack.c.l.b16 %v3583
    %v4205 = vunpack.c.h.b16 %v3583
    %v4206 = vunpack.c.l.b16 %v3584
    %v4207 = vunpack.c.h.b16 %v3584
    %v4208 = vunpack.c.l.b16 %v3585
    %v4209 = vunpack.c.h.b16 %v3585
    %v4210 = vunpack.c.l.b16 %v3586
    %v4211 = vunpack.c.h.b16 %v3586
    %v4212 = vunpack.c.l.b16 %v3587
    %v4213 = vunpack.c.h.b16 %v3587
    %v4214 = vunpack.c.l.b16 %v3588
    %v4215 = vunpack.c.h.b16 %v3588
    %v4216 = vunpack.c.l.b16 %v3589
    %v4217 = vunpack.c.h.b16 %v3589
    %v4218 = vunpack.c.l.b16 %v3590
    %v4219 = vunpack.c.h.b16 %v3590
    %v4220 = vunpack.c.l.b16 %v3591
    %v4221 = vunpack.c.h.b16 %v3591
    %v4222 = vunpack.c.l.b16 %v3592
    %v4223 = vunpack.c.h.b16 %v3592
    %v4224 = vunpack.c.l.b16 %v3593
    %v4225 = vunpack.c.h.b16 %v3593
    %v4226 = vunpack.c.l.b16 %v3594
    %v4227 = vunpack.c.h.b16 %v3594
    %v4228 = vunpack.c.l.b16 %v3595
    %v4229 = vunpack.c.h.b16 %v3595
    %v4230 = vunpack.c.l.b16 %v3596
    %v4231 = vunpack.c.h.b16 %v3596
    %v4232 = vunpack.c.l.b16 %v3597
    %v4233 = vunpack.c.h.b16 %v3597
    %v4234 = vunpack.c.l.b16 %v3598
    %v4235 = vunpack.c.h.b16 %v3598
    %v4236 = vunpack.c.l.b16 %v3599
    %v4237 = vunpack.c.h.b16 %v3599
    %v4238 = vunpack.c.l.b16 %v3600
    %v4239 = vunpack.c.h.b16 %v3600
    %v4240 = vunpack.c.l.b16 %v3601
    %v4241 = vunpack.c.h.b16 %v3601
    %v4242 = vunpack.c.l.b16 %v3602
    %v4243 = vunpack.c.h.b16 %v3602
    %v4244 = vunpack.c.l.b16 %v3603
    %v4245 = vunpack.c.h.b16 %v3603
    %v4246 = vunpack.c.l.b16 %v3604
    %v4247 = vunpack.c.h.b16 %v3604
    %v4248 = vunpack.c.l.b16 %v3605
    %v4249 = vunpack.c.h.b16 %v3605
    %v4250 = vunpack.c.l.b16 %v3606
    %v4251 = vunpack.c.h.b16 %v3606
    %v4252 = vunpack.c.l.b16 %v3607
    %v4253 = vunpack.c.h.b16 %v3607
    %v4254 = vunpack.c.l.b16 %v3608
    %v4255 = vunpack.c.h.b16 %v3608
    %v4256 = vunpack.c.l.b16 %v3609
    %v4257 = vunpack.c.h.b16 %v3609
    %v4258 = vunpack.c.l.b16 %v3610
    %v4259 = vunpack.c.h.b16 %v3610
    %v4260 = vunpack.c.l.b16 %v3611
    %v4261 = vunpack.c.h.b16 %v3611
    %v4262 = vunpack.c.l.b16 %v3612
    %v4263 = vunpack.c.h.b16 %v3612
    %v4264 = vunpack.c.l.b16 %v3613
    %v4265 = vunpack.c.h.b16 %v3613
    %v4266 = vunpack.c.l.b16 %v3614
    %v4267 = vunpack.c.h.b16 %v3614
    %v4268 = vunpack.c.l.b16 %v3615
    %v4269 = vunpack.c.h.b16 %v3615
    %v4270 = vunpack.c.l.b16 %v3616
    %v4271 = vunpack.c.h.b16 %v3616
    %v4272 = vunpack.c.l.b16 %v3617
    %v4273 = vunpack.c.h.b16 %v3617
    %v4274 = vunpack.c.l.b16 %v3618
    %v4275 = vunpack.c.h.b16 %v3618
    %v4276 = vunpack.c.l.b16 %v3619
    %v4277 = vunpack.c.h.b16 %v3619
    %v4278 = vunpack.c.l.b16 %v3620
    %v4279 = vunpack.c.h.b16 %v3620
    %v4280 = vunpack.c.l.b16 %v3621
    %v4281 = vunpack.c.h.b16 %v3621
    %v4282 = vunpack.c.l.b16 %v3622
    %v4283 = vunpack.c.h.b16 %v3622
    %v4284 = vunpack.c.l.b16 %v3623
    %v4285 = vunpack.c.h.b16 %v3623
    %v4286 = vunpack.c.l.b16 %v3624
    %v4287 = vunpack.c.h.b16 %v3624
    %v4288 = vunpack.c.l.b16 %v3625
    %v4289 = vunpack.c.h.b16 %v3625
    %v4290 = vunpack.c.l.b16 %v3626
    %v4291 = vunpack.c.h.b16 %v3626
    %v4292 = vunpack.c.l.b16 %v3627
    %v4293 = vunpack.c.h.b16 %v3627
    %v4294 = vunpack.c.l.b16 %v3628
    %v4295 = vunpack.c.h.b16 %v3628
    %v4296 = vunpack.c.l.b16 %v3629
    %v4297 = vunpack.c.h.b16 %v3629
    %v4298 = vunpack.c.l.b16 %v3630
    %v4299 = vunpack.c.h.b16 %v3630
    %v4300 = vunpack.c.l.b16 %v3631
    %v4301 = vunpack.c.h.b16 %v3631
    %v4302 = vunpack.c.l.b16 %v3632
    %v4303 = vunpack.c.h.b16 %v3632
    %v4304 = vunpack.c.l.b16 %v3633
    %v4305 = vunpack.c.h.b16 %v3633
    %v4306 = vunpack.c.l.b16 %v3634
    %v4307 = vunpack.c.h.b16 %v3634
    %v4308 = vunpack.c.l.b16 %v3635
    %v4309 = vunpack.c.h.b16 %v3635
    %v4310 = vunpack.c.l.b16 %v3636
    %v4311 = vunpack.c.h.b16 %v3636
    %v4312 = vunpack.c.l.b16 %v3637
    %v4313 = vunpack.c.h.b16 %v3637
    %v4314 = vunpack.c.l.b16 %v3638
    %v4315 = vunpack.c.h.b16 %v3638
    %v4316 = vunpack.c.l.b16 %v3639
    %v4317 = vunpack.c.h.b16 %v3639
    %v4318 = vunpack.c.l.b16 %v3640
    %v4319 = vunpack.c.h.b16 %v3640
    %v4320 = vunpack.c.l.b16 %v3641
    %v4321 = vunpack.c.h.b16 %v3641
    %v4322 = vunpack.c.l.b16 %v3642
    %v4323 = vunpack.c.h.b16 %v3642
    %v4324 = vunpack.c.l.b16 %v3643
    %v4325 = vunpack.c.h.b16 %v3643
    %v4326 = vunpack.c.l.b16 %v3644
    %v4327 = vunpack.c.h.b16 %v3644
    %v4328 = vunpack.c.l.b16 %v3645
    %v4329 = vunpack.c.h.b16 %v3645
    %v4330 = vunpack.c.l.b16 %v3646
    %v4331 = vunpack.c.h.b16 %v3646
    %v4332 = vunpack.c.l.b16 %v3647
    %v4333 = vunpack.c.h.b16 %v3647
    %v4334 = vunpack.c.l.b16 %v3648
    %v4335 = vunpack.c.h.b16 %v3648
    %v4336 = vunpack.c.l.b16 %v3649
    %v4337 = vunpack.c.h.b16 %v3649
    %v4338 = vunpack.c.l.b16 %v3650
    %v4339 = vunpack.c.h.b16 %v3650
    %v4340 = vunpack.c.l.b16 %v3651
    %v4341 = vunpack.c.h.b16 %v3651
    %v4342 = vunpack.c.l.b16 %v3652
    %v4343 = vunpack.c.h.b16 %v3652
    %v4344 = vunpack.c.l.b16 %v3653
    %v4345 = vunpack.c.h.b16 %v3653
    %v4346 = vunpack.c.l.b16 %v3654
    %v4347 = vunpack.c.h.b16 %v3654
    %v4348 = vunpack.c.l.b16 %v3655
    %v4349 = vunpack.c.h.b16 %v3655
    %v4350 = vunpack.c.l.b16 %v3656
    %v4351 = vunpack.c.h.b16 %v3656
    %v4352 = vunpack.c.l.b16 %v3657
    %v4353 = vunpack.c.h.b16 %v3657
    %v4354 = vunpack.c.l.b16 %v3658
    %v4355 = vunpack.c.h.b16 %v3658
    %v4356 = vunpack.c.l.b16 %v3659
    %v4357 = vunpack.c.h.b16 %v3659
    %v4358 = vunpack.c.l.b16 %v3660
    %v4359 = vunpack.c.h.b16 %v3660
    %v4360 = vunpack.c.l.b16 %v3661
    %v4361 = vunpack.c.h.b16 %v3661
    %v4362 = vunpack.c.l.b16 %v3662
    %v4363 = vunpack.c.h.b16 %v3662
    %v4364 = vunpack.c.l.b16 %v3663
    %v4365 = vunpack.c.h.b16 %v3663
    %v4366 = vunpack.c.l.b16 %v3664
    %v4367 = vunpack.c.h.b16 %v3664
    %v4368 = vunpack.c.l.b16 %v3665
    %v4369 = vunpack.c.h.b16 %v3665
    %v4370 = vunpack.c.l.b16 %v3666
    %v4371 = vunpack.c.h.b16 %v3666
    %v4372 = vunpack.c.l.b16 %v3667
    %v4373 = vunpack.c.h.b16 %v3667
    %v4374 = vunpack.c.l.b16 %v3668
    %v4375 = vunpack.c.h.b16 %v3668
    %v4376 = vunpack.c.l.b16 %v3669
    %v4377 = vunpack.c.h.b16 %v3669
    %v4378 = vunpack.c.l.b16 %v3670
    %v4379 = vunpack.c.h.b16 %v3670
    %v4380 = vunpack.c.l.b16 %v3671
    %v4381 = vunpack.c.h.b16 %v3671
    %v4382 = vunpack.c.l.b16 %v3672
    %v4383 = vunpack.c.h.b16 %v3672
    %v4384 = vunpack.c.l.b16 %v3673
    %v4385 = vunpack.c.h.b16 %v3673
    %v4386 = vunpack.c.l.b16 %v3674
    %v4387 = vunpack.c.h.b16 %v3674
    %v4388 = vunpack.c.l.b16 %v3675
    %v4389 = vunpack.c.h.b16 %v3675
    %v4390 = vunpack.c.l.b16 %v3676
    %v4391 = vunpack.c.h.b16 %v3676
    %v4392 = vunpack.c.l.b16 %v3677
    %v4393 = vunpack.c.h.b16 %v3677
    %v4394 = vunpack.c.l.b16 %v3678
    %v4395 = vunpack.c.h.b16 %v3678
    %v4396 = vunpack.c.l.b16 %v3679
    %v4397 = vunpack.c.h.b16 %v3679
    %v4398 = vunpack.c.l.b16 %v3680
    %v4399 = vunpack.c.h.b16 %v3680
    %v4400 = vunpack.c.l.b16 %v3681
    %v4401 = vunpack.c.h.b16 %v3681
    %v4402 = vunpack.c.l.b16 %v3682
    %v4403 = vunpack.c.h.b16 %v3682
    %v4404 = vunpack.c.l.b16 %v3683
    %v4405 = vunpack.c.h.b16 %v3683
    %v4406 = vunpack.c.l.b16 %v3684
    %v4407 = vunpack.c.h.b16 %v3684
    %v4408 = vunpack.c.l.b16 %v3685
    %v4409 = vunpack.c.h.b16 %v3685
    %v4410 = vunpack.c.l.b16 %v3686
    %v4411 = vunpack.c.h.b16 %v3686
    %v4412 = vunpack.c.l.b16 %v3687
    %v4413 = vunpack.c.h.b16 %v3687
    %v4414 = vunpack.c.l.b16 %v3688
    %v4415 = vunpack.c.h.b16 %v3688
    %v4416 = vunpack.c.l.b16 %v3689
    %v4417 = vunpack.c.h.b16 %v3689
    %v4418 = vunpack.c.l.b16 %v3690
    %v4419 = vunpack.c.h.b16 %v3690
    %v4420 = vunpack.c.l.b16 %v3691
    %v4421 = vunpack.c.h.b16 %v3691
    %v4422 = vunpack.c.l.b16 %v3692
    %v4423 = vunpack.c.h.b16 %v3692
    %v4424 = vunpack.c.l.b16 %v3693
    %v4425 = vunpack.c.h.b16 %v3693
    %v4426 = vunpack.c.l.b16 %v3694
    %v4427 = vunpack.c.h.b16 %v3694
    %v4428 = vunpack.c.l.b16 %v3695
    %v4429 = vunpack.c.h.b16 %v3695
    %v4430 = vunpack.c.l.b16 %v3696
    %v4431 = vunpack.c.h.b16 %v3696
    %v4432 = vunpack.c.l.b16 %v3697
    %v4433 = vunpack.c.h.b16 %v3697
    %v4434 = vunpack.c.l.b16 %v3698
    %v4435 = vunpack.c.h.b16 %v3698
    %v4436 = vunpack.c.l.b16 %v3699
    %v4437 = vunpack.c.h.b16 %v3699
    %v4438 = vunpack.c.l.b16 %v3700
    %v4439 = vunpack.c.h.b16 %v3700
    %v4440 = vunpack.c.l.b16 %v3701
    %v4441 = vunpack.c.h.b16 %v3701
    %v4442 = vunpack.c.l.b16 %v3702
    %v4443 = vunpack.c.h.b16 %v3702
    %v4444 = vunpack.c.l.b16 %v3703
    %v4445 = vunpack.c.h.b16 %v3703
    %v4446 = vunpack.c.l.b16 %v3704
    %v4447 = vunpack.c.h.b16 %v3704
    %v4448 = vunpack.c.l.b16 %v3705
    %v4449 = vunpack.c.h.b16 %v3705
    %v4450 = vunpack.c.l.b16 %v3706
    %v4451 = vunpack.c.h.b16 %v3706
    %v4452 = vunpack.c.l.b16 %v3707
    %v4453 = vunpack.c.h.b16 %v3707
    %v4454 = vunpack.c.l.b16 %v3708
    %v4455 = vunpack.c.h.b16 %v3708
    %v4456 = vunpack.c.l.b16 %v3709
    %v4457 = vunpack.c.h.b16 %v3709
    %v4458 = vunpack.c.l.b16 %v3710
    %v4459 = vunpack.c.h.b16 %v3710
    %v4460 = vunpack.c.l.b16 %v3711
    %v4461 = vunpack.c.h.b16 %v3711
    %v4462 = vunpack.c.l.b16 %v3712
    %v4463 = vunpack.c.h.b16 %v3712
    %v4464 = vunpack.c.l.b16 %v3713
    %v4465 = vunpack.c.h.b16 %v3713
    %v4466 = vunpack.c.l.b16 %v3714
    %v4467 = vunpack.c.h.b16 %v3714
    %v4468 = vunpack.c.l.b16 %v3715
    %v4469 = vunpack.c.h.b16 %v3715
    %v4470 = vunpack.c.l.b16 %v3716
    %v4471 = vunpack.c.h.b16 %v3716
    %v4472 = vunpack.c.l.b16 %v3717
    %v4473 = vunpack.c.h.b16 %v3717
    %v4474 = vunpack.c.l.b16 %v3718
    %v4475 = vunpack.c.h.b16 %v3718
    %v4476 = vunpack.c.l.b16 %v3719
    %v4477 = vunpack.c.h.b16 %v3719
    %v4478 = vunpack.c.l.b16 %v3720
    %v4479 = vunpack.c.h.b16 %v3720
    %v4480 = vunpack.c.l.b16 %v3721
    %v4481 = vunpack.c.h.b16 %v3721
    %v4482 = vunpack.c.l.b16 %v3722
    %v4483 = vunpack.c.h.b16 %v3722
    %v4484 = vunpack.c.l.b16 %v3723
    %v4485 = vunpack.c.h.b16 %v3723
    %v4486 = vunpack.c.l.b16 %v3724
    %v4487 = vunpack.c.h.b16 %v3724
    %v4488 = vunpack.c.l.b16 %v3725
    %v4489 = vunpack.c.h.b16 %v3725
    %v4490 = vunpack.c.l.b16 %v3726
    %v4491 = vunpack.c.h.b16 %v3726
    %v4492 = vunpack.c.l.b16 %v3727
    %v4493 = vunpack.c.h.b16 %v3727
    %v4494 = vunpack.c.l.b16 %v3728
    %v4495 = vunpack.c.h.b16 %v3728
    %v4496 = vunpack.c.l.b16 %v3729
    %v4497 = vunpack.c.h.b16 %v3729
    %v4498 = vunpack.c.l.b16 %v3730
    %v4499 = vunpack.c.h.b16 %v3730
    %v4500 = vunpack.c.l.b16 %v3731
    %v4501 = vunpack.c.h.b16 %v3731
    %v4502 = vunpack.c.l.b16 %v3732
    %v4503 = vunpack.c.h.b16 %v3732
    %v4504 = vunpack.c.l.b16 %v3733
    %v4505 = vunpack.c.h.b16 %v3733
    %v4506 = vunpack.c.l.b16 %v3734
    %v4507 = vunpack.c.h.b16 %v3734
    %v4508 = vunpack.c.l.b16 %v3735
    %v4509 = vunpack.c.h.b16 %v3735
    %v4510 = vunpack.c.l.b16 %v3736
    %v4511 = vunpack.c.h.b16 %v3736
    %v4512 = vunpack.c.l.b16 %v3737
    %v4513 = vunpack.c.h.b16 %v3737
    %v4514 = vunpack.c.l.b16 %v3738
    %v4515 = vunpack.c.h.b16 %v3738
    %v4516 = vunpack.c.l.b16 %v3739
    %v4517 = vunpack.c.h.b16 %v3739
    %v4518 = vpack.c.b16 %v4010, %v4006
    %v4519 = vpack.c.b16 %v4011, %v4007
    %v4520 = vpack.c.b16 %v4012, %v4008
    %v4521 = vpack.c.b16 %v4013, %v4009
    %v4522 = vpack.c.b16 %v4018, %v4014
    %v4523 = vpack.c.b16 %v4019, %v4015
    %v4524 = vpack.c.b16 %v4020, %v4016
    %v4525 = vpack.c.b16 %v4021, %v4017
    %v4526 = vpack.c.b16 %v4026, %v4022
    %v4527 = vpack.c.b16 %v4027, %v4023
    %v4528 = vpack.c.b16 %v4028, %v4024
    %v4529 = vpack.c.b16 %v4029, %v4025
    %v4530 = vpack.c.b16 %v4034, %v4030
    %v4531 = vpack.c.b16 %v4035, %v4031
    %v4532 = vpack.c.b16 %v4036, %v4032
    %v4533 = vpack.c.b16 %v4037, %v4033
    %v4534 = vpack.c.b16 %v4042, %v4038
    %v4535 = vpack.c.b16 %v4043, %v4039
    %v4536 = vpack.c.b16 %v4044, %v4040
    %v4537 = vpack.c.b16 %v4045, %v4041
    %v4538 = vpack.c.b16 %v4050, %v4046
    %v4539 = vpack.c.b16 %v4051, %v4047
    %v4540 = vpack.c.b16 %v4052, %v4048
    %v4541 = vpack.c.b16 %v4053, %v4049
    %v4542 = vpack.c.b16 %v4058, %v4054
    %v4543 = vpack.c.b16 %v4059, %v4055
    %v4544 = vpack.c.b16 %v4060, %v4056
    %v4545 = vpack.c.b16 %v4061, %v4057
    %v4546 = vpack.c.b16 %v4066, %v4062
    %v4547 = vpack.c.b16 %v4067, %v4063
    %v4548 = vpack.c.b16 %v4068, %v4064
    %v4549 = vpack.c.b16 %v4069, %v4065
    %v4550 = vpack.c.b16 %v4074, %v4070
    %v4551 = vpack.c.b16 %v4075, %v4071
    %v4552 = vpack.c.b16 %v4076, %v4072
    %v4553 = vpack.c.b16 %v4077, %v4073
    %v4554 = vpack.c.b16 %v4082, %v4078
    %v4555 = vpack.c.b16 %v4083, %v4079
    %v4556 = vpack.c.b16 %v4084, %v4080
    %v4557 = vpack.c.b16 %v4085, %v4081
    %v4558 = vpack.c.b16 %v4090, %v4086
    %v4559 = vpack.c.b16 %v4091, %v4087
    %v4560 = vpack.c.b16 %v4092, %v4088
    %v4561 = vpack.c.b16 %v4093, %v4089
    %v4562 = vpack.c.b16 %v4098, %v4094
    %v4563 = vpack.c.b16 %v4099, %v4095
    %v4564 = vpack.c.b16 %v4100, %v4096
    %v4565 = vpack.c.b16 %v4101, %v4097
    %v4566 = vpack.c.b16 %v4106, %v4102
    %v4567 = vpack.c.b16 %v4107, %v4103
    %v4568 = vpack.c.b16 %v4108, %v4104
    %v4569 = vpack.c.b16 %v4109, %v4105
    %v4570 = vpack.c.b16 %v4114, %v4110
    %v4571 = vpack.c.b16 %v4115, %v4111
    %v4572 = vpack.c.b16 %v4116, %v4112
    %v4573 = vpack.c.b16 %v4117, %v4113
    %v4574 = vpack.c.b16 %v4122, %v4118
    %v4575 = vpack.c.b16 %v4123, %v4119
    %v4576 = vpack.c.b16 %v4124, %v4120
    %v4577 = vpack.c.b16 %v4125, %v4121
    %v4578 = vpack.c.b16 %v4130, %v4126
    %v4579 = vpack.c.b16 %v4131, %v4127
    %v4580 = vpack.c.b16 %v4132, %v4128
    %v4581 = vpack.c.b16 %v4133, %v4129
    %v4582 = vpack.c.b16 %v4138, %v4134
    %v4583 = vpack.c.b16 %v4139, %v4135
    %v4584 = vpack.c.b16 %v4140, %v4136
    %v4585 = vpack.c.b16 %v4141, %v4137
    %v4586 = vpack.c.b16 %v4146, %v4142
    %v4587 = vpack.c.b16 %v4147, %v4143
    %v4588 = vpack.c.b16 %v4148, %v4144
    %v4589 = vpack.c.b16 %v4149, %v4145
    %v4590 = vpack.c.b16 %v4154, %v4150
    %v4591 = vpack.c.b16 %v4155, %v4151
    %v4592 = vpack.c.b16 %v4156, %v4152
    %v4593 = vpack.c.b16 %v4157, %v4153
    %v4594 = vpack.c.b16 %v4162, %v4158
    %v4595 = vpack.c.b16 %v4163, %v4159
    %v4596 = vpack.c.b16 %v4164, %v4160
    %v4597 = vpack.c.b16 %v4165, %v4161
    %v4598 = vpack.c.b16 %v4170, %v4166
    %v4599 = vpack.c.b16 %v4171, %v4167
    %v4600 = vpack.c.b16 %v4172, %v4168
    %v4601 = vpack.c.b16 %v4173, %v4169
    %v4602 = vpack.c.b16 %v4178, %v4174
    %v4603 = vpack.c.b16 %v4179, %v4175
    %v4604 = vpack.c.b16 %v4180, %v4176
    %v4605 = vpack.c.b16 %v4181, %v4177
    %v4606 = vpack.c.b16 %v4186, %v4182
    %v4607 = vpack.c.b16 %v4187, %v4183
    %v4608 = vpack.c.b16 %v4188, %v4184
    %v4609 = vpack.c.b16 %v4189, %v4185
    %v4610 = vpack.c.b16 %v4194, %v4190
    %v4611 = vpack.c.b16 %v4195, %v4191
    %v4612 = vpack.c.b16 %v4196, %v4192
    %v4613 = vpack.c.b16 %v4197, %v4193
    %v4614 = vpack.c.b16 %v4202, %v4198
    %v4615 = vpack.c.b16 %v4203, %v4199
    %v4616 = vpack.c.b16 %v4204, %v4200
    %v4617 = vpack.c.b16 %v4205, %v4201
    %v4618 = vpack.c.b16 %v4210, %v4206
    %v4619 = vpack.c.b16 %v4211, %v4207
    %v4620 = vpack.c.b16 %v4212, %v4208
    %v4621 = vpack.c.b16 %v4213, %v4209
    %v4622 = vpack.c.b16 %v4218, %v4214
    %v4623 = vpack.c.b16 %v4219, %v4215
    %v4624 = vpack.c.b16 %v4220, %v4216
    %v4625 = vpack.c.b16 %v4221, %v4217
    %v4626 = vpack.c.b16 %v4226, %v4222
    %v4627 = vpack.c.b16 %v4227, %v4223
    %v4628 = vpack.c.b16 %v4228, %v4224
    %v4629 = vpack.c.b16 %v4229, %v4225
    %v4630 = vpack.c.b16 %v4234, %v4230
    %v4631 = vpack.c.b16 %v4235, %v4231
    %v4632 = vpack.c.b16 %v4236, %v4232
    %v4633 = vpack.c.b16 %v4237, %v4233
    %v4634 = vpack.c.b16 %v4242, %v4238
    %v4635 = vpack.c.b16 %v4243, %v4239
    %v4636 = vpack.c.b16 %v4244, %v4240
    %v4637 = vpack.c.b16 %v4245, %v4241
    %v4638 = vpack.c.b16 %v4250, %v4246
    %v4639 = vpack.c.b16 %v4251, %v4247
    %v4640 = vpack.c.b16 %v4252, %v4248
    %v4641 = vpack.c.b16 %v4253, %v4249
    %v4642 = vpack.c.b16 %v4258, %v4254
    %v4643 = vpack.c.b16 %v4259, %v4255
    %v4644 = vpack.c.b16 %v4260, %v4256
    %v4645 = vpack.c.b16 %v4261, %v4257
    %v4646 = vpack.c.b16 %v4266, %v4262
    %v4647 = vpack.c.b16 %v4267, %v4263
    %v4648 = vpack.c.b16 %v4268, %v4264
    %v4649 = vpack.c.b16 %v4269, %v4265
    %v4650 = vpack.c.b16 %v4274, %v4270
    %v4651 = vpack.c.b16 %v4275, %v4271
    %v4652 = vpack.c.b16 %v4276, %v4272
    %v4653 = vpack.c.b16 %v4277, %v4273
    %v4654 = vpack.c.b16 %v4282, %v4278
    %v4655 = vpack.c.b16 %v4283, %v4279
    %v4656 = vpack.c.b16 %v4284, %v4280
    %v4657 = vpack.c.b16 %v4285, %v4281
    %v4658 = vpack.c.b16 %v4290, %v4286
    %v4659 = vpack.c.b16 %v4291, %v4287
    %v4660 = vpack.c.b16 %v4292, %v4288
    %v4661 = vpack.c.b16 %v4293, %v4289
    %v4662 = vpack.c.b16 %v4298, %v4294
    %v4663 = vpack.c.b16 %v4299, %v4295
    %v4664 = vpack.c.b16 %v4300, %v4296
    %v4665 = vpack.c.b16 %v4301, %v4297
    %v4666 = vpack.c.b16 %v4306, %v4302
    %v4667 = vpack.c.b16 %v4307, %v4303
    %v4668 = vpack.c.b16 %v4308, %v4304
    %v4669 = vpack.c.b16 %v4309, %v4305
    %v4670 = vpack.c.b16 %v4314, %v4310
    %v4671 = vpack.c.b16 %v4315, %v4311
    %v4672 = vpack.c.b16 %v4316, %v4312
    %v4673 = vpack.c.b16 %v4317, %v4313
    %v4674 = vpack.c.b16 %v4322, %v4318
    %v4675 = vpack.c.b16 %v4323, %v4319
    %v4676 = vpack.c.b16 %v4324, %v4320
    %v4677 = vpack.c.b16 %v4325, %v4321
    %v4678 = vpack.c.b16 %v4330, %v4326
    %v4679 = vpack.c.b16 %v4331, %v4327
    %v4680 = vpack.c.b16 %v4332, %v4328
    %v4681 = vpack.c.b16 %v4333, %v4329
    %v4682 = vpack.c.b16 %v4338, %v4334
    %v4683 = vpack.c.b16 %v4339, %v4335
    %v4684 = vpack.c.b16 %v4340, %v4336
    %v4685 = vpack.c.b16 %v4341, %v4337
    %v4686 = vpack.c.b16 %v4346, %v4342
    %v4687 = vpack.c.b16 %v4347, %v4343
    %v4688 = vpack.c.b16 %v4348, %v4344
    %v4689 = vpack.c.b16 %v4349, %v4345
    %v4690 = vpack.c.b16 %v4354, %v4350
    %v4691 = vpack.c.b16 %v4355, %v4351
    %v4692 = vpack.c.b16 %v4356, %v4352
    %v4693 = vpack.c.b16 %v4357, %v4353
    %v4694 = vpack.c.b16 %v4362, %v4358
    %v4695 = vpack.c.b16 %v4363, %v4359
    %v4696 = vpack.c.b16 %v4364, %v4360
    %v4697 = vpack.c.b16 %v4365, %v4361
    %v4698 = vpack.c.b16 %v4370, %v4366
    %v4699 = vpack.c.b16 %v4371, %v4367
    %v4700 = vpack.c.b16 %v4372, %v4368
    %v4701 = vpack.c.b16 %v4373, %v4369
    %v4702 = vpack.c.b16 %v4378, %v4374
    %v4703 = vpack.c.b16 %v4379, %v4375
    %v4704 = vpack.c.b16 %v4380, %v4376
    %v4705 = vpack.c.b16 %v4381, %v4377
    %v4706 = vpack.c.b16 %v4386, %v4382
    %v4707 = vpack.c.b16 %v4387, %v4383
    %v4708 = vpack.c.b16 %v4388, %v4384
    %v4709 = vpack.c.b16 %v4389, %v4385
    %v4710 = vpack.c.b16 %v4394, %v4390
    %v4711 = vpack.c.b16 %v4395, %v4391
    %v4712 = vpack.c.b16 %v4396, %v4392
    %v4713 = vpack.c.b16 %v4397, %v4393
    %v4714 = vpack.c.b16 %v4402, %v4398
    %v4715 = vpack.c.b16 %v4403, %v4399
    %v4716 = vpack.c.b16 %v4404, %v4400
    %v4717 = vpack.c.b16 %v4405, %v4401
    %v4718 = vpack.c.b16 %v4410, %v4406
    %v4719 = vpack.c.b16 %v4411, %v4407
    %v4720 = vpack.c.b16 %v4412, %v4408
    %v4721 = vpack.c.b16 %v4413, %v4409
    %v4722 = vpack.c.b16 %v4418, %v4414
    %v4723 = vpack.c.b16 %v4419, %v4415
    %v4724 = vpack.c.b16 %v4420, %v4416
    %v4725 = vpack.c.b16 %v4421, %v4417
    %v4726 = vpack.c.b16 %v4426, %v4422
    %v4727 = vpack.c.b16 %v4427, %v4423
    %v4728 = vpack.c.b16 %v4428, %v4424
    %v4729 = vpack.c.b16 %v4429, %v4425
    %v4730 = vpack.c.b16 %v4434, %v4430
    %v4731 = vpack.c.b16 %v4435, %v4431
    %v4732 = vpack.c.b16 %v4436, %v4432
    %v4733 = vpack.c.b16 %v4437, %v4433
    %v4734 = vpack.c.b16 %v4442, %v4438
    %v4735 = vpack.c.b16 %v4443, %v4439
    %v4736 = vpack.c.b16 %v4444, %v4440
    %v4737 = vpack.c.b16 %v4445, %v4441
    %v4738 = vpack.c.b16 %v4450, %v4446
    %v4739 = vpack.c.b16 %v4451, %v4447
    %v4740 = vpack.c.b16 %v4452, %v4448
    %v4741 = vpack.c.b16 %v4453, %v4449
    %v4742 = vpack.c.b16 %v4458, %v4454
    %v4743 = vpack.c.b16 %v4459, %v4455
    %v4744 = vpack.c.b16 %v4460, %v4456
    %v4745 = vpack.c.b16 %v4461, %v4457
    %v4746 = vpack.c.b16 %v4466, %v4462
    %v4747 = vpack.c.b16 %v4467, %v4463
    %v4748 = vpack.c.b16 %v4468, %v4464
    %v4749 = vpack.c.b16 %v4469, %v4465
    %v4750 = vpack.c.b16 %v4474, %v4470
    %v4751 = vpack.c.b16 %v4475, %v4471
    %v4752 = vpack.c.b16 %v4476, %v4472
    %v4753 = vpack.c.b16 %v4477, %v4473
    %v4754 = vpack.c.b16 %v4482, %v4478
    %v4755 = vpack.c.b16 %v4483, %v4479
    %v4756 = vpack.c.b16 %v4484, %v4480
    %v4757 = vpack.c.b16 %v4485, %v4481
    %v4758 = vpack.c.b16 %v4490, %v4486
    %v4759 = vpack.c.b16 %v4491, %v4487
    %v4760 = vpack.c.b16 %v4492, %v4488
    %v4761 = vpack.c.b16 %v4493, %v4489
    %v4762 = vpack.c.b16 %v4498, %v4494
    %v4763 = vpack.c.b16 %v4499, %v4495
    %v4764 = vpack.c.b16 %v4500, %v4496
    %v4765 = vpack.c.b16 %v4501, %v4497
    %v4766 = vpack.c.b16 %v4506, %v4502
    %v4767 = vpack.c.b16 %v4507, %v4503
    %v4768 = vpack.c.b16 %v4508, %v4504
    %v4769 = vpack.c.b16 %v4509, %v4505
    %v4770 = vpack.c.b16 %v4514, %v4510
    %v4771 = vpack.c.b16 %v4515, %v4511
    %v4772 = vpack.c.b16 %v4516, %v4512
    %v4773 = vpack.c.b16 %v4517, %v4513
    %5030 = vmatpush.bf16.msra.mxu0 %v4546
    %5031 = vmatpush.bf16.msra.mxu0 %v4542
    %5032 = vmatpush.bf16.msra.mxu0 %v4538
    %5033 = vmatpush.bf16.msra.mxu0 %v4534
    %5034 = vmatpush.bf16.msra.mxu0 %v4530
    %5035 = vmatpush.bf16.msra.mxu0 %v4526
    %5036 = vmatpush.bf16.msra.mxu0 %v4522
    %5037 = vmatpush.bf16.msra.mxu0 %v4518
    %5038 = vmatmul.bf16.gmra.mxu0 %v3476
    %v5039 = vpop.f32.mrf.mxu0
    %v5040 = vadd.f32 %v3742, %v5039
    %v5041 = vpop.f32.mrf.mxu0
    %5042 = vdwg.mxu0
    %5043 = vmatpush.bf16.msra.mxu0 %v4578
    %5044 = vmatpush.bf16.msra.mxu0 %v4574
    %5045 = vmatpush.bf16.msra.mxu0 %v4570
    %5046 = vmatpush.bf16.msra.mxu0 %v4566
    %5047 = vmatpush.bf16.msra.mxu0 %v4562
    %5048 = vmatpush.bf16.msra.mxu0 %v4558
    %5049 = vmatpush.bf16.msra.mxu0 %v4554
    %5050 = vmatpush.bf16.msra.mxu0 %v4550
    %5051 = vmatmul.bf16.gmra.mxu0 %v3477
    %v5052 = vpop.f32.mrf.mxu0
    %v5053 = vadd.f32 %v5040, %v5052
    %v5054 = vpop.f32.mrf.mxu0
    %5055 = vdwg.mxu0
    %5056 = vmatpush.bf16.msra.mxu0 %v4610
    %5057 = vmatpush.bf16.msra.mxu0 %v4606
    %5058 = vmatpush.bf16.msra.mxu0 %v4602
    %5059 = vmatpush.bf16.msra.mxu0 %v4598
    %5060 = vmatpush.bf16.msra.mxu0 %v4594
    %5061 = vmatpush.bf16.msra.mxu0 %v4590
    %5062 = vmatpush.bf16.msra.mxu0 %v4586
    %5063 = vmatpush.bf16.msra.mxu0 %v4582
    %5064 = vmatmul.bf16.gmra.mxu0 %v3478
    %v5065 = vpop.f32.mrf.mxu0
    %v5066 = vadd.f32 %v5053, %v5065
    %v5067 = vpop.f32.mrf.mxu0
    %5068 = vdwg.mxu0
    %5069 = vmatpush.bf16.msra.mxu0 %v4642
    %5070 = vmatpush.bf16.msra.mxu0 %v4638
    %5071 = vmatpush.bf16.msra.mxu0 %v4634
    %5072 = vmatpush.bf16.msra.mxu0 %v4630
    %5073 = vmatpush.bf16.msra.mxu0 %v4626
    %5074 = vmatpush.bf16.msra.mxu0 %v4622
    %5075 = vmatpush.bf16.msra.mxu0 %v4618
    %5076 = vmatpush.bf16.msra.mxu0 %v4614
    %5077 = vmatmul.bf16.gmra.mxu0 %v3479
    %v5078 = vpop.f32.mrf.mxu0
    %v5079 = vadd.f32 %v5066, %v5078
    %v5080 = vpop.f32.mrf.mxu0
    %5081 = vdwg.mxu0
    %5082 = vmatpush.bf16.msra.mxu0 %v4674
    %5083 = vmatpush.bf16.msra.mxu0 %v4670
    %5084 = vmatpush.bf16.msra.mxu0 %v4666
    %5085 = vmatpush.bf16.msra.mxu0 %v4662
    %5086 = vmatpush.bf16.msra.mxu0 %v4658
    %5087 = vmatpush.bf16.msra.mxu0 %v4654
    %5088 = vmatpush.bf16.msra.mxu0 %v4650
    %5089 = vmatpush.bf16.msra.mxu0 %v4646
    %5090 = vmatmul.bf16.gmra.mxu0 %v3480
    %v5091 = vpop.f32.mrf.mxu0
    %v5092 = vadd.f32 %v5079, %v5091
    %v5093 = vpop.f32.mrf.mxu0
    %5094 = vdwg.mxu0
    %5095 = vmatpush.bf16.msra.mxu0 %v4706
    %5096 = vmatpush.bf16.msra.mxu0 %v4702
    %5097 = vmatpush.bf16.msra.mxu0 %v4698
    %5098 = vmatpush.bf16.msra.mxu0 %v4694
    %5099 = vmatpush.bf16.msra.mxu0 %v4690
    %5100 = vmatpush.bf16.msra.mxu0 %v4686
    %5101 = vmatpush.bf16.msra.mxu0 %v4682
    %5102 = vmatpush.bf16.msra.mxu0 %v4678
    %5103 = vmatmul.bf16.gmra.mxu0 %v3481
    %v5104 = vpop.f32.mrf.mxu0
    %v5105 = vadd.f32 %v5092, %v5104
    %v5106 = vpop.f32.mrf.mxu0
    %5107 = vdwg.mxu0
    %5108 = vmatpush.bf16.msra.mxu0 %v4738
    %5109 = vmatpush.bf16.msra.mxu0 %v4734
    %5110 = vmatpush.bf16.msra.mxu0 %v4730
    %5111 = vmatpush.bf16.msra.mxu0 %v4726
    %5112 = vmatpush.bf16.msra.mxu0 %v4722
    %5113 = vmatpush.bf16.msra.mxu0 %v4718
    %5114 = vmatpush.bf16.msra.mxu0 %v4714
    %5115 = vmatpush.bf16.msra.mxu0 %v4710
    %5116 = vmatmul.bf16.gmra.mxu0 %v3482
    %v5117 = vpop.f32.mrf.mxu0
    %v5118 = vadd.f32 %v5105, %v5117
    %v5119 = vpop.f32.mrf.mxu0
    %5120 = vdwg.mxu0
    %5121 = vmatpush.bf16.msra.mxu0 %v4770
    %5122 = vmatpush.bf16.msra.mxu0 %v4766
    %5123 = vmatpush.bf16.msra.mxu0 %v4762
    %5124 = vmatpush.bf16.msra.mxu0 %v4758
    %5125 = vmatpush.bf16.msra.mxu0 %v4754
    %5126 = vmatpush.bf16.msra.mxu0 %v4750
    %5127 = vmatpush.bf16.msra.mxu0 %v4746
    %5128 = vmatpush.bf16.msra.mxu0 %v4742
    %5129 = vmatmul.bf16.gmra.mxu0 %v3483
    %v5130 = vpop.f32.mrf.mxu0
    %v5131 = vadd.f32 %v5118, %v5130
    %v5132 = vpop.f32.mrf.mxu0
    %5133 = vdwg.mxu0
    %5134 = vmatpush.bf16.msra.mxu0 %v4547
    %5135 = vmatpush.bf16.msra.mxu0 %v4543
    %5136 = vmatpush.bf16.msra.mxu0 %v4539
    %5137 = vmatpush.bf16.msra.mxu0 %v4535
    %5138 = vmatpush.bf16.msra.mxu0 %v4531
    %5139 = vmatpush.bf16.msra.mxu0 %v4527
    %5140 = vmatpush.bf16.msra.mxu0 %v4523
    %5141 = vmatpush.bf16.msra.mxu0 %v4519
    %5142 = vmatmul.bf16.gmra.mxu0 %v3476
    %v5143 = vpop.f32.mrf.mxu0
    %v5144 = vadd.f32 %v3743, %v5143
    %v5145 = vpop.f32.mrf.mxu0
    %5146 = vdwg.mxu0
    %5147 = vmatpush.bf16.msra.mxu0 %v4579
    %5148 = vmatpush.bf16.msra.mxu0 %v4575
    %5149 = vmatpush.bf16.msra.mxu0 %v4571
    %5150 = vmatpush.bf16.msra.mxu0 %v4567
    %5151 = vmatpush.bf16.msra.mxu0 %v4563
    %5152 = vmatpush.bf16.msra.mxu0 %v4559
    %5153 = vmatpush.bf16.msra.mxu0 %v4555
    %5154 = vmatpush.bf16.msra.mxu0 %v4551
    %5155 = vmatmul.bf16.gmra.mxu0 %v3477
    %v5156 = vpop.f32.mrf.mxu0
    %v5157 = vadd.f32 %v5144, %v5156
    %v5158 = vpop.f32.mrf.mxu0
    %5159 = vdwg.mxu0
    %5160 = vmatpush.bf16.msra.mxu0 %v4611
    %5161 = vmatpush.bf16.msra.mxu0 %v4607
    %5162 = vmatpush.bf16.msra.mxu0 %v4603
    %5163 = vmatpush.bf16.msra.mxu0 %v4599
    %5164 = vmatpush.bf16.msra.mxu0 %v4595
    %5165 = vmatpush.bf16.msra.mxu0 %v4591
    %5166 = vmatpush.bf16.msra.mxu0 %v4587
    %5167 = vmatpush.bf16.msra.mxu0 %v4583
    %5168 = vmatmul.bf16.gmra.mxu0 %v3478
    %v5169 = vpop.f32.mrf.mxu0
    %v5170 = vadd.f32 %v5157, %v5169
    %v5171 = vpop.f32.mrf.mxu0
    %5172 = vdwg.mxu0
    %5173 = vmatpush.bf16.msra.mxu0 %v4643
    %5174 = vmatpush.bf16.msra.mxu0 %v4639
    %5175 = vmatpush.bf16.msra.mxu0 %v4635
    %5176 = vmatpush.bf16.msra.mxu0 %v4631
    %5177 = vmatpush.bf16.msra.mxu0 %v4627
    %5178 = vmatpush.bf16.msra.mxu0 %v4623
    %5179 = vmatpush.bf16.msra.mxu0 %v4619
    %5180 = vmatpush.bf16.msra.mxu0 %v4615
    %5181 = vmatmul.bf16.gmra.mxu0 %v3479
    %v5182 = vpop.f32.mrf.mxu0
    %v5183 = vadd.f32 %v5170, %v5182
    %v5184 = vpop.f32.mrf.mxu0
    %5185 = vdwg.mxu0
    %5186 = vmatpush.bf16.msra.mxu0 %v4675
    %5187 = vmatpush.bf16.msra.mxu0 %v4671
    %5188 = vmatpush.bf16.msra.mxu0 %v4667
    %5189 = vmatpush.bf16.msra.mxu0 %v4663
    %5190 = vmatpush.bf16.msra.mxu0 %v4659
    %5191 = vmatpush.bf16.msra.mxu0 %v4655
    %5192 = vmatpush.bf16.msra.mxu0 %v4651
    %5193 = vmatpush.bf16.msra.mxu0 %v4647
    %5194 = vmatmul.bf16.gmra.mxu0 %v3480
    %v5195 = vpop.f32.mrf.mxu0
    %v5196 = vadd.f32 %v5183, %v5195
    %v5197 = vpop.f32.mrf.mxu0
    %5198 = vdwg.mxu0
    %5199 = vmatpush.bf16.msra.mxu0 %v4707
    %5200 = vmatpush.bf16.msra.mxu0 %v4703
    %5201 = vmatpush.bf16.msra.mxu0 %v4699
    %5202 = vmatpush.bf16.msra.mxu0 %v4695
    %5203 = vmatpush.bf16.msra.mxu0 %v4691
    %5204 = vmatpush.bf16.msra.mxu0 %v4687
    %5205 = vmatpush.bf16.msra.mxu0 %v4683
    %5206 = vmatpush.bf16.msra.mxu0 %v4679
    %5207 = vmatmul.bf16.gmra.mxu0 %v3481
    %v5208 = vpop.f32.mrf.mxu0
    %v5209 = vadd.f32 %v5196, %v5208
    %v5210 = vpop.f32.mrf.mxu0
    %5211 = vdwg.mxu0
    %5212 = vmatpush.bf16.msra.mxu0 %v4739
    %5213 = vmatpush.bf16.msra.mxu0 %v4735
    %5214 = vmatpush.bf16.msra.mxu0 %v4731
    %5215 = vmatpush.bf16.msra.mxu0 %v4727
    %5216 = vmatpush.bf16.msra.mxu0 %v4723
    %5217 = vmatpush.bf16.msra.mxu0 %v4719
    %5218 = vmatpush.bf16.msra.mxu0 %v4715
    %5219 = vmatpush.bf16.msra.mxu0 %v4711
    %5220 = vmatmul.bf16.gmra.mxu0 %v3482
    %v5221 = vpop.f32.mrf.mxu0
    %v5222 = vadd.f32 %v5209, %v5221
    %v5223 = vpop.f32.mrf.mxu0
    %5224 = vdwg.mxu0
    %5225 = vmatpush.bf16.msra.mxu0 %v4771
    %5226 = vmatpush.bf16.msra.mxu0 %v4767
    %5227 = vmatpush.bf16.msra.mxu0 %v4763
    %5228 = vmatpush.bf16.msra.mxu0 %v4759
    %5229 = vmatpush.bf16.msra.mxu0 %v4755
    %5230 = vmatpush.bf16.msra.mxu0 %v4751
    %5231 = vmatpush.bf16.msra.mxu0 %v4747
    %5232 = vmatpush.bf16.msra.mxu0 %v4743
    %5233 = vmatmul.bf16.gmra.mxu0 %v3483
    %v5234 = vpop.f32.mrf.mxu0
    %v5235 = vadd.f32 %v5222, %v5234
    %v5236 = vpop.f32.mrf.mxu0
    %5237 = vdwg.mxu0
    %5238 = vmatpush.bf16.msra.mxu0 %v4548
    %5239 = vmatpush.bf16.msra.mxu0 %v4544
    %5240 = vmatpush.bf16.msra.mxu0 %v4540
    %5241 = vmatpush.bf16.msra.mxu0 %v4536
    %5242 = vmatpush.bf16.msra.mxu0 %v4532
    %5243 = vmatpush.bf16.msra.mxu0 %v4528
    %5244 = vmatpush.bf16.msra.mxu0 %v4524
    %5245 = vmatpush.bf16.msra.mxu0 %v4520
    %5246 = vmatmul.bf16.gmra.mxu0 %v3476
    %v5247 = vpop.f32.mrf.mxu0
    %v5248 = vadd.f32 %v3744, %v5247
    %v5249 = vpop.f32.mrf.mxu0
    %5250 = vdwg.mxu0
    %5251 = vmatpush.bf16.msra.mxu0 %v4580
    %5252 = vmatpush.bf16.msra.mxu0 %v4576
    %5253 = vmatpush.bf16.msra.mxu0 %v4572
    %5254 = vmatpush.bf16.msra.mxu0 %v4568
    %5255 = vmatpush.bf16.msra.mxu0 %v4564
    %5256 = vmatpush.bf16.msra.mxu0 %v4560
    %5257 = vmatpush.bf16.msra.mxu0 %v4556
    %5258 = vmatpush.bf16.msra.mxu0 %v4552
    %5259 = vmatmul.bf16.gmra.mxu0 %v3477
    %v5260 = vpop.f32.mrf.mxu0
    %v5261 = vadd.f32 %v5248, %v5260
    %v5262 = vpop.f32.mrf.mxu0
    %5263 = vdwg.mxu0
    %5264 = vmatpush.bf16.msra.mxu0 %v4612
    %5265 = vmatpush.bf16.msra.mxu0 %v4608
    %5266 = vmatpush.bf16.msra.mxu0 %v4604
    %5267 = vmatpush.bf16.msra.mxu0 %v4600
    %5268 = vmatpush.bf16.msra.mxu0 %v4596
    %5269 = vmatpush.bf16.msra.mxu0 %v4592
    %5270 = vmatpush.bf16.msra.mxu0 %v4588
    %5271 = vmatpush.bf16.msra.mxu0 %v4584
    %5272 = vmatmul.bf16.gmra.mxu0 %v3478
    %v5273 = vpop.f32.mrf.mxu0
    %v5274 = vadd.f32 %v5261, %v5273
    %v5275 = vpop.f32.mrf.mxu0
    %5276 = vdwg.mxu0
    %5277 = vmatpush.bf16.msra.mxu0 %v4644
    %5278 = vmatpush.bf16.msra.mxu0 %v4640
    %5279 = vmatpush.bf16.msra.mxu0 %v4636
    %5280 = vmatpush.bf16.msra.mxu0 %v4632
    %5281 = vmatpush.bf16.msra.mxu0 %v4628
    %5282 = vmatpush.bf16.msra.mxu0 %v4624
    %5283 = vmatpush.bf16.msra.mxu0 %v4620
    %5284 = vmatpush.bf16.msra.mxu0 %v4616
    %5285 = vmatmul.bf16.gmra.mxu0 %v3479
    %v5286 = vpop.f32.mrf.mxu0
    %v5287 = vadd.f32 %v5274, %v5286
    %v5288 = vpop.f32.mrf.mxu0
    %5289 = vdwg.mxu0
    %5290 = vmatpush.bf16.msra.mxu0 %v4676
    %5291 = vmatpush.bf16.msra.mxu0 %v4672
    %5292 = vmatpush.bf16.msra.mxu0 %v4668
    %5293 = vmatpush.bf16.msra.mxu0 %v4664
    %5294 = vmatpush.bf16.msra.mxu0 %v4660
    %5295 = vmatpush.bf16.msra.mxu0 %v4656
    %5296 = vmatpush.bf16.msra.mxu0 %v4652
    %5297 = vmatpush.bf16.msra.mxu0 %v4648
    %5298 = vmatmul.bf16.gmra.mxu0 %v3480
    %v5299 = vpop.f32.mrf.mxu0
    %v5300 = vadd.f32 %v5287, %v5299
    %v5301 = vpop.f32.mrf.mxu0
    %5302 = vdwg.mxu0
    %5303 = vmatpush.bf16.msra.mxu0 %v4708
    %5304 = vmatpush.bf16.msra.mxu0 %v4704
    %5305 = vmatpush.bf16.msra.mxu0 %v4700
    %5306 = vmatpush.bf16.msra.mxu0 %v4696
    %5307 = vmatpush.bf16.msra.mxu0 %v4692
    %5308 = vmatpush.bf16.msra.mxu0 %v4688
    %5309 = vmatpush.bf16.msra.mxu0 %v4684
    %5310 = vmatpush.bf16.msra.mxu0 %v4680
    %5311 = vmatmul.bf16.gmra.mxu0 %v3481
    %v5312 = vpop.f32.mrf.mxu0
    %v5313 = vadd.f32 %v5300, %v5312
    %v5314 = vpop.f32.mrf.mxu0
    %5315 = vdwg.mxu0
    %5316 = vmatpush.bf16.msra.mxu0 %v4740
    %5317 = vmatpush.bf16.msra.mxu0 %v4736
    %5318 = vmatpush.bf16.msra.mxu0 %v4732
    %5319 = vmatpush.bf16.msra.mxu0 %v4728
    %5320 = vmatpush.bf16.msra.mxu0 %v4724
    %5321 = vmatpush.bf16.msra.mxu0 %v4720
    %5322 = vmatpush.bf16.msra.mxu0 %v4716
    %5323 = vmatpush.bf16.msra.mxu0 %v4712
    %5324 = vmatmul.bf16.gmra.mxu0 %v3482
    %v5325 = vpop.f32.mrf.mxu0
    %v5326 = vadd.f32 %v5313, %v5325
    %v5327 = vpop.f32.mrf.mxu0
    %5328 = vdwg.mxu0
    %5329 = vmatpush.bf16.msra.mxu0 %v4772
    %5330 = vmatpush.bf16.msra.mxu0 %v4768
    %5331 = vmatpush.bf16.msra.mxu0 %v4764
    %5332 = vmatpush.bf16.msra.mxu0 %v4760
    %5333 = vmatpush.bf16.msra.mxu0 %v4756
    %5334 = vmatpush.bf16.msra.mxu0 %v4752
    %5335 = vmatpush.bf16.msra.mxu0 %v4748
    %5336 = vmatpush.bf16.msra.mxu0 %v4744
    %5337 = vmatmul.bf16.gmra.mxu0 %v3483
    %v5338 = vpop.f32.mrf.mxu0
    %v5339 = vadd.f32 %v5326, %v5338
    %v5340 = vpop.f32.mrf.mxu0
    %5341 = vdwg.mxu0
    %5342 = vmatpush.bf16.msra.mxu0 %v4549
    %5343 = vmatpush.bf16.msra.mxu0 %v4545
    %5344 = vmatpush.bf16.msra.mxu0 %v4541
    %5345 = vmatpush.bf16.msra.mxu0 %v4537
    %5346 = vmatpush.bf16.msra.mxu0 %v4533
    %5347 = vmatpush.bf16.msra.mxu0 %v4529
    %5348 = vmatpush.bf16.msra.mxu0 %v4525
    %5349 = vmatpush.bf16.msra.mxu0 %v4521
    %5350 = vmatmul.bf16.gmra.mxu0 %v3476
    %v5351 = vpop.f32.mrf.mxu0
    %v5352 = vadd.f32 %v3745, %v5351
    %v5353 = vpop.f32.mrf.mxu0
    %5354 = vdwg.mxu0
    %5355 = vmatpush.bf16.msra.mxu0 %v4581
    %5356 = vmatpush.bf16.msra.mxu0 %v4577
    %5357 = vmatpush.bf16.msra.mxu0 %v4573
    %5358 = vmatpush.bf16.msra.mxu0 %v4569
    %5359 = vmatpush.bf16.msra.mxu0 %v4565
    %5360 = vmatpush.bf16.msra.mxu0 %v4561
    %5361 = vmatpush.bf16.msra.mxu0 %v4557
    %5362 = vmatpush.bf16.msra.mxu0 %v4553
    %5363 = vmatmul.bf16.gmra.mxu0 %v3477
    %v5364 = vpop.f32.mrf.mxu0
    %v5365 = vadd.f32 %v5352, %v5364
    %v5366 = vpop.f32.mrf.mxu0
    %5367 = vdwg.mxu0
    %5368 = vmatpush.bf16.msra.mxu0 %v4613
    %5369 = vmatpush.bf16.msra.mxu0 %v4609
    %5370 = vmatpush.bf16.msra.mxu0 %v4605
    %5371 = vmatpush.bf16.msra.mxu0 %v4601
    %5372 = vmatpush.bf16.msra.mxu0 %v4597
    %5373 = vmatpush.bf16.msra.mxu0 %v4593
    %5374 = vmatpush.bf16.msra.mxu0 %v4589
    %5375 = vmatpush.bf16.msra.mxu0 %v4585
    %5376 = vmatmul.bf16.gmra.mxu0 %v3478
    %v5377 = vpop.f32.mrf.mxu0
    %v5378 = vadd.f32 %v5365, %v5377
    %v5379 = vpop.f32.mrf.mxu0
    %5380 = vdwg.mxu0
    %5381 = vmatpush.bf16.msra.mxu0 %v4645
    %5382 = vmatpush.bf16.msra.mxu0 %v4641
    %5383 = vmatpush.bf16.msra.mxu0 %v4637
    %5384 = vmatpush.bf16.msra.mxu0 %v4633
    %5385 = vmatpush.bf16.msra.mxu0 %v4629
    %5386 = vmatpush.bf16.msra.mxu0 %v4625
    %5387 = vmatpush.bf16.msra.mxu0 %v4621
    %5388 = vmatpush.bf16.msra.mxu0 %v4617
    %5389 = vmatmul.bf16.gmra.mxu0 %v3479
    %v5390 = vpop.f32.mrf.mxu0
    %v5391 = vadd.f32 %v5378, %v5390
    %v5392 = vpop.f32.mrf.mxu0
    %5393 = vdwg.mxu0
    %5394 = vmatpush.bf16.msra.mxu0 %v4677
    %5395 = vmatpush.bf16.msra.mxu0 %v4673
    %5396 = vmatpush.bf16.msra.mxu0 %v4669
    %5397 = vmatpush.bf16.msra.mxu0 %v4665
    %5398 = vmatpush.bf16.msra.mxu0 %v4661
    %5399 = vmatpush.bf16.msra.mxu0 %v4657
    %5400 = vmatpush.bf16.msra.mxu0 %v4653
    %5401 = vmatpush.bf16.msra.mxu0 %v4649
    %5402 = vmatmul.bf16.gmra.mxu0 %v3480
    %v5403 = vpop.f32.mrf.mxu0
    %v5404 = vadd.f32 %v5391, %v5403
    %v5405 = vpop.f32.mrf.mxu0
    %5406 = vdwg.mxu0
    %5407 = vmatpush.bf16.msra.mxu0 %v4709
    %5408 = vmatpush.bf16.msra.mxu0 %v4705
    %5409 = vmatpush.bf16.msra.mxu0 %v4701
    %5410 = vmatpush.bf16.msra.mxu0 %v4697
    %5411 = vmatpush.bf16.msra.mxu0 %v4693
    %5412 = vmatpush.bf16.msra.mxu0 %v4689
    %5413 = vmatpush.bf16.msra.mxu0 %v4685
    %5414 = vmatpush.bf16.msra.mxu0 %v4681
    %5415 = vmatmul.bf16.gmra.mxu0 %v3481
    %v5416 = vpop.f32.mrf.mxu0
    %v5417 = vadd.f32 %v5404, %v5416
    %v5418 = vpop.f32.mrf.mxu0
    %5419 = vdwg.mxu0
    %5420 = vmatpush.bf16.msra.mxu0 %v4741
    %5421 = vmatpush.bf16.msra.mxu0 %v4737
    %5422 = vmatpush.bf16.msra.mxu0 %v4733
    %5423 = vmatpush.bf16.msra.mxu0 %v4729
    %5424 = vmatpush.bf16.msra.mxu0 %v4725
    %5425 = vmatpush.bf16.msra.mxu0 %v4721
    %5426 = vmatpush.bf16.msra.mxu0 %v4717
    %5427 = vmatpush.bf16.msra.mxu0 %v4713
    %5428 = vmatmul.bf16.gmra.mxu0 %v3482
    %v5429 = vpop.f32.mrf.mxu0
    %v5430 = vadd.f32 %v5417, %v5429
    %v5431 = vpop.f32.mrf.mxu0
    %5432 = vdwg.mxu0
    %5433 = vmatpush.bf16.msra.mxu0 %v4773
    %5434 = vmatpush.bf16.msra.mxu0 %v4769
    %5435 = vmatpush.bf16.msra.mxu0 %v4765
    %5436 = vmatpush.bf16.msra.mxu0 %v4761
    %5437 = vmatpush.bf16.msra.mxu0 %v4757
    %5438 = vmatpush.bf16.msra.mxu0 %v4753
    %5439 = vmatpush.bf16.msra.mxu0 %v4749
    %5440 = vmatpush.bf16.msra.mxu0 %v4745
    %5441 = vmatmul.bf16.gmra.mxu0 %v3483
    %v5442 = vpop.f32.mrf.mxu0
    %v5443 = vadd.f32 %v5430, %v5442
    %v5444 = vpop.f32.mrf.mxu0
    %5445 = vdwg.mxu0
    %v5446 = vmul.f32 %v5131, 0.2
    %v5447 = vmul.f32 %v5235, 0.2
    %v5448 = vmul.f32 %v5339, 0.2
    %v5449 = vmul.f32 %v5443, 0.2
    %v5450 = vmax.f32 %v5131, %v5446
    %v5451 = vmax.f32 %v5235, %v5447
    %v5452 = vmax.f32 %v5339, %v5448
    %v5453 = vmax.f32 %v5443, %v5449
    %v5454 = vpack.c.bf16 %v5450, %v5450
    %v5455 = vpack.c.bf16 %v5451, %v5451
    %v5456 = vpack.c.bf16 %v5452, %v5452
    %v5457 = vpack.c.bf16 %v5453, %v5453
    %v5458 = vld [vmem:[#allocation12] sm:$0xff]
    %v5459 = vld [vmem:[#allocation12 + $0x8] sm:$0xff]
    %v5460 = vld [vmem:[#allocation12 + $0x10] sm:$0xff]
    %v5461 = vld [vmem:[#allocation12 + $0x18] sm:$0xff]
    %v5462 = vld [vmem:[#allocation12 + $0x20] sm:$0xff]
    %v5463 = vld [vmem:[#allocation12 + $0x28] sm:$0xff]
    %v5464 = vld [vmem:[#allocation12 + $0x30] sm:$0xff]
    %v5465 = vld [vmem:[#allocation12 + $0x38] sm:$0xff]
    %v5466 = vld [vmem:[#allocation12 + $0x40] sm:$0xff]
    %v5467 = vld [vmem:[#allocation12 + $0x48] sm:$0xff]
    %v5468 = vld [vmem:[#allocation12 + $0x50] sm:$0xff]
    %v5469 = vld [vmem:[#allocation12 + $0x58] sm:$0xff]
    %v5470 = vld [vmem:[#allocation12 + $0x60] sm:$0xff]
    %v5471 = vld [vmem:[#allocation12 + $0x68] sm:$0xff]
    %v5472 = vld [vmem:[#allocation12 + $0x70] sm:$0xff]
    %v5473 = vld [vmem:[#allocation12 + $0x78] sm:$0xff]
    %v5474 = vld [vmem:[#allocation12 + $0x80] sm:$0xff]
    %v5475 = vld [vmem:[#allocation12 + $0x88] sm:$0xff]
    %v5476 = vld [vmem:[#allocation12 + $0x90] sm:$0xff]
    %v5477 = vld [vmem:[#allocation12 + $0x98] sm:$0xff]
    %v5478 = vld [vmem:[#allocation12 + $0xa0] sm:$0xff]
    %v5479 = vld [vmem:[#allocation12 + $0xa8] sm:$0xff]
    %v5480 = vld [vmem:[#allocation12 + $0xb0] sm:$0xff]
    %v5481 = vld [vmem:[#allocation12 + $0xb8] sm:$0xff]
    %v5482 = vld [vmem:[#allocation12 + $0xc0] sm:$0xff]
    %v5483 = vld [vmem:[#allocation12 + $0xc8] sm:$0xff]
    %v5484 = vld [vmem:[#allocation12 + $0xd0] sm:$0xff]
    %v5485 = vld [vmem:[#allocation12 + $0xd8] sm:$0xff]
    %v5486 = vld [vmem:[#allocation12 + $0xe0] sm:$0xff]
    %v5487 = vld [vmem:[#allocation12 + $0xe8] sm:$0xff]
    %v5488 = vld [vmem:[#allocation12 + $0xf0] sm:$0xff]
    %v5489 = vld [vmem:[#allocation12 + $0xf8] sm:$0xff]
    %v5490 = vld [vmem:[#allocation12 + $0x100] sm:$0xff]
    %v5491 = vld [vmem:[#allocation12 + $0x108] sm:$0xff]
    %v5492 = vld [vmem:[#allocation12 + $0x110] sm:$0xff]
    %v5493 = vld [vmem:[#allocation12 + $0x118] sm:$0xff]
    %v5494 = vld [vmem:[#allocation12 + $0x120] sm:$0xff]
    %v5495 = vld [vmem:[#allocation12 + $0x128] sm:$0xff]
    %v5496 = vld [vmem:[#allocation12 + $0x130] sm:$0xff]
    %v5497 = vld [vmem:[#allocation12 + $0x138] sm:$0xff]
    %v5498 = vld [vmem:[#allocation12 + $0x140] sm:$0xff]
    %v5499 = vld [vmem:[#allocation12 + $0x148] sm:$0xff]
    %v5500 = vld [vmem:[#allocation12 + $0x150] sm:$0xff]
    %v5501 = vld [vmem:[#allocation12 + $0x158] sm:$0xff]
    %v5502 = vld [vmem:[#allocation12 + $0x160] sm:$0xff]
    %v5503 = vld [vmem:[#allocation12 + $0x168] sm:$0xff]
    %v5504 = vld [vmem:[#allocation12 + $0x170] sm:$0xff]
    %v5505 = vld [vmem:[#allocation12 + $0x178] sm:$0xff]
    %v5506 = vld [vmem:[#allocation12 + $0x180] sm:$0xff]
    %v5507 = vld [vmem:[#allocation12 + $0x188] sm:$0xff]
    %v5508 = vld [vmem:[#allocation12 + $0x190] sm:$0xff]
    %v5509 = vld [vmem:[#allocation12 + $0x198] sm:$0xff]
    %v5510 = vld [vmem:[#allocation12 + $0x1a0] sm:$0xff]
    %v5511 = vld [vmem:[#allocation12 + $0x1a8] sm:$0xff]
    %v5512 = vld [vmem:[#allocation12 + $0x1b0] sm:$0xff]
    %v5513 = vld [vmem:[#allocation12 + $0x1b8] sm:$0xff]
    %v5514 = vld [vmem:[#allocation12 + $0x1c0] sm:$0xff]
    %v5515 = vld [vmem:[#allocation12 + $0x1c8] sm:$0xff]
    %v5516 = vld [vmem:[#allocation12 + $0x1d0] sm:$0xff]
    %v5517 = vld [vmem:[#allocation12 + $0x1d8] sm:$0xff]
    %v5518 = vld [vmem:[#allocation12 + $0x1e0] sm:$0xff]
    %v5519 = vld [vmem:[#allocation12 + $0x1e8] sm:$0xff]
    %v5520 = vld [vmem:[#allocation12 + $0x1f0] sm:$0xff]
    %v5521 = vld [vmem:[#allocation12 + $0x1f8] sm:$0xff]
    %v5522 = vld [vmem:[#allocation14] sm:$0x3]
    %v5524 = vperm.slane %v5522, 0
    %v5525 = vperm.slane %v5522, 1
    %v5592 = vunpack.c.l.b16 %v5458
    %v5593 = vunpack.c.h.b16 %v5458
    %v5594 = vunpack.c.l.b16 %v5459
    %v5595 = vunpack.c.h.b16 %v5459
    %v5596 = vunpack.c.l.b16 %v5460
    %v5597 = vunpack.c.h.b16 %v5460
    %v5598 = vunpack.c.l.b16 %v5461
    %v5599 = vunpack.c.h.b16 %v5461
    %v5600 = vunpack.c.l.b16 %v5462
    %v5601 = vunpack.c.h.b16 %v5462
    %v5602 = vunpack.c.l.b16 %v5463
    %v5603 = vunpack.c.h.b16 %v5463
    %v5604 = vunpack.c.l.b16 %v5464
    %v5605 = vunpack.c.h.b16 %v5464
    %v5606 = vunpack.c.l.b16 %v5465
    %v5607 = vunpack.c.h.b16 %v5465
    %v5608 = vunpack.c.l.b16 %v5466
    %v5609 = vunpack.c.h.b16 %v5466
    %v5610 = vunpack.c.l.b16 %v5467
    %v5611 = vunpack.c.h.b16 %v5467
    %v5612 = vunpack.c.l.b16 %v5468
    %v5613 = vunpack.c.h.b16 %v5468
    %v5614 = vunpack.c.l.b16 %v5469
    %v5615 = vunpack.c.h.b16 %v5469
    %v5616 = vunpack.c.l.b16 %v5470
    %v5617 = vunpack.c.h.b16 %v5470
    %v5618 = vunpack.c.l.b16 %v5471
    %v5619 = vunpack.c.h.b16 %v5471
    %v5620 = vunpack.c.l.b16 %v5472
    %v5621 = vunpack.c.h.b16 %v5472
    %v5622 = vunpack.c.l.b16 %v5473
    %v5623 = vunpack.c.h.b16 %v5473
    %v5624 = vunpack.c.l.b16 %v5474
    %v5625 = vunpack.c.h.b16 %v5474
    %v5626 = vunpack.c.l.b16 %v5475
    %v5627 = vunpack.c.h.b16 %v5475
    %v5628 = vunpack.c.l.b16 %v5476
    %v5629 = vunpack.c.h.b16 %v5476
    %v5630 = vunpack.c.l.b16 %v5477
    %v5631 = vunpack.c.h.b16 %v5477
    %v5632 = vunpack.c.l.b16 %v5478
    %v5633 = vunpack.c.h.b16 %v5478
    %v5634 = vunpack.c.l.b16 %v5479
    %v5635 = vunpack.c.h.b16 %v5479
    %v5636 = vunpack.c.l.b16 %v5480
    %v5637 = vunpack.c.h.b16 %v5480
    %v5638 = vunpack.c.l.b16 %v5481
    %v5639 = vunpack.c.h.b16 %v5481
    %v5640 = vunpack.c.l.b16 %v5482
    %v5641 = vunpack.c.h.b16 %v5482
    %v5642 = vunpack.c.l.b16 %v5483
    %v5643 = vunpack.c.h.b16 %v5483
    %v5644 = vunpack.c.l.b16 %v5484
    %v5645 = vunpack.c.h.b16 %v5484
    %v5646 = vunpack.c.l.b16 %v5485
    %v5647 = vunpack.c.h.b16 %v5485
    %v5648 = vunpack.c.l.b16 %v5486
    %v5649 = vunpack.c.h.b16 %v5486
    %v5650 = vunpack.c.l.b16 %v5487
    %v5651 = vunpack.c.h.b16 %v5487
    %v5652 = vunpack.c.l.b16 %v5488
    %v5653 = vunpack.c.h.b16 %v5488
    %v5654 = vunpack.c.l.b16 %v5489
    %v5655 = vunpack.c.h.b16 %v5489
    %v5656 = vunpack.c.l.b16 %v5490
    %v5657 = vunpack.c.h.b16 %v5490
    %v5658 = vunpack.c.l.b16 %v5491
    %v5659 = vunpack.c.h.b16 %v5491
    %v5660 = vunpack.c.l.b16 %v5492
    %v5661 = vunpack.c.h.b16 %v5492
    %v5662 = vunpack.c.l.b16 %v5493
    %v5663 = vunpack.c.h.b16 %v5493
    %v5664 = vunpack.c.l.b16 %v5494
    %v5665 = vunpack.c.h.b16 %v5494
    %v5666 = vunpack.c.l.b16 %v5495
    %v5667 = vunpack.c.h.b16 %v5495
    %v5668 = vunpack.c.l.b16 %v5496
    %v5669 = vunpack.c.h.b16 %v5496
    %v5670 = vunpack.c.l.b16 %v5497
    %v5671 = vunpack.c.h.b16 %v5497
    %v5672 = vunpack.c.l.b16 %v5498
    %v5673 = vunpack.c.h.b16 %v5498
    %v5674 = vunpack.c.l.b16 %v5499
    %v5675 = vunpack.c.h.b16 %v5499
    %v5676 = vunpack.c.l.b16 %v5500
    %v5677 = vunpack.c.h.b16 %v5500
    %v5678 = vunpack.c.l.b16 %v5501
    %v5679 = vunpack.c.h.b16 %v5501
    %v5680 = vunpack.c.l.b16 %v5502
    %v5681 = vunpack.c.h.b16 %v5502
    %v5682 = vunpack.c.l.b16 %v5503
    %v5683 = vunpack.c.h.b16 %v5503
    %v5684 = vunpack.c.l.b16 %v5504
    %v5685 = vunpack.c.h.b16 %v5504
    %v5686 = vunpack.c.l.b16 %v5505
    %v5687 = vunpack.c.h.b16 %v5505
    %v5688 = vunpack.c.l.b16 %v5506
    %v5689 = vunpack.c.h.b16 %v5506
    %v5690 = vunpack.c.l.b16 %v5507
    %v5691 = vunpack.c.h.b16 %v5507
    %v5692 = vunpack.c.l.b16 %v5508
    %v5693 = vunpack.c.h.b16 %v5508
    %v5694 = vunpack.c.l.b16 %v5509
    %v5695 = vunpack.c.h.b16 %v5509
    %v5696 = vunpack.c.l.b16 %v5510
    %v5697 = vunpack.c.h.b16 %v5510
    %v5698 = vunpack.c.l.b16 %v5511
    %v5699 = vunpack.c.h.b16 %v5511
    %v5700 = vunpack.c.l.b16 %v5512
    %v5701 = vunpack.c.h.b16 %v5512
    %v5702 = vunpack.c.l.b16 %v5513
    %v5703 = vunpack.c.h.b16 %v5513
    %v5704 = vunpack.c.l.b16 %v5514
    %v5705 = vunpack.c.h.b16 %v5514
    %v5706 = vunpack.c.l.b16 %v5515
    %v5707 = vunpack.c.h.b16 %v5515
    %v5708 = vunpack.c.l.b16 %v5516
    %v5709 = vunpack.c.h.b16 %v5516
    %v5710 = vunpack.c.l.b16 %v5517
    %v5711 = vunpack.c.h.b16 %v5517
    %v5712 = vunpack.c.l.b16 %v5518
    %v5713 = vunpack.c.h.b16 %v5518
    %v5714 = vunpack.c.l.b16 %v5519
    %v5715 = vunpack.c.h.b16 %v5519
    %v5716 = vunpack.c.l.b16 %v5520
    %v5717 = vunpack.c.h.b16 %v5520
    %v5718 = vunpack.c.l.b16 %v5521
    %v5719 = vunpack.c.h.b16 %v5521
    %v5720 = vpack.c.b16 %v5594, %v5592
    %v5721 = vpack.c.b16 %v5595, %v5593
    %v5722 = vpack.c.b16 %v5598, %v5596
    %v5723 = vpack.c.b16 %v5599, %v5597
    %v5724 = vpack.c.b16 %v5602, %v5600
    %v5725 = vpack.c.b16 %v5603, %v5601
    %v5726 = vpack.c.b16 %v5606, %v5604
    %v5727 = vpack.c.b16 %v5607, %v5605
    %v5728 = vpack.c.b16 %v5610, %v5608
    %v5729 = vpack.c.b16 %v5611, %v5609
    %v5730 = vpack.c.b16 %v5614, %v5612
    %v5731 = vpack.c.b16 %v5615, %v5613
    %v5732 = vpack.c.b16 %v5618, %v5616
    %v5733 = vpack.c.b16 %v5619, %v5617
    %v5734 = vpack.c.b16 %v5622, %v5620
    %v5735 = vpack.c.b16 %v5623, %v5621
    %v5736 = vpack.c.b16 %v5626, %v5624
    %v5737 = vpack.c.b16 %v5627, %v5625
    %v5738 = vpack.c.b16 %v5630, %v5628
    %v5739 = vpack.c.b16 %v5631, %v5629
    %v5740 = vpack.c.b16 %v5634, %v5632
    %v5741 = vpack.c.b16 %v5635, %v5633
    %v5742 = vpack.c.b16 %v5638, %v5636
    %v5743 = vpack.c.b16 %v5639, %v5637
    %v5744 = vpack.c.b16 %v5642, %v5640
    %v5745 = vpack.c.b16 %v5643, %v5641
    %v5746 = vpack.c.b16 %v5646, %v5644
    %v5747 = vpack.c.b16 %v5647, %v5645
    %v5748 = vpack.c.b16 %v5650, %v5648
    %v5749 = vpack.c.b16 %v5651, %v5649
    %v5750 = vpack.c.b16 %v5654, %v5652
    %v5751 = vpack.c.b16 %v5655, %v5653
    %v5752 = vpack.c.b16 %v5658, %v5656
    %v5753 = vpack.c.b16 %v5659, %v5657
    %v5754 = vpack.c.b16 %v5662, %v5660
    %v5755 = vpack.c.b16 %v5663, %v5661
    %v5756 = vpack.c.b16 %v5666, %v5664
    %v5757 = vpack.c.b16 %v5667, %v5665
    %v5758 = vpack.c.b16 %v5670, %v5668
    %v5759 = vpack.c.b16 %v5671, %v5669
    %v5760 = vpack.c.b16 %v5674, %v5672
    %v5761 = vpack.c.b16 %v5675, %v5673
    %v5762 = vpack.c.b16 %v5678, %v5676
    %v5763 = vpack.c.b16 %v5679, %v5677
    %v5764 = vpack.c.b16 %v5682, %v5680
    %v5765 = vpack.c.b16 %v5683, %v5681
    %v5766 = vpack.c.b16 %v5686, %v5684
    %v5767 = vpack.c.b16 %v5687, %v5685
    %v5768 = vpack.c.b16 %v5690, %v5688
    %v5769 = vpack.c.b16 %v5691, %v5689
    %v5770 = vpack.c.b16 %v5694, %v5692
    %v5771 = vpack.c.b16 %v5695, %v5693
    %v5772 = vpack.c.b16 %v5698, %v5696
    %v5773 = vpack.c.b16 %v5699, %v5697
    %v5774 = vpack.c.b16 %v5702, %v5700
    %v5775 = vpack.c.b16 %v5703, %v5701
    %v5776 = vpack.c.b16 %v5706, %v5704
    %v5777 = vpack.c.b16 %v5707, %v5705
    %v5778 = vpack.c.b16 %v5710, %v5708
    %v5779 = vpack.c.b16 %v5711, %v5709
    %v5780 = vpack.c.b16 %v5714, %v5712
    %v5781 = vpack.c.b16 %v5715, %v5713
    %v5782 = vpack.c.b16 %v5718, %v5716
    %v5783 = vpack.c.b16 %v5719, %v5717
    %5848 = vmatpush.bf16.msra.mxu0 %v5734
    %5849 = vmatpush.bf16.msra.mxu0 %v5732
    %5850 = vmatpush.bf16.msra.mxu0 %v5730
    %5851 = vmatpush.bf16.msra.mxu0 %v5728
    %5852 = vmatpush.bf16.msra.mxu0 %v5726
    %5853 = vmatpush.bf16.msra.mxu0 %v5724
    %5854 = vmatpush.bf16.msra.mxu0 %v5722
    %5855 = vmatpush.bf16.msra.mxu0 %v5720
    %5856 = vmatmul.bf16.gmra.mxu0 %v5454
    %v5857 = vpop.f32.mrf.mxu0
    %v5858 = vadd.f32 %v5524, %v5857
    %v5859 = vpop.f32.mrf.mxu0
    %5860 = vdwg.mxu0
    %5861 = vmatpush.bf16.msra.mxu0 %v5750
    %5862 = vmatpush.bf16.msra.mxu0 %v5748
    %5863 = vmatpush.bf16.msra.mxu0 %v5746
    %5864 = vmatpush.bf16.msra.mxu0 %v5744
    %5865 = vmatpush.bf16.msra.mxu0 %v5742
    %5866 = vmatpush.bf16.msra.mxu0 %v5740
    %5867 = vmatpush.bf16.msra.mxu0 %v5738
    %5868 = vmatpush.bf16.msra.mxu0 %v5736
    %5869 = vmatmul.bf16.gmra.mxu0 %v5455
    %v5870 = vpop.f32.mrf.mxu0
    %v5871 = vadd.f32 %v5858, %v5870
    %v5872 = vpop.f32.mrf.mxu0
    %5873 = vdwg.mxu0
    %5874 = vmatpush.bf16.msra.mxu0 %v5766
    %5875 = vmatpush.bf16.msra.mxu0 %v5764
    %5876 = vmatpush.bf16.msra.mxu0 %v5762
    %5877 = vmatpush.bf16.msra.mxu0 %v5760
    %5878 = vmatpush.bf16.msra.mxu0 %v5758
    %5879 = vmatpush.bf16.msra.mxu0 %v5756
    %5880 = vmatpush.bf16.msra.mxu0 %v5754
    %5881 = vmatpush.bf16.msra.mxu0 %v5752
    %5882 = vmatmul.bf16.gmra.mxu0 %v5456
    %v5883 = vpop.f32.mrf.mxu0
    %v5884 = vadd.f32 %v5871, %v5883
    %v5885 = vpop.f32.mrf.mxu0
    %5886 = vdwg.mxu0
    %5887 = vmatpush.bf16.msra.mxu0 %v5782
    %5888 = vmatpush.bf16.msra.mxu0 %v5780
    %5889 = vmatpush.bf16.msra.mxu0 %v5778
    %5890 = vmatpush.bf16.msra.mxu0 %v5776
    %5891 = vmatpush.bf16.msra.mxu0 %v5774
    %5892 = vmatpush.bf16.msra.mxu0 %v5772
    %5893 = vmatpush.bf16.msra.mxu0 %v5770
    %5894 = vmatpush.bf16.msra.mxu0 %v5768
    %5895 = vmatmul.bf16.gmra.mxu0 %v5457
    %v5896 = vpop.f32.mrf.mxu0
    %v5897 = vadd.f32 %v5884, %v5896
    %v5898 = vpop.f32.mrf.mxu0
    %5899 = vdwg.mxu0
    %5900 = vmatpush.bf16.msra.mxu0 %v5735
    %5901 = vmatpush.bf16.msra.mxu0 %v5733
    %5902 = vmatpush.bf16.msra.mxu0 %v5731
    %5903 = vmatpush.bf16.msra.mxu0 %v5729
    %5904 = vmatpush.bf16.msra.mxu0 %v5727
    %5905 = vmatpush.bf16.msra.mxu0 %v5725
    %5906 = vmatpush.bf16.msra.mxu0 %v5723
    %5907 = vmatpush.bf16.msra.mxu0 %v5721
    %5908 = vmatmul.bf16.gmra.mxu0 %v5454
    %v5909 = vpop.f32.mrf.mxu0
    %v5910 = vadd.f32 %v5525, %v5909
    %v5911 = vpop.f32.mrf.mxu0
    %5912 = vdwg.mxu0
    %5913 = vmatpush.bf16.msra.mxu0 %v5751
    %5914 = vmatpush.bf16.msra.mxu0 %v5749
    %5915 = vmatpush.bf16.msra.mxu0 %v5747
    %5916 = vmatpush.bf16.msra.mxu0 %v5745
    %5917 = vmatpush.bf16.msra.mxu0 %v5743
    %5918 = vmatpush.bf16.msra.mxu0 %v5741
    %5919 = vmatpush.bf16.msra.mxu0 %v5739
    %5920 = vmatpush.bf16.msra.mxu0 %v5737
    %5921 = vmatmul.bf16.gmra.mxu0 %v5455
    %v5922 = vpop.f32.mrf.mxu0
    %v5923 = vadd.f32 %v5910, %v5922
    %v5924 = vpop.f32.mrf.mxu0
    %5925 = vdwg.mxu0
    %5926 = vmatpush.bf16.msra.mxu0 %v5767
    %5927 = vmatpush.bf16.msra.mxu0 %v5765
    %5928 = vmatpush.bf16.msra.mxu0 %v5763
    %5929 = vmatpush.bf16.msra.mxu0 %v5761
    %5930 = vmatpush.bf16.msra.mxu0 %v5759
    %5931 = vmatpush.bf16.msra.mxu0 %v5757
    %5932 = vmatpush.bf16.msra.mxu0 %v5755
    %5933 = vmatpush.bf16.msra.mxu0 %v5753
    %5934 = vmatmul.bf16.gmra.mxu0 %v5456
    %v5935 = vpop.f32.mrf.mxu0
    %v5936 = vadd.f32 %v5923, %v5935
    %v5937 = vpop.f32.mrf.mxu0
    %5938 = vdwg.mxu0
    %5939 = vmatpush.bf16.msra.mxu0 %v5783
    %5940 = vmatpush.bf16.msra.mxu0 %v5781
    %5941 = vmatpush.bf16.msra.mxu0 %v5779
    %5942 = vmatpush.bf16.msra.mxu0 %v5777
    %5943 = vmatpush.bf16.msra.mxu0 %v5775
    %5944 = vmatpush.bf16.msra.mxu0 %v5773
    %5945 = vmatpush.bf16.msra.mxu0 %v5771
    %5946 = vmatpush.bf16.msra.mxu0 %v5769
    %5947 = vmatmul.bf16.gmra.mxu0 %v5457
    %v5948 = vpop.f32.mrf.mxu0
    %v5949 = vadd.f32 %v5936, %v5948
    %v5950 = vpop.f32.mrf.mxu0
    %5951 = vdwg.mxu0
    %v5952 = vmul.f32 %v5897, 0.2
    %v5953 = vmul.f32 %v5949, 0.2
    %v5954 = vmax.f32 %v5897, %v5952
    %v5955 = vmax.f32 %v5949, %v5953
    %5956 = vst [vmem:[#allocation17] sm:$0xff] %v5954
    %5957 = vst [vmem:[#allocation17 + $0x8] sm:$0xff] %v5955
    %v5958 = vld [vmem:[#allocation15] sm:$0x3]
    %v5959 = vunpack.c.l.bf16 %v5958
    %v5961 = vperm.slane %v5959, 0
    %v5962 = vperm.slane %v5959, 2
    %v5965 = vperm.slane %v5961, 0
    %v5966 = vperm.slane %v5962, 0
    %v5967 = vmul.f32 %v5954, %v5965
    %v5968 = vmul.f32 %v5955, %v5966
    %v5969 = vadd.f32 %v5967, %v5968
    %5970 = vadd.xlane.f32.xlu0 %v5969
    %v5971 = vpop.xlane.xlu0 %5970
    %v5972 = vld [vmem:[#allocation2] sm:$0x1]
    %v5974 = vperm.slane %v5972, 0
    %v5976 = vadd.f32 %v5971, %v5974
    %v5977 = vand.u32 2147483647, %v5976
    %v5978 = vsub.f32 0.0, %v5977
    %v5979 = vmul.f32 %v5978, 1.442695
    %v5980 = vpow.pop %v5979
    %vm5981 = vcmp.ge.f32.partialorder %v5976, 0.0
    %v5982 = vadd.f32 %v5980, 1.0
    %v5983 = vrcp.pop %v5982
    %v5984 = vmul.f32 %v5982, %v5983
    %v5985 = vsub.f32 1.0, %v5984
    %v5986 = vmul.f32 %v5983, %v5985
    %v5987 = vadd.f32 %v5983, %v5986
    %vm5988 = vweird.f32 %v5982
    %vm5989 = vweird.f32 %v5983
    %vm5990 = vmor %vm5988, %vm5989
    %v5991 = vsel %vm5990, %v5983, %v5987
    %v5992 = vand.u32 2147483647, %v5982
    %vm5993 = vcmp.eq.f32.partialorder %v5992, 8.507059e+37
    %v5994 = vand.u32 %v5982, 2147483648
    %v5995 = vor.u32 1.1754944e-38, %v5994
    %v5996 = vsel %vm5993, %v5995, %v5991
    %v5997 = vmul.f32 1.0, %v5996
    %v5998 = vmul.f32 %v5980, %v5996
    %v5999 = vsel %vm5981, %v5997, %v5998
    %vm6000 = vcmask 7168
    %6001 = vst.msk [vmem:[%s12] sm:$0xff] %vm6000, %v5999
    // Predicated region
    $region78: #{netd_forward.1} parent=1 // pred_check
      _
    $region79: #{netd_forward.1} parent=1 // pred_check_branch
      %6003 = sbr.rel (0) target = $region81
    $region80: #{netd_forward.1} parent=1 // pred_region
      %6005 = vsyncadd [#allocation5], 0
      %s6007 = sshll.u32 [#allocation17], 4
      %s6008 = int_to_ptr.vmem [resolvable:$true] %s6007
      %s6009 = sshll.u32 %s11, 4
      %s6010 = int_to_ptr.hbm [resolvable:$true] %s6009
      %6012 = dma.vmem_to_hbm [thread:$0]  %s6008, 256, %s6010, [#allocation5]
    $region81: #{netd_forward.1} parent=1 // pred_fallthru
      _
    // Predicated region
    $region82: #{netd_forward.1} parent=1 // pred_check
      _
    $region83: #{netd_forward.1} parent=1 // pred_check_branch
      %6014 = sbr.rel (0) target = $region85
    $region84: #{netd_forward.1} parent=1 // pred_region
      _
    $region85: #{netd_forward.1} parent=1 // pred_fallthru
      _
    // Predicated region
    $region86: #{netd_forward.1} parent=1 // pred_check
      _
    $region87: #{netd_forward.1} parent=1 // pred_check_branch
      %6016 = sbr.rel (0) target = $region89
    $region88: #{netd_forward.1} parent=1 // pred_region
      %6018 = dma.done [#allocation5], 256
    $region89: #{netd_forward.1} parent=1 // pred_fallthru
      _
    // Predicated region
    $region90: #{netd_forward.1} parent=1 // pred_check
      _
    $region91: #{netd_forward.1} parent=1 // pred_check_branch
      %6020 = sbr.rel (0) target = $region93
    $region92: #{netd_forward.1} parent=1 // pred_region
      _
    $region93: #{netd_forward.1} parent=1 // pred_fallthru
      _
    %6021 = vsyncpa [#allocation4], 1
    %6022 = vsyncpa [#allocation7], 1
    %6023 = vsyncpa [#allocation10], 1
    %6024 = vsyncpa [#allocation13], 1
    %6025 = vsyncpa [#allocation16], 1
    %6026 = vsyncpa [#allocation5], 1

</llo_original>
